<compile_context>
chip_gen: v6e
topology: v6e:2x2x1
jax: 0.10.0
libtpu: 0.0.40
codegen_flags: <defaults>
</compile_context>

<pallas_src>
import functools

import jax
import jax.numpy as jnp
import numpy as np
from jax import lax
from jax.experimental import pallas as pl
from jax.experimental.pallas import tpu as pltpu


def _round_up(x, m):
    return (x + m - 1) // m * m


def _default_count_dtype():
    """bf16 count accumulation on chips with a bf16 VPU (v6e/v7x); f32 otherwise."""
    try:
        kind = jax.devices()[0].device_kind.lower()
    except Exception:
        return jnp.float32
    if "v6" in kind or "v7" in kind:
        return jnp.bfloat16
    return jnp.float32


def _char_ngram_kernel(pad_token_id, C, V, Dw, pack, tsub, count_dtype, per_slot,
                       idx_ref, off_ref, w_ref, b_ref, out_ref):
    """One grid step: `tm` packed rows (= tm * pack tokens).

    idx_ref : (tm, pack*C)       int32     packed char indices (pack tokens per row)
    off_ref : (1,  pack*C)       int32     per-column vocab-block offset (k*V)
    w_ref   : (pack*V, pack*Dw)  bf16/f32  block-diagonal fused table (emb @ proj)
    b_ref   : (1, pack*Dw)       f32       projection bias tiled `pack` times
    out_ref : (tm, pack*Dw)      out       lane-dense output (>=128 lanes when Dw<128)
    """
    tm = out_ref.shape[0]
    CL = pack * C
    VL = pack * V
    DL = pack * Dw
    n_sub = tm // tsub

    # Grid-step-invariant values: loaded / built ONCE (not per sub-tile).
    col_off = off_ref[...]                                          # (1, CL)
    bias = b_ref[...]                                                # (1, DL)
    w = w_ref[...]                                                   # (VL, DL)
    if per_slot:
        vocab_iota = lax.broadcasted_iota(jnp.int32, (tsub, V), 1)   # per-slot compare
    else:
        vocab_iota = lax.broadcasted_iota(jnp.int32, (tsub, VL), 1)  # combined compare
    lane_iota = (lax.broadcasted_iota(jnp.int32, (tsub, DL), 1)
                 if pack > 1 else None)

    def sub_body(r, carry):
        start = pl.multiple_of(r * tsub, tsub)
        idx_s = idx_ref[pl.ds(start, tsub), :]                       # (tsub, CL) int32
        non_pad = idx_s != pad_token_id                              # (tsub, CL) bool

        # Valid chars = non-pad and in-vocab. Invalid -> sentinel -1 (matches no slot).
        valid = jnp.logical_and(non_pad,
                                jnp.logical_and(idx_s >= 0, idx_s < V))

        # counts[t, k*V + v] = #non-pad chars of packed token k in row t equal to v.
        # Unrolled 2-D compares; only a (tsub, VL) accumulator is ever live.
        if per_slot:
            # V is lane-aligned: compare each column only against its own V-block.
            idx_adj = jnp.where(valid, idx_s, jnp.int32(-1))
            blocks = []
            for k in range(pack):
                ck = jnp.zeros((tsub, V), count_dtype)
                for j in range(k * C, (k + 1) * C):
                    col = idx_adj[:, j:j + 1]                        # (tsub, 1)
                    ck = ck + (col == vocab_iota).astype(count_dtype)
                blocks.append(ck)
            counts = jnp.concatenate(blocks, axis=-1)                # (tsub, VL)
        else:
            idx_adj = jnp.where(valid, idx_s + col_off, jnp.int32(-1))
            counts = jnp.zeros((tsub, VL), count_dtype)
            for j in range(CL):
                col = idx_adj[:, j:j + 1]                            # (tsub, 1)
                counts = counts + (col == vocab_iota).astype(count_dtype)

        # Fused embedding-sum + projection: one MXU matmul, f32 accumulation.
        y = jnp.dot(counts.astype(w.dtype), w,
                    preferred_element_type=jnp.float32)              # (tsub, DL)

        # Per-token mean: multiply by reciprocal of clamp(non-pad count, 1).
        np_f = non_pad.astype(jnp.float32)
        scale = None
        for k in range(pack):
            cnt = jnp.maximum(
                np_f[:, k * C:(k + 1) * C].sum(axis=-1, keepdims=True), 1.0)
            rcp = pl.reciprocal(cnt, approx=False)                   # (tsub, 1)
            if pack == 1:
                scale = rcp
            else:
                scale = rcp if k == 0 else jnp.where(lane_iota >= k * Dw, rcp, scale)

        out_ref[pl.ds(start, tsub), :] = (y * scale + bias).astype(out_ref.dtype)
        return carry

    # fori_loop (not a static Python for) so each sub-tile's live range is bounded.
    lax.fori_loop(0, n_sub, sub_body, None)


def char_ngram_embed(char_input, emb_table, proj_w=None, proj_b=None, *,
                     pad_token_id, tm=1024, out_dtype=jnp.float32,
                     matmul_dtype=jnp.bfloat16, count_dtype=None):
    """char_input: (B, S, C) int -> (B, S, Dw)."""
    B, S, C = char_input.shape
    V, Dc = emb_table.shape

    if count_dtype is None:
        count_dtype = _default_count_dtype()

    # Fuse char-embedding table and projection: W_fused = emb_table @ proj_w (V, Dw).
    if proj_w is None:                       # char_embed_dim == word_embed_dim path
        Dw = Dc
        w_fused = emb_table.astype(jnp.float32)
    else:
        Dw = proj_w.shape[1]
        w_fused = jnp.dot(emb_table.astype(jnp.float32), proj_w.astype(jnp.float32),
                          preferred_element_type=jnp.float32)
    bias = (jnp.zeros((Dw,), jnp.float32) if proj_b is None
            else proj_b.astype(jnp.float32))

    # Pack `pack` tokens per output row so the output last dim is >= 128 lanes.
    pack = 128 // Dw if (Dw < 128 and 128 % Dw == 0) else 1
    per_slot = (pack > 1) and (V % 128 == 0)   # lane-aligned per-slot compare path

    N = B * S
    idx = char_input.reshape(N, C).astype(jnp.int32)
    Np = _round_up(N, pack)
    if Np != N:
        idx = jnp.concatenate(
            [idx, jnp.full((Np - N, C), pad_token_id, jnp.int32)], axis=0)
    rows = Np // pack
    idx_packed = idx.reshape(rows, pack * C)       # contiguous view: free

    # Row tiling: fixed 128-row sub-tiles inside a large outer grid block.
    tsub = 128
    tm = _round_up(max(int(tm), tsub), tsub)       # force tm % 128 == 0
    rows128 = _round_up(rows, tsub)
    tm_eff = min(tm, rows128)
    # v7x megacore: prefer >= 2 grid steps (both TensorCores) when there is enough work.
    if rows128 // tm_eff < 2:
        half = (rows128 // 2) // tsub * tsub
        if half >= tsub:
            tm_eff = half
    rows_pad = _round_up(rows128, tm_eff)
    if rows_pad != rows:
        idx_packed = jnp.concatenate(
            [idx_packed,
             jnp.full((rows_pad - rows, pack * C), pad_token_id, jnp.int32)], axis=0)

    # Block-diagonal fused weight (one copy per packed token slot) + tiled bias.
    wt = w_fused.astype(matmul_dtype)
    if pack > 1:
        w_blk = jnp.zeros((pack * V, pack * Dw), matmul_dtype)
        for k in range(pack):
            w_blk = w_blk.at[k * V:(k + 1) * V, k * Dw:(k + 1) * Dw].set(wt)
    else:
        w_blk = wt
    bias_blk = jnp.tile(bias.reshape(1, Dw), (1, pack))

    # Per-column vocab-block offset (column j belongs to packed token j // C).
    col_off = jnp.asarray(
        np.repeat(np.arange(pack, dtype=np.int32) * V, C).reshape(1, pack * C))

    kernel = functools.partial(_char_ngram_kernel, int(pad_token_id), C, V, Dw,
                               pack, tsub, count_dtype, per_slot)

    # VMEM budget: double-buffered grid-varying tiles + grid-invariant operands.
    vmem_est = (2 * tm_eff * pack * C * 4
                + 2 * tm_eff * pack * Dw * jnp.dtype(out_dtype).itemsize
                + 2 * (pack * V) * (pack * Dw) * jnp.dtype(matmul_dtype).itemsize
                + 2 * pack * (C + Dw) * 8)
    cparams = dict(dimension_semantics=("parallel",))
    if vmem_est > (24 << 20):   # only kicks in if the char vocab grows very large
        cparams["vmem_limit_bytes"] = int(min(vmem_est + (8 << 20), 100 << 20))

    out_packed = pl.pallas_call(
        kernel,
        out_shape=jax.ShapeDtypeStruct((rows_pad, pack * Dw), out_dtype),
        grid=(rows_pad // tm_eff,),
        in_specs=[
            pl.BlockSpec((tm_eff, pack * C), lambda i: (i, 0)),      # char indices tile
            pl.BlockSpec((1, pack * C), lambda i: (0, 0)),           # col offsets (grid-invariant)
            pl.BlockSpec((pack * V, pack * Dw), lambda i: (0, 0)),   # fused weight (grid-invariant)
            pl.BlockSpec((1, pack * Dw), lambda i: (0, 0)),          # bias (grid-invariant)
        ],
        out_specs=pl.BlockSpec((tm_eff, pack * Dw), lambda i: (i, 0)),
        compiler_params=pltpu.CompilerParams(**cparams),
    )(idx_packed, col_off, w_blk, bias_blk)

    out = out_packed.reshape(rows_pad * pack, Dw)[:N]  # contiguous un-pack: free
    return out.reshape(B, S, Dw)


def _reference(char_input, emb_table, proj_w, proj_b, pad_token_id):
    B, S, C = char_input.shape
    idx = char_input.reshape(B * S, C)
    e = emb_table[jnp.clip(idx, 0, emb_table.shape[0] - 1)]          # (N, C, Dc)
    non_pad = idx != pad_token_id
    e = e * non_pad[..., None].astype(e.dtype)
    s = e.sum(axis=1)
    cnt = jnp.maximum(non_pad.sum(axis=-1), 1).astype(jnp.float32)
    x = s / cnt[:, None]
    if proj_w is not None:
        x = x @ proj_w + proj_b
    return x.reshape(B, S, -1)


if __name__ == "__main__":
    PAD = 0
    B, S, C = 2, 9, 16            # batch, seq, chars per token

    def make_case(key, V, Dc, Dw, with_proj):
        k_idx, k_pad, k_emb, k_w, k_b = jax.random.split(key, 5)
        char_idx = jax.random.randint(k_idx, (B, S, C), 1, V, dtype=jnp.int32)
        pad_mask = jax.random.uniform(k_pad, (B, S, C)) < 0.25
        char_idx = jnp.where(pad_mask, PAD, char_idx)
        char_idx = char_idx.at[0, 0, :].set(PAD)       # all-pad token -> clamp(min=1)
        emb = jax.random.normal(k_emb, (V, Dc), jnp.float32) * 0.02
        emb = emb.at[PAD].set(0.0)                     # nn.Embedding padding_idx row
        if with_proj:
            pw = jax.random.normal(k_w, (Dc, Dw), jnp.float32) / jnp.sqrt(Dc)
            pb = jax.random.normal(k_b, (Dw,), jnp.float32) * 0.01
        else:
            pw, pb = None, None
        return char_idx, emb, pw, pb

    # (V, Dc, Dw, with_proj): combined path, per-slot path (V%128==0), no-projection.
    cases = [(64, 32, 64, True), (128, 32, 64, True), (64, 32, 32, False)]
    keys = jax.random.split(jax.random.PRNGKey(0), len(cases))

    for key, (V, Dc, Dw, with_proj) in zip(keys, cases):
        char_idx, emb, pw, pb = make_case(key, V, Dc, Dw, with_proj)
        ref = _reference(char_idx, emb, pw, pb, PAD)

        # Exact-weight (f32 MXU operand) path: tight tolerance vs reference.
        out_f32 = jax.block_until_ready(
            char_ngram_embed(char_idx, emb, pw, pb, pad_token_id=PAD,
                             matmul_dtype=jnp.float32))
        assert out_f32.shape == (B, S, Dw)
        assert jnp.allclose(out_f32, ref, atol=1e-5, rtol=1e-4), "f32 path mismatch"

        # Default (bf16 fused weight on the MXU): bf16-level tolerance.
        out_bf16 = jax.block_until_ready(
            char_ngram_embed(char_idx, emb, pw, pb, pad_token_id=PAD))
        assert out_bf16.shape == (B, S, Dw)
        assert jnp.allclose(out_bf16, ref, atol=1e-3, rtol=3e-2), "bf16 path mismatch"

    print("KERNEL_OK")
</pallas_src>

<mosaic_0001>
module attributes {stable_mosaic.version = 11 : i64} {
  func.func @_char_ngram_kernel(%arg0: i32, %arg1: memref<128x32xi32, #tpu.memory_space<vmem>>, %arg2: memref<1x32xi32, #tpu.memory_space<vmem>>, %arg3: memref<128x128xf32, #tpu.memory_space<vmem>>, %arg4: memref<1x128xf32, #tpu.memory_space<vmem>>, %arg5: memref<128x128xf32, #tpu.memory_space<vmem>>) attributes {dimension_semantics = [#tpu.dimension_semantics<parallel>], iteration_bounds = array<i64: 1>, scalar_prefetch = 0 : i64, scratch_operands = 0 : i64, tpu.core_type = #tpu.core_type<tc>, window_params = [{transform_indices = @transform_0, window_bounds = array<i64: 128, 32>}, {pipeline_mode = #tpu.pipeline_mode<synchronous>, transform_indices = @transform_1, window_bounds = array<i64: 1, 32>}, {pipeline_mode = #tpu.pipeline_mode<synchronous>, transform_indices = @transform_2, window_bounds = array<i64: 128, 128>}, {pipeline_mode = #tpu.pipeline_mode<synchronous>, transform_indices = @transform_3, window_bounds = array<i64: 1, 128>}, {transform_indices = @transform_4, window_bounds = array<i64: 128, 128>}]} {
    %c0 = arith.constant 0 : index
    %c0_0 = arith.constant 0 : index
    %0 = vector.load %arg2[%c0, %c0_0] : memref<1x32xi32, #tpu.memory_space<vmem>>, vector<1x32xi32>
    %c0_1 = arith.constant 0 : index
    %c0_2 = arith.constant 0 : index
    %1 = vector.load %arg4[%c0_1, %c0_2] : memref<1x128xf32, #tpu.memory_space<vmem>>, vector<1x128xf32>
    %c0_3 = arith.constant 0 : index
    %c0_4 = arith.constant 0 : index
    %2 = vector.load %arg3[%c0_3, %c0_4] : memref<128x128xf32, #tpu.memory_space<vmem>>, vector<128x128xf32>
    %3 = tpu.iota {dimensions = array<i32: 1>} : vector<128x128xi32>
    %4 = tpu.iota {dimensions = array<i32: 1>} : vector<128x128xi32>
    %c0_i32 = arith.constant 0 : i32
    %c128_i32 = arith.constant 128 : i32
    %5 = arith.muli %c0_i32, %c128_i32 : i32
    %6 = tpu.assume_multiple %5, 128 : i32
    %7 = arith.index_cast %6 : i32 to index
    %c0_5 = arith.constant 0 : index
    %8 = vector.load %arg1[%7, %c0_5] : memref<128x32xi32, #tpu.memory_space<vmem>>, vector<128x32xi32>
    %c0_i32_6 = arith.constant 0 : i32
    %9 = vector.broadcast %c0_i32_6 : i32 to vector<128x32xi32>
    %10 = arith.cmpi ne, %8, %9 : vector<128x32xi32>
    %c0_i32_7 = arith.constant 0 : i32
    %11 = vector.broadcast %c0_i32_7 : i32 to vector<128x32xi32>
    %12 = arith.cmpi sge, %8, %11 : vector<128x32xi32>
    %c64_i32 = arith.constant 64 : i32
    %13 = vector.broadcast %c64_i32 : i32 to vector<128x32xi32>
    %14 = arith.cmpi slt, %8, %13 : vector<128x32xi32>
    %15 = arith.andi %12, %14 : vector<128x32xi1>
    %16 = arith.andi %10, %15 : vector<128x32xi1>
    %17 = vector.broadcast %0 : vector<1x32xi32> to vector<128x32xi32>
    %18 = arith.addi %8, %17 : vector<128x32xi32>
    %c-1_i32 = arith.constant -1 : i32
    %19 = vector.broadcast %c-1_i32 : i32 to vector<128x32xi32>
    %20 = arith.select %16, %18, %19 : vector<128x32xi1>, vector<128x32xi32>
    %cst = arith.constant 0.000000e+00 : f32
    %21 = vector.broadcast %cst : f32 to vector<128x128xf32>
    %22 = vector.extract_strided_slice %20 {offsets = [0, 0], sizes = [128, 1], strides = [1, 1]} : vector<128x32xi32> to vector<128x1xi32>
    %23 = vector.broadcast %22 : vector<128x1xi32> to vector<128x128xi32>
    %24 = arith.cmpi eq, %23, %3 : vector<128x128xi32>
    %25 = arith.extui %24 : vector<128x128xi1> to vector<128x128xi32>
    %26 = arith.sitofp %25 : vector<128x128xi32> to vector<128x128xf32>
    %27 = arith.addf %21, %26 : vector<128x128xf32>
    %28 = vector.extract_strided_slice %20 {offsets = [0, 1], sizes = [128, 1], strides = [1, 1]} : vector<128x32xi32> to vector<128x1xi32>
    %29 = vector.broadcast %28 : vector<128x1xi32> to vector<128x128xi32>
    %30 = arith.cmpi eq, %29, %3 : vector<128x128xi32>
    %31 = arith.extui %30 : vector<128x128xi1> to vector<128x128xi32>
    %32 = arith.sitofp %31 : vector<128x128xi32> to vector<128x128xf32>
    %33 = arith.addf %27, %32 : vector<128x128xf32>
    %34 = vector.extract_strided_slice %20 {offsets = [0, 2], sizes = [128, 1], strides = [1, 1]} : vector<128x32xi32> to vector<128x1xi32>
    %35 = vector.broadcast %34 : vector<128x1xi32> to vector<128x128xi32>
    %36 = arith.cmpi eq, %35, %3 : vector<128x128xi32>
    %37 = arith.extui %36 : vector<128x128xi1> to vector<128x128xi32>
    %38 = arith.sitofp %37 : vector<128x128xi32> to vector<128x128xf32>
    %39 = arith.addf %33, %38 : vector<128x128xf32>
    %40 = vector.extract_strided_slice %20 {offsets = [0, 3], sizes = [128, 1], strides = [1, 1]} : vector<128x32xi32> to vector<128x1xi32>
    %41 = vector.broadcast %40 : vector<128x1xi32> to vector<128x128xi32>
    %42 = arith.cmpi eq, %41, %3 : vector<128x128xi32>
    %43 = arith.extui %42 : vector<128x128xi1> to vector<128x128xi32>
    %44 = arith.sitofp %43 : vector<128x128xi32> to vector<128x128xf32>
    %45 = arith.addf %39, %44 : vector<128x128xf32>
    %46 = vector.extract_strided_slice %20 {offsets = [0, 4], sizes = [128, 1], strides = [1, 1]} : vector<128x32xi32> to vector<128x1xi32>
    %47 = vector.broadcast %46 : vector<128x1xi32> to vector<128x128xi32>
    %48 = arith.cmpi eq, %47, %3 : vector<128x128xi32>
    %49 = arith.extui %48 : vector<128x128xi1> to vector<128x128xi32>
    %50 = arith.sitofp %49 : vector<128x128xi32> to vector<128x128xf32>
    %51 = arith.addf %45, %50 : vector<128x128xf32>
    %52 = vector.extract_strided_slice %20 {offsets = [0, 5], sizes = [128, 1], strides = [1, 1]} : vector<128x32xi32> to vector<128x1xi32>
    %53 = vector.broadcast %52 : vector<128x1xi32> to vector<128x128xi32>
    %54 = arith.cmpi eq, %53, %3 : vector<128x128xi32>
    %55 = arith.extui %54 : vector<128x128xi1> to vector<128x128xi32>
    %56 = arith.sitofp %55 : vector<128x128xi32> to vector<128x128xf32>
    %57 = arith.addf %51, %56 : vector<128x128xf32>
    %58 = vector.extract_strided_slice %20 {offsets = [0, 6], sizes = [128, 1], strides = [1, 1]} : vector<128x32xi32> to vector<128x1xi32>
    %59 = vector.broadcast %58 : vector<128x1xi32> to vector<128x128xi32>
    %60 = arith.cmpi eq, %59, %3 : vector<128x128xi32>
    %61 = arith.extui %60 : vector<128x128xi1> to vector<128x128xi32>
    %62 = arith.sitofp %61 : vector<128x128xi32> to vector<128x128xf32>
    %63 = arith.addf %57, %62 : vector<128x128xf32>
    %64 = vector.extract_strided_slice %20 {offsets = [0, 7], sizes = [128, 1], strides = [1, 1]} : vector<128x32xi32> to vector<128x1xi32>
    %65 = vector.broadcast %64 : vector<128x1xi32> to vector<128x128xi32>
    %66 = arith.cmpi eq, %65, %3 : vector<128x128xi32>
    %67 = arith.extui %66 : vector<128x128xi1> to vector<128x128xi32>
    %68 = arith.sitofp %67 : vector<128x128xi32> to vector<128x128xf32>
    %69 = arith.addf %63, %68 : vector<128x128xf32>
    %70 = vector.extract_strided_slice %20 {offsets = [0, 8], sizes = [128, 1], strides = [1, 1]} : vector<128x32xi32> to vector<128x1xi32>
    %71 = vector.broadcast %70 : vector<128x1xi32> to vector<128x128xi32>
    %72 = arith.cmpi eq, %71, %3 : vector<128x128xi32>
    %73 = arith.extui %72 : vector<128x128xi1> to vector<128x128xi32>
    %74 = arith.sitofp %73 : vector<128x128xi32> to vector<128x128xf32>
    %75 = arith.addf %69, %74 : vector<128x128xf32>
    %76 = vector.extract_strided_slice %20 {offsets = [0, 9], sizes = [128, 1], strides = [1, 1]} : vector<128x32xi32> to vector<128x1xi32>
    %77 = vector.broadcast %76 : vector<128x1xi32> to vector<128x128xi32>
    %78 = arith.cmpi eq, %77, %3 : vector<128x128xi32>
    %79 = arith.extui %78 : vector<128x128xi1> to vector<128x128xi32>
    %80 = arith.sitofp %79 : vector<128x128xi32> to vector<128x128xf32>
    %81 = arith.addf %75, %80 : vector<128x128xf32>
    %82 = vector.extract_strided_slice %20 {offsets = [0, 10], sizes = [128, 1], strides = [1, 1]} : vector<128x32xi32> to vector<128x1xi32>
    %83 = vector.broadcast %82 : vector<128x1xi32> to vector<128x128xi32>
    %84 = arith.cmpi eq, %83, %3 : vector<128x128xi32>
    %85 = arith.extui %84 : vector<128x128xi1> to vector<128x128xi32>
    %86 = arith.sitofp %85 : vector<128x128xi32> to vector<128x128xf32>
    %87 = arith.addf %81, %86 : vector<128x128xf32>
    %88 = vector.extract_strided_slice %20 {offsets = [0, 11], sizes = [128, 1], strides = [1, 1]} : vector<128x32xi32> to vector<128x1xi32>
    %89 = vector.broadcast %88 : vector<128x1xi32> to vector<128x128xi32>
    %90 = arith.cmpi eq, %89, %3 : vector<128x128xi32>
    %91 = arith.extui %90 : vector<128x128xi1> to vector<128x128xi32>
    %92 = arith.sitofp %91 : vector<128x128xi32> to vector<128x128xf32>
    %93 = arith.addf %87, %92 : vector<128x128xf32>
    %94 = vector.extract_strided_slice %20 {offsets = [0, 12], sizes = [128, 1], strides = [1, 1]} : vector<128x32xi32> to vector<128x1xi32>
    %95 = vector.broadcast %94 : vector<128x1xi32> to vector<128x128xi32>
    %96 = arith.cmpi eq, %95, %3 : vector<128x128xi32>
    %97 = arith.extui %96 : vector<128x128xi1> to vector<128x128xi32>
    %98 = arith.sitofp %97 : vector<128x128xi32> to vector<128x128xf32>
    %99 = arith.addf %93, %98 : vector<128x128xf32>
    %100 = vector.extract_strided_slice %20 {offsets = [0, 13], sizes = [128, 1], strides = [1, 1]} : vector<128x32xi32> to vector<128x1xi32>
    %101 = vector.broadcast %100 : vector<128x1xi32> to vector<128x128xi32>
    %102 = arith.cmpi eq, %101, %3 : vector<128x128xi32>
    %103 = arith.extui %102 : vector<128x128xi1> to vector<128x128xi32>
    %104 = arith.sitofp %103 : vector<128x128xi32> to vector<128x128xf32>
    %105 = arith.addf %99, %104 : vector<128x128xf32>
    %106 = vector.extract_strided_slice %20 {offsets = [0, 14], sizes = [128, 1], strides = [1, 1]} : vector<128x32xi32> to vector<128x1xi32>
    %107 = vector.broadcast %106 : vector<128x1xi32> to vector<128x128xi32>
    %108 = arith.cmpi eq, %107, %3 : vector<128x128xi32>
    %109 = arith.extui %108 : vector<128x128xi1> to vector<128x128xi32>
    %110 = arith.sitofp %109 : vector<128x128xi32> to vector<128x128xf32>
    %111 = arith.addf %105, %110 : vector<128x128xf32>
    %112 = vector.extract_strided_slice %20 {offsets = [0, 15], sizes = [128, 1], strides = [1, 1]} : vector<128x32xi32> to vector<128x1xi32>
    %113 = vector.broadcast %112 : vector<128x1xi32> to vector<128x128xi32>
    %114 = arith.cmpi eq, %113, %3 : vector<128x128xi32>
    %115 = arith.extui %114 : vector<128x128xi1> to vector<128x128xi32>
    %116 = arith.sitofp %115 : vector<128x128xi32> to vector<128x128xf32>
    %117 = arith.addf %111, %116 : vector<128x128xf32>
    %118 = vector.extract_strided_slice %20 {offsets = [0, 16], sizes = [128, 1], strides = [1, 1]} : vector<128x32xi32> to vector<128x1xi32>
    %119 = vector.broadcast %118 : vector<128x1xi32> to vector<128x128xi32>
    %120 = arith.cmpi eq, %119, %3 : vector<128x128xi32>
    %121 = arith.extui %120 : vector<128x128xi1> to vector<128x128xi32>
    %122 = arith.sitofp %121 : vector<128x128xi32> to vector<128x128xf32>
    %123 = arith.addf %117, %122 : vector<128x128xf32>
    %124 = vector.extract_strided_slice %20 {offsets = [0, 17], sizes = [128, 1], strides = [1, 1]} : vector<128x32xi32> to vector<128x1xi32>
    %125 = vector.broadcast %124 : vector<128x1xi32> to vector<128x128xi32>
    %126 = arith.cmpi eq, %125, %3 : vector<128x128xi32>
    %127 = arith.extui %126 : vector<128x128xi1> to vector<128x128xi32>
    %128 = arith.sitofp %127 : vector<128x128xi32> to vector<128x128xf32>
    %129 = arith.addf %123, %128 : vector<128x128xf32>
    %130 = vector.extract_strided_slice %20 {offsets = [0, 18], sizes = [128, 1], strides = [1, 1]} : vector<128x32xi32> to vector<128x1xi32>
    %131 = vector.broadcast %130 : vector<128x1xi32> to vector<128x128xi32>
    %132 = arith.cmpi eq, %131, %3 : vector<128x128xi32>
    %133 = arith.extui %132 : vector<128x128xi1> to vector<128x128xi32>
    %134 = arith.sitofp %133 : vector<128x128xi32> to vector<128x128xf32>
    %135 = arith.addf %129, %134 : vector<128x128xf32>
    %136 = vector.extract_strided_slice %20 {offsets = [0, 19], sizes = [128, 1], strides = [1, 1]} : vector<128x32xi32> to vector<128x1xi32>
    %137 = vector.broadcast %136 : vector<128x1xi32> to vector<128x128xi32>
    %138 = arith.cmpi eq, %137, %3 : vector<128x128xi32>
    %139 = arith.extui %138 : vector<128x128xi1> to vector<128x128xi32>
    %140 = arith.sitofp %139 : vector<128x128xi32> to vector<128x128xf32>
    %141 = arith.addf %135, %140 : vector<128x128xf32>
    %142 = vector.extract_strided_slice %20 {offsets = [0, 20], sizes = [128, 1], strides = [1, 1]} : vector<128x32xi32> to vector<128x1xi32>
    %143 = vector.broadcast %142 : vector<128x1xi32> to vector<128x128xi32>
    %144 = arith.cmpi eq, %143, %3 : vector<128x128xi32>
    %145 = arith.extui %144 : vector<128x128xi1> to vector<128x128xi32>
    %146 = arith.sitofp %145 : vector<128x128xi32> to vector<128x128xf32>
    %147 = arith.addf %141, %146 : vector<128x128xf32>
    %148 = vector.extract_strided_slice %20 {offsets = [0, 21], sizes = [128, 1], strides = [1, 1]} : vector<128x32xi32> to vector<128x1xi32>
    %149 = vector.broadcast %148 : vector<128x1xi32> to vector<128x128xi32>
    %150 = arith.cmpi eq, %149, %3 : vector<128x128xi32>
    %151 = arith.extui %150 : vector<128x128xi1> to vector<128x128xi32>
    %152 = arith.sitofp %151 : vector<128x128xi32> to vector<128x128xf32>
    %153 = arith.addf %147, %152 : vector<128x128xf32>
    %154 = vector.extract_strided_slice %20 {offsets = [0, 22], sizes = [128, 1], strides = [1, 1]} : vector<128x32xi32> to vector<128x1xi32>
    %155 = vector.broadcast %154 : vector<128x1xi32> to vector<128x128xi32>
    %156 = arith.cmpi eq, %155, %3 : vector<128x128xi32>
    %157 = arith.extui %156 : vector<128x128xi1> to vector<128x128xi32>
    %158 = arith.sitofp %157 : vector<128x128xi32> to vector<128x128xf32>
    %159 = arith.addf %153, %158 : vector<128x128xf32>
    %160 = vector.extract_strided_slice %20 {offsets = [0, 23], sizes = [128, 1], strides = [1, 1]} : vector<128x32xi32> to vector<128x1xi32>
    %161 = vector.broadcast %160 : vector<128x1xi32> to vector<128x128xi32>
    %162 = arith.cmpi eq, %161, %3 : vector<128x128xi32>
    %163 = arith.extui %162 : vector<128x128xi1> to vector<128x128xi32>
    %164 = arith.sitofp %163 : vector<128x128xi32> to vector<128x128xf32>
    %165 = arith.addf %159, %164 : vector<128x128xf32>
    %166 = vector.extract_strided_slice %20 {offsets = [0, 24], sizes = [128, 1], strides = [1, 1]} : vector<128x32xi32> to vector<128x1xi32>
    %167 = vector.broadcast %166 : vector<128x1xi32> to vector<128x128xi32>
    %168 = arith.cmpi eq, %167, %3 : vector<128x128xi32>
    %169 = arith.extui %168 : vector<128x128xi1> to vector<128x128xi32>
    %170 = arith.sitofp %169 : vector<128x128xi32> to vector<128x128xf32>
    %171 = arith.addf %165, %170 : vector<128x128xf32>
    %172 = vector.extract_strided_slice %20 {offsets = [0, 25], sizes = [128, 1], strides = [1, 1]} : vector<128x32xi32> to vector<128x1xi32>
    %173 = vector.broadcast %172 : vector<128x1xi32> to vector<128x128xi32>
    %174 = arith.cmpi eq, %173, %3 : vector<128x128xi32>
    %175 = arith.extui %174 : vector<128x128xi1> to vector<128x128xi32>
    %176 = arith.sitofp %175 : vector<128x128xi32> to vector<128x128xf32>
    %177 = arith.addf %171, %176 : vector<128x128xf32>
    %178 = vector.extract_strided_slice %20 {offsets = [0, 26], sizes = [128, 1], strides = [1, 1]} : vector<128x32xi32> to vector<128x1xi32>
    %179 = vector.broadcast %178 : vector<128x1xi32> to vector<128x128xi32>
    %180 = arith.cmpi eq, %179, %3 : vector<128x128xi32>
    %181 = arith.extui %180 : vector<128x128xi1> to vector<128x128xi32>
    %182 = arith.sitofp %181 : vector<128x128xi32> to vector<128x128xf32>
    %183 = arith.addf %177, %182 : vector<128x128xf32>
    %184 = vector.extract_strided_slice %20 {offsets = [0, 27], sizes = [128, 1], strides = [1, 1]} : vector<128x32xi32> to vector<128x1xi32>
    %185 = vector.broadcast %184 : vector<128x1xi32> to vector<128x128xi32>
    %186 = arith.cmpi eq, %185, %3 : vector<128x128xi32>
    %187 = arith.extui %186 : vector<128x128xi1> to vector<128x128xi32>
    %188 = arith.sitofp %187 : vector<128x128xi32> to vector<128x128xf32>
    %189 = arith.addf %183, %188 : vector<128x128xf32>
    %190 = vector.extract_strided_slice %20 {offsets = [0, 28], sizes = [128, 1], strides = [1, 1]} : vector<128x32xi32> to vector<128x1xi32>
    %191 = vector.broadcast %190 : vector<128x1xi32> to vector<128x128xi32>
    %192 = arith.cmpi eq, %191, %3 : vector<128x128xi32>
    %193 = arith.extui %192 : vector<128x128xi1> to vector<128x128xi32>
    %194 = arith.sitofp %193 : vector<128x128xi32> to vector<128x128xf32>
    %195 = arith.addf %189, %194 : vector<128x128xf32>
    %196 = vector.extract_strided_slice %20 {offsets = [0, 29], sizes = [128, 1], strides = [1, 1]} : vector<128x32xi32> to vector<128x1xi32>
    %197 = vector.broadcast %196 : vector<128x1xi32> to vector<128x128xi32>
    %198 = arith.cmpi eq, %197, %3 : vector<128x128xi32>
    %199 = arith.extui %198 : vector<128x128xi1> to vector<128x128xi32>
    %200 = arith.sitofp %199 : vector<128x128xi32> to vector<128x128xf32>
    %201 = arith.addf %195, %200 : vector<128x128xf32>
    %202 = vector.extract_strided_slice %20 {offsets = [0, 30], sizes = [128, 1], strides = [1, 1]} : vector<128x32xi32> to vector<128x1xi32>
    %203 = vector.broadcast %202 : vector<128x1xi32> to vector<128x128xi32>
    %204 = arith.cmpi eq, %203, %3 : vector<128x128xi32>
    %205 = arith.extui %204 : vector<128x128xi1> to vector<128x128xi32>
    %206 = arith.sitofp %205 : vector<128x128xi32> to vector<128x128xf32>
    %207 = arith.addf %201, %206 : vector<128x128xf32>
    %208 = vector.extract_strided_slice %20 {offsets = [0, 31], sizes = [128, 1], strides = [1, 1]} : vector<128x32xi32> to vector<128x1xi32>
    %209 = vector.broadcast %208 : vector<128x1xi32> to vector<128x128xi32>
    %210 = arith.cmpi eq, %209, %3 : vector<128x128xi32>
    %211 = arith.extui %210 : vector<128x128xi1> to vector<128x128xi32>
    %212 = arith.sitofp %211 : vector<128x128xi32> to vector<128x128xf32>
    %213 = arith.addf %207, %212 : vector<128x128xf32>
    %cst_8 = arith.constant dense<0.000000e+00> : vector<128x128xf32>
    %214 = tpu.matmul %213, %2, %cst_8 {dimension_numbers = #tpu.dot_dimension_numbers<[1], [0], [0], [1], [0, 0, 1, 1], [], []>} : vector<128x128xf32>, vector<128x128xf32>, vector<128x128xf32> -> vector<128x128xf32>
    %215 = arith.extui %10 : vector<128x32xi1> to vector<128x32xi32>
    %216 = arith.sitofp %215 : vector<128x32xi32> to vector<128x32xf32>
    %217 = vector.extract_strided_slice %216 {offsets = [0, 0], sizes = [128, 16], strides = [1, 1]} : vector<128x32xf32> to vector<128x16xf32>
    %cst_9 = arith.constant dense<0.000000e+00> : vector<128xf32>
    %218 = vector.multi_reduction <add>, %217, %cst_9 [1] : vector<128x16xf32> to vector<128xf32>
    %219 = vector.shape_cast %218 : vector<128xf32> to vector<128x1xf32>
    %cst_10 = arith.constant 1.000000e+00 : f32
    %220 = vector.broadcast %cst_10 : f32 to vector<128x1xf32>
    %221 = arith.maximumf %219, %220 : vector<128x1xf32>
    %222 = tpu.reciprocal %221 : vector<128x1xf32> -> vector<128x1xf32>
    %223 = vector.extract_strided_slice %216 {offsets = [0, 16], sizes = [128, 16], strides = [1, 1]} : vector<128x32xf32> to vector<128x16xf32>
    %cst_11 = arith.constant dense<0.000000e+00> : vector<128xf32>
    %224 = vector.multi_reduction <add>, %223, %cst_11 [1] : vector<128x16xf32> to vector<128xf32>
    %225 = vector.shape_cast %224 : vector<128xf32> to vector<128x1xf32>
    %cst_12 = arith.constant 1.000000e+00 : f32
    %226 = vector.broadcast %cst_12 : f32 to vector<128x1xf32>
    %227 = arith.maximumf %225, %226 : vector<128x1xf32>
    %228 = tpu.reciprocal %227 : vector<128x1xf32> -> vector<128x1xf32>
    %c64_i32_13 = arith.constant 64 : i32
    %229 = vector.broadcast %c64_i32_13 : i32 to vector<128x128xi32>
    %230 = arith.cmpi sge, %4, %229 : vector<128x128xi32>
    %231 = vector.shape_cast %228 : vector<128x1xf32> to vector<128x1xf32>
    %232 = vector.broadcast %231 : vector<128x1xf32> to vector<128x128xf32>
    %233 = vector.shape_cast %222 : vector<128x1xf32> to vector<128x1xf32>
    %234 = vector.broadcast %233 : vector<128x1xf32> to vector<128x128xf32>
    %235 = arith.select %230, %232, %234 : vector<128x128xi1>, vector<128x128xf32>
    %236 = arith.mulf %214, %235 : vector<128x128xf32>
    %237 = vector.broadcast %1 : vector<1x128xf32> to vector<128x128xf32>
    %238 = arith.addf %236, %237 : vector<128x128xf32>
    %239 = arith.index_cast %6 : i32 to index
    %c0_14 = arith.constant 0 : index
    %240 = vector.load %arg5[%239, %c0_14] : memref<128x128xf32, #tpu.memory_space<vmem>>, vector<128x128xf32>
    tpu.vector_store %arg5[%239, %c0_14], %238 {strides = array<i32>} : memref<128x128xf32, #tpu.memory_space<vmem>>, vector<128x128xf32>,
    %c1_i32 = arith.constant 1 : i32
    return
  }
  func.func @transform_0(%arg0: i32) -> (i32, i32) {
    %c0_i32 = arith.constant 0 : i32
    %c0_i32_0 = arith.constant 0 : i32
    return %arg0, %c0_i32 : i32, i32
  }
  func.func @transform_1(%arg0: i32) -> (i32, i32) {
    %c0_i32 = arith.constant 0 : i32
    %c0_i32_0 = arith.constant 0 : i32
    %c0_i32_1 = arith.constant 0 : i32
    return %c0_i32, %c0_i32_0 : i32, i32
  }
  func.func @transform_2(%arg0: i32) -> (i32, i32) {
    %c0_i32 = arith.constant 0 : i32
    %c0_i32_0 = arith.constant 0 : i32
    %c0_i32_1 = arith.constant 0 : i32
    return %c0_i32, %c0_i32_0 : i32, i32
  }
  func.func @transform_3(%arg0: i32) -> (i32, i32) {
    %c0_i32 = arith.constant 0 : i32
    %c0_i32_0 = arith.constant 0 : i32
    %c0_i32_1 = arith.constant 0 : i32
    return %c0_i32, %c0_i32_0 : i32, i32
  }
  func.func @transform_4(%arg0: i32) -> (i32, i32) {
    %c0_i32 = arith.constant 0 : i32
    %c0_i32_0 = arith.constant 0 : i32
    return %arg0, %c0_i32 : i32, i32
  }
}

</mosaic_0001>

<llo_original>
// kernel: tpu_custom_call.1
$region0: #{tpu_custom_call.1}
  #allocation0 [shape = 'u32[]', space=smem, size = 0x4, offset = 0x4, fixed_abs, tag = 'smem constant byte address 0x4 - core index']
  #allocation1 [shape = 'u32[144,128]{1,0:T(1,128)}', space=vmem, size = 0x12000, scoped, tag = 'internal scratch']
  %s0 = inlined_call_operand.vmem [shape: s32[128,32], index: 0, kind: input, shape index: {}]
  %s1 = inlined_call_operand.vmem [shape: s32[1,32], index: 1, kind: input, shape index: {}]
  %s2 = inlined_call_operand.vmem [shape: f32[128,128], index: 2, kind: input, shape index: {}]
  %s3 = inlined_call_operand.vmem [shape: f32[1,128], index: 3, kind: input, shape index: {}]
  %s4 = inlined_call_operand.hbm [shape: f32[128,128], index: 4, kind: output, shape index: {}]
  %s5 = sld [smem:[#allocation0]]
  $region26: #{tpu_custom_call.1} parent=0
    _
  %s7 = ssub.s32 1, %s5
  %s8 = scalar_select 0, %s7, %s5
  $region1: #{tpu_custom_call.1} parent=0
    #allocation2 [shape = 'u8[65536]{0}', space=vmem, size = 0x10000, scoped, tag = 'output window, operand 0, single buffered']
    #allocation3 [shape = 's32[1]{0}', space=sflag, size = 0x4, scoped, tag = 'scoped memory for tpu_custom_call.1']
    %9 = vsyncpa [#allocation3], 0
    // Predicated region
    $region2: #{tpu_custom_call.1} parent=1 // pred_check
      _
    $region3: #{tpu_custom_call.1} parent=1 // pred_check_branch
      %11 = sbr.rel (0) target = $region5
    $region4: #{tpu_custom_call.1} parent=1 // pred_region
      _
    $region5: #{tpu_custom_call.1} parent=1 // pred_fallthru
      _
    // Predicated region
    $region6: #{tpu_custom_call.1} parent=1 // pred_check
      _
    $region7: #{tpu_custom_call.1} parent=1 // pred_check_branch
      %13 = sbr.rel (0) target = $region9
    $region8: #{tpu_custom_call.1} parent=1 // pred_region
      _
    $region9: #{tpu_custom_call.1} parent=1 // pred_fallthru
      _
    // Predicated region
    $region10: #{tpu_custom_call.1} parent=1 // pred_check
      _
    $region11: #{tpu_custom_call.1} parent=1 // pred_check_branch
      %15 = sbr.rel (0) target = $region13
    $region12: #{tpu_custom_call.1} parent=1 // pred_region
      _
    $region13: #{tpu_custom_call.1} parent=1 // pred_fallthru
      _
    // Predicated region
    $region14: #{tpu_custom_call.1} parent=1 // pred_check
      _
    $region15: #{tpu_custom_call.1} parent=1 // pred_check_branch
      %17 = sbr.rel (0) target = $region17
    $region16: #{tpu_custom_call.1} parent=1 // pred_region
      _
    $region17: #{tpu_custom_call.1} parent=1 // pred_fallthru
      _
    %v18 = vld [vmem:[%s1] sm:$0x1]
    %v19 = vld [vmem:[%s3] sm:$0x1]
    %v20 = vld [vmem:[%s2] sm:$0xff]
    %v21 = vld [vmem:[%s2 + $0x8] sm:$0xff]
    %v22 = vld [vmem:[%s2 + $0x10] sm:$0xff]
    %v23 = vld [vmem:[%s2 + $0x18] sm:$0xff]
    %v24 = vld [vmem:[%s2 + $0x20] sm:$0xff]
    %v25 = vld [vmem:[%s2 + $0x28] sm:$0xff]
    %v26 = vld [vmem:[%s2 + $0x30] sm:$0xff]
    %v27 = vld [vmem:[%s2 + $0x38] sm:$0xff]
    %v28 = vld [vmem:[%s2 + $0x40] sm:$0xff]
    %v29 = vld [vmem:[%s2 + $0x48] sm:$0xff]
    %v30 = vld [vmem:[%s2 + $0x50] sm:$0xff]
    %v31 = vld [vmem:[%s2 + $0x58] sm:$0xff]
    %v32 = vld [vmem:[%s2 + $0x60] sm:$0xff]
    %v33 = vld [vmem:[%s2 + $0x68] sm:$0xff]
    %v34 = vld [vmem:[%s2 + $0x70] sm:$0xff]
    %v35 = vld [vmem:[%s2 + $0x78] sm:$0xff]
    %v36 = vlaneseq
    %v37 = vand.u32 %v36, 127
    %v38 = vld [vmem:[%s0] sm:$0xff]
    %v39 = vld [vmem:[%s0 + $0x8] sm:$0xff]
    %v40 = vld [vmem:[%s0 + $0x10] sm:$0xff]
    %v41 = vld [vmem:[%s0 + $0x18] sm:$0xff]
    %v42 = vld [vmem:[%s0 + $0x20] sm:$0xff]
    %v43 = vld [vmem:[%s0 + $0x28] sm:$0xff]
    %v44 = vld [vmem:[%s0 + $0x30] sm:$0xff]
    %v45 = vld [vmem:[%s0 + $0x38] sm:$0xff]
    %v46 = vld [vmem:[%s0 + $0x40] sm:$0xff]
    %v47 = vld [vmem:[%s0 + $0x48] sm:$0xff]
    %v48 = vld [vmem:[%s0 + $0x50] sm:$0xff]
    %v49 = vld [vmem:[%s0 + $0x58] sm:$0xff]
    %v50 = vld [vmem:[%s0 + $0x60] sm:$0xff]
    %v51 = vld [vmem:[%s0 + $0x68] sm:$0xff]
    %v52 = vld [vmem:[%s0 + $0x70] sm:$0xff]
    %v53 = vld [vmem:[%s0 + $0x78] sm:$0xff]
    %vm54 = vcmp.ne.s32.totalorder %v38, 0
    %vm55 = vcmp.ne.s32.totalorder %v39, 0
    %vm56 = vcmp.ne.s32.totalorder %v40, 0
    %vm57 = vcmp.ne.s32.totalorder %v41, 0
    %vm58 = vcmp.ne.s32.totalorder %v42, 0
    %vm59 = vcmp.ne.s32.totalorder %v43, 0
    %vm60 = vcmp.ne.s32.totalorder %v44, 0
    %vm61 = vcmp.ne.s32.totalorder %v45, 0
    %vm62 = vcmp.ne.s32.totalorder %v46, 0
    %vm63 = vcmp.ne.s32.totalorder %v47, 0
    %vm64 = vcmp.ne.s32.totalorder %v48, 0
    %vm65 = vcmp.ne.s32.totalorder %v49, 0
    %vm66 = vcmp.ne.s32.totalorder %v50, 0
    %vm67 = vcmp.ne.s32.totalorder %v51, 0
    %vm68 = vcmp.ne.s32.totalorder %v52, 0
    %vm69 = vcmp.ne.s32.totalorder %v53, 0
    %vm70 = vcmp.ge.s32.totalorder %v38, 0
    %vm71 = vcmp.ge.s32.totalorder %v39, 0
    %vm72 = vcmp.ge.s32.totalorder %v40, 0
    %vm73 = vcmp.ge.s32.totalorder %v41, 0
    %vm74 = vcmp.ge.s32.totalorder %v42, 0
    %vm75 = vcmp.ge.s32.totalorder %v43, 0
    %vm76 = vcmp.ge.s32.totalorder %v44, 0
    %vm77 = vcmp.ge.s32.totalorder %v45, 0
    %vm78 = vcmp.ge.s32.totalorder %v46, 0
    %vm79 = vcmp.ge.s32.totalorder %v47, 0
    %vm80 = vcmp.ge.s32.totalorder %v48, 0
    %vm81 = vcmp.ge.s32.totalorder %v49, 0
    %vm82 = vcmp.ge.s32.totalorder %v50, 0
    %vm83 = vcmp.ge.s32.totalorder %v51, 0
    %vm84 = vcmp.ge.s32.totalorder %v52, 0
    %vm85 = vcmp.ge.s32.totalorder %v53, 0
    %vm86 = vcmp.lt.s32.totalorder %v38, 64
    %vm87 = vcmp.lt.s32.totalorder %v39, 64
    %vm88 = vcmp.lt.s32.totalorder %v40, 64
    %vm89 = vcmp.lt.s32.totalorder %v41, 64
    %vm90 = vcmp.lt.s32.totalorder %v42, 64
    %vm91 = vcmp.lt.s32.totalorder %v43, 64
    %vm92 = vcmp.lt.s32.totalorder %v44, 64
    %vm93 = vcmp.lt.s32.totalorder %v45, 64
    %vm94 = vcmp.lt.s32.totalorder %v46, 64
    %vm95 = vcmp.lt.s32.totalorder %v47, 64
    %vm96 = vcmp.lt.s32.totalorder %v48, 64
    %vm97 = vcmp.lt.s32.totalorder %v49, 64
    %vm98 = vcmp.lt.s32.totalorder %v50, 64
    %vm99 = vcmp.lt.s32.totalorder %v51, 64
    %vm100 = vcmp.lt.s32.totalorder %v52, 64
    %vm101 = vcmp.lt.s32.totalorder %v53, 64
    %vm102 = vmand %vm70, %vm86
    %vm103 = vmand %vm71, %vm87
    %vm104 = vmand %vm72, %vm88
    %vm105 = vmand %vm73, %vm89
    %vm106 = vmand %vm74, %vm90
    %vm107 = vmand %vm75, %vm91
    %vm108 = vmand %vm76, %vm92
    %vm109 = vmand %vm77, %vm93
    %vm110 = vmand %vm78, %vm94
    %vm111 = vmand %vm79, %vm95
    %vm112 = vmand %vm80, %vm96
    %vm113 = vmand %vm81, %vm97
    %vm114 = vmand %vm82, %vm98
    %vm115 = vmand %vm83, %vm99
    %vm116 = vmand %vm84, %vm100
    %vm117 = vmand %vm85, %vm101
    %vm118 = vmand %vm54, %vm102
    %vm119 = vmand %vm55, %vm103
    %vm120 = vmand %vm56, %vm104
    %vm121 = vmand %vm57, %vm105
    %vm122 = vmand %vm58, %vm106
    %vm123 = vmand %vm59, %vm107
    %vm124 = vmand %vm60, %vm108
    %vm125 = vmand %vm61, %vm109
    %vm126 = vmand %vm62, %vm110
    %vm127 = vmand %vm63, %vm111
    %vm128 = vmand %vm64, %vm112
    %vm129 = vmand %vm65, %vm113
    %vm130 = vmand %vm66, %vm114
    %vm131 = vmand %vm67, %vm115
    %vm132 = vmand %vm68, %vm116
    %vm133 = vmand %vm69, %vm117
    %v134 = vlaneseq
    %v135 = vshrl.u32 %v134, 7
    %v136 = vsub.s32 0, %v135
    %v137 = vrot.slane %v18, %v136
    %v138 = vadd.s32 %v38, %v137
    %v139 = vadd.s32 %v39, %v137
    %v140 = vadd.s32 %v40, %v137
    %v141 = vadd.s32 %v41, %v137
    %v142 = vadd.s32 %v42, %v137
    %v143 = vadd.s32 %v43, %v137
    %v144 = vadd.s32 %v44, %v137
    %v145 = vadd.s32 %v45, %v137
    %v146 = vadd.s32 %v46, %v137
    %v147 = vadd.s32 %v47, %v137
    %v148 = vadd.s32 %v48, %v137
    %v149 = vadd.s32 %v49, %v137
    %v150 = vadd.s32 %v50, %v137
    %v151 = vadd.s32 %v51, %v137
    %v152 = vadd.s32 %v52, %v137
    %v153 = vadd.s32 %v53, %v137
    %v154 = vsel %vm118, %v138, 4294967295
    %v155 = vsel %vm119, %v139, 4294967295
    %v156 = vsel %vm120, %v140, 4294967295
    %v157 = vsel %vm121, %v141, 4294967295
    %v158 = vsel %vm122, %v142, 4294967295
    %v159 = vsel %vm123, %v143, 4294967295
    %v160 = vsel %vm124, %v144, 4294967295
    %v161 = vsel %vm125, %v145, 4294967295
    %v162 = vsel %vm126, %v146, 4294967295
    %v163 = vsel %vm127, %v147, 4294967295
    %v164 = vsel %vm128, %v148, 4294967295
    %v165 = vsel %vm129, %v149, 4294967295
    %v166 = vsel %vm130, %v150, 4294967295
    %v167 = vsel %vm131, %v151, 4294967295
    %v168 = vsel %vm132, %v152, 4294967295
    %v169 = vsel %vm133, %v153, 4294967295
    %170 = vset.pattern.permute.xlu0 0
    %171 = vperm.xlu0 %170, %v154
    %v172 = vpop.permute.xlu0 %171
    %173 = vset.pattern.permute.xlu0 0
    %174 = vperm.xlu0 %173, %v155
    %v175 = vpop.permute.xlu0 %174
    %176 = vset.pattern.permute.xlu0 0
    %177 = vperm.xlu0 %176, %v156
    %v178 = vpop.permute.xlu0 %177
    %179 = vset.pattern.permute.xlu0 0
    %180 = vperm.xlu0 %179, %v157
    %v181 = vpop.permute.xlu0 %180
    %182 = vset.pattern.permute.xlu0 0
    %183 = vperm.xlu0 %182, %v158
    %v184 = vpop.permute.xlu0 %183
    %185 = vset.pattern.permute.xlu0 0
    %186 = vperm.xlu0 %185, %v159
    %v187 = vpop.permute.xlu0 %186
    %188 = vset.pattern.permute.xlu0 0
    %189 = vperm.xlu0 %188, %v160
    %v190 = vpop.permute.xlu0 %189
    %191 = vset.pattern.permute.xlu0 0
    %192 = vperm.xlu0 %191, %v161
    %v193 = vpop.permute.xlu0 %192
    %194 = vset.pattern.permute.xlu0 0
    %195 = vperm.xlu0 %194, %v162
    %v196 = vpop.permute.xlu0 %195
    %197 = vset.pattern.permute.xlu0 0
    %198 = vperm.xlu0 %197, %v163
    %v199 = vpop.permute.xlu0 %198
    %200 = vset.pattern.permute.xlu0 0
    %201 = vperm.xlu0 %200, %v164
    %v202 = vpop.permute.xlu0 %201
    %203 = vset.pattern.permute.xlu0 0
    %204 = vperm.xlu0 %203, %v165
    %v205 = vpop.permute.xlu0 %204
    %206 = vset.pattern.permute.xlu0 0
    %207 = vperm.xlu0 %206, %v166
    %v208 = vpop.permute.xlu0 %207
    %209 = vset.pattern.permute.xlu0 0
    %210 = vperm.xlu0 %209, %v167
    %v211 = vpop.permute.xlu0 %210
    %212 = vset.pattern.permute.xlu0 0
    %213 = vperm.xlu0 %212, %v168
    %v214 = vpop.permute.xlu0 %213
    %215 = vset.pattern.permute.xlu0 0
    %216 = vperm.xlu0 %215, %v169
    %v217 = vpop.permute.xlu0 %216
    %vm218 = vcmp.eq.s32.totalorder %v172, %v37
    %vm219 = vcmp.eq.s32.totalorder %v175, %v37
    %vm220 = vcmp.eq.s32.totalorder %v178, %v37
    %vm221 = vcmp.eq.s32.totalorder %v181, %v37
    %vm222 = vcmp.eq.s32.totalorder %v184, %v37
    %vm223 = vcmp.eq.s32.totalorder %v187, %v37
    %vm224 = vcmp.eq.s32.totalorder %v190, %v37
    %vm225 = vcmp.eq.s32.totalorder %v193, %v37
    %vm226 = vcmp.eq.s32.totalorder %v196, %v37
    %vm227 = vcmp.eq.s32.totalorder %v199, %v37
    %vm228 = vcmp.eq.s32.totalorder %v202, %v37
    %vm229 = vcmp.eq.s32.totalorder %v205, %v37
    %vm230 = vcmp.eq.s32.totalorder %v208, %v37
    %vm231 = vcmp.eq.s32.totalorder %v211, %v37
    %vm232 = vcmp.eq.s32.totalorder %v214, %v37
    %vm233 = vcmp.eq.s32.totalorder %v217, %v37
    %v234 = vsel %vm218, 1, 0
    %v235 = vsel %vm219, 1, 0
    %v236 = vsel %vm220, 1, 0
    %v237 = vsel %vm221, 1, 0
    %v238 = vsel %vm222, 1, 0
    %v239 = vsel %vm223, 1, 0
    %v240 = vsel %vm224, 1, 0
    %v241 = vsel %vm225, 1, 0
    %v242 = vsel %vm226, 1, 0
    %v243 = vsel %vm227, 1, 0
    %v244 = vsel %vm228, 1, 0
    %v245 = vsel %vm229, 1, 0
    %v246 = vsel %vm230, 1, 0
    %v247 = vsel %vm231, 1, 0
    %v248 = vsel %vm232, 1, 0
    %v249 = vsel %vm233, 1, 0
    %v250 = vcvt.s32.f32 %v234
    %v251 = vcvt.s32.f32 %v235
    %v252 = vcvt.s32.f32 %v236
    %v253 = vcvt.s32.f32 %v237
    %v254 = vcvt.s32.f32 %v238
    %v255 = vcvt.s32.f32 %v239
    %v256 = vcvt.s32.f32 %v240
    %v257 = vcvt.s32.f32 %v241
    %v258 = vcvt.s32.f32 %v242
    %v259 = vcvt.s32.f32 %v243
    %v260 = vcvt.s32.f32 %v244
    %v261 = vcvt.s32.f32 %v245
    %v262 = vcvt.s32.f32 %v246
    %v263 = vcvt.s32.f32 %v247
    %v264 = vcvt.s32.f32 %v248
    %v265 = vcvt.s32.f32 %v249
    %v266 = vadd.f32 %v250, 0.0
    %v267 = vadd.f32 %v251, 0.0
    %v268 = vadd.f32 %v252, 0.0
    %v269 = vadd.f32 %v253, 0.0
    %v270 = vadd.f32 %v254, 0.0
    %v271 = vadd.f32 %v255, 0.0
    %v272 = vadd.f32 %v256, 0.0
    %v273 = vadd.f32 %v257, 0.0
    %v274 = vadd.f32 %v258, 0.0
    %v275 = vadd.f32 %v259, 0.0
    %v276 = vadd.f32 %v260, 0.0
    %v277 = vadd.f32 %v261, 0.0
    %v278 = vadd.f32 %v262, 0.0
    %v279 = vadd.f32 %v263, 0.0
    %v280 = vadd.f32 %v264, 0.0
    %v281 = vadd.f32 %v265, 0.0
    %282 = vset.pattern.permute.xlu0 1
    %283 = vperm.xlu0 %282, %v154
    %v284 = vpop.permute.xlu0 %283
    %285 = vset.pattern.permute.xlu0 1
    %286 = vperm.xlu0 %285, %v155
    %v287 = vpop.permute.xlu0 %286
    %288 = vset.pattern.permute.xlu0 1
    %289 = vperm.xlu0 %288, %v156
    %v290 = vpop.permute.xlu0 %289
    %291 = vset.pattern.permute.xlu0 1
    %292 = vperm.xlu0 %291, %v157
    %v293 = vpop.permute.xlu0 %292
    %294 = vset.pattern.permute.xlu0 1
    %295 = vperm.xlu0 %294, %v158
    %v296 = vpop.permute.xlu0 %295
    %297 = vset.pattern.permute.xlu0 1
    %298 = vperm.xlu0 %297, %v159
    %v299 = vpop.permute.xlu0 %298
    %300 = vset.pattern.permute.xlu0 1
    %301 = vperm.xlu0 %300, %v160
    %v302 = vpop.permute.xlu0 %301
    %303 = vset.pattern.permute.xlu0 1
    %304 = vperm.xlu0 %303, %v161
    %v305 = vpop.permute.xlu0 %304
    %306 = vset.pattern.permute.xlu0 1
    %307 = vperm.xlu0 %306, %v162
    %v308 = vpop.permute.xlu0 %307
    %309 = vset.pattern.permute.xlu0 1
    %310 = vperm.xlu0 %309, %v163
    %v311 = vpop.permute.xlu0 %310
    %312 = vset.pattern.permute.xlu0 1
    %313 = vperm.xlu0 %312, %v164
    %v314 = vpop.permute.xlu0 %313
    %315 = vset.pattern.permute.xlu0 1
    %316 = vperm.xlu0 %315, %v165
    %v317 = vpop.permute.xlu0 %316
    %318 = vset.pattern.permute.xlu0 1
    %319 = vperm.xlu0 %318, %v166
    %v320 = vpop.permute.xlu0 %319
    %321 = vset.pattern.permute.xlu0 1
    %322 = vperm.xlu0 %321, %v167
    %v323 = vpop.permute.xlu0 %322
    %324 = vset.pattern.permute.xlu0 1
    %325 = vperm.xlu0 %324, %v168
    %v326 = vpop.permute.xlu0 %325
    %327 = vset.pattern.permute.xlu0 1
    %328 = vperm.xlu0 %327, %v169
    %v329 = vpop.permute.xlu0 %328
    %vm330 = vcmp.eq.s32.totalorder %v284, %v37
    %vm331 = vcmp.eq.s32.totalorder %v287, %v37
    %vm332 = vcmp.eq.s32.totalorder %v290, %v37
    %vm333 = vcmp.eq.s32.totalorder %v293, %v37
    %vm334 = vcmp.eq.s32.totalorder %v296, %v37
    %vm335 = vcmp.eq.s32.totalorder %v299, %v37
    %vm336 = vcmp.eq.s32.totalorder %v302, %v37
    %vm337 = vcmp.eq.s32.totalorder %v305, %v37
    %vm338 = vcmp.eq.s32.totalorder %v308, %v37
    %vm339 = vcmp.eq.s32.totalorder %v311, %v37
    %vm340 = vcmp.eq.s32.totalorder %v314, %v37
    %vm341 = vcmp.eq.s32.totalorder %v317, %v37
    %vm342 = vcmp.eq.s32.totalorder %v320, %v37
    %vm343 = vcmp.eq.s32.totalorder %v323, %v37
    %vm344 = vcmp.eq.s32.totalorder %v326, %v37
    %vm345 = vcmp.eq.s32.totalorder %v329, %v37
    %v346 = vsel %vm330, 1, 0
    %v347 = vsel %vm331, 1, 0
    %v348 = vsel %vm332, 1, 0
    %v349 = vsel %vm333, 1, 0
    %v350 = vsel %vm334, 1, 0
    %v351 = vsel %vm335, 1, 0
    %v352 = vsel %vm336, 1, 0
    %v353 = vsel %vm337, 1, 0
    %v354 = vsel %vm338, 1, 0
    %v355 = vsel %vm339, 1, 0
    %v356 = vsel %vm340, 1, 0
    %v357 = vsel %vm341, 1, 0
    %v358 = vsel %vm342, 1, 0
    %v359 = vsel %vm343, 1, 0
    %v360 = vsel %vm344, 1, 0
    %v361 = vsel %vm345, 1, 0
    %v362 = vcvt.s32.f32 %v346
    %v363 = vcvt.s32.f32 %v347
    %v364 = vcvt.s32.f32 %v348
    %v365 = vcvt.s32.f32 %v349
    %v366 = vcvt.s32.f32 %v350
    %v367 = vcvt.s32.f32 %v351
    %v368 = vcvt.s32.f32 %v352
    %v369 = vcvt.s32.f32 %v353
    %v370 = vcvt.s32.f32 %v354
    %v371 = vcvt.s32.f32 %v355
    %v372 = vcvt.s32.f32 %v356
    %v373 = vcvt.s32.f32 %v357
    %v374 = vcvt.s32.f32 %v358
    %v375 = vcvt.s32.f32 %v359
    %v376 = vcvt.s32.f32 %v360
    %v377 = vcvt.s32.f32 %v361
    %v378 = vadd.f32 %v266, %v362
    %v379 = vadd.f32 %v267, %v363
    %v380 = vadd.f32 %v268, %v364
    %v381 = vadd.f32 %v269, %v365
    %v382 = vadd.f32 %v270, %v366
    %v383 = vadd.f32 %v271, %v367
    %v384 = vadd.f32 %v272, %v368
    %v385 = vadd.f32 %v273, %v369
    %v386 = vadd.f32 %v274, %v370
    %v387 = vadd.f32 %v275, %v371
    %v388 = vadd.f32 %v276, %v372
    %v389 = vadd.f32 %v277, %v373
    %v390 = vadd.f32 %v278, %v374
    %v391 = vadd.f32 %v279, %v375
    %v392 = vadd.f32 %v280, %v376
    %v393 = vadd.f32 %v281, %v377
    %394 = vset.pattern.permute.xlu0 2
    %395 = vperm.xlu0 %394, %v154
    %v396 = vpop.permute.xlu0 %395
    %397 = vset.pattern.permute.xlu0 2
    %398 = vperm.xlu0 %397, %v155
    %v399 = vpop.permute.xlu0 %398
    %400 = vset.pattern.permute.xlu0 2
    %401 = vperm.xlu0 %400, %v156
    %v402 = vpop.permute.xlu0 %401
    %403 = vset.pattern.permute.xlu0 2
    %404 = vperm.xlu0 %403, %v157
    %v405 = vpop.permute.xlu0 %404
    %406 = vset.pattern.permute.xlu0 2
    %407 = vperm.xlu0 %406, %v158
    %v408 = vpop.permute.xlu0 %407
    %409 = vset.pattern.permute.xlu0 2
    %410 = vperm.xlu0 %409, %v159
    %v411 = vpop.permute.xlu0 %410
    %412 = vset.pattern.permute.xlu0 2
    %413 = vperm.xlu0 %412, %v160
    %v414 = vpop.permute.xlu0 %413
    %415 = vset.pattern.permute.xlu0 2
    %416 = vperm.xlu0 %415, %v161
    %v417 = vpop.permute.xlu0 %416
    %418 = vset.pattern.permute.xlu0 2
    %419 = vperm.xlu0 %418, %v162
    %v420 = vpop.permute.xlu0 %419
    %421 = vset.pattern.permute.xlu0 2
    %422 = vperm.xlu0 %421, %v163
    %v423 = vpop.permute.xlu0 %422
    %424 = vset.pattern.permute.xlu0 2
    %425 = vperm.xlu0 %424, %v164
    %v426 = vpop.permute.xlu0 %425
    %427 = vset.pattern.permute.xlu0 2
    %428 = vperm.xlu0 %427, %v165
    %v429 = vpop.permute.xlu0 %428
    %430 = vset.pattern.permute.xlu0 2
    %431 = vperm.xlu0 %430, %v166
    %v432 = vpop.permute.xlu0 %431
    %433 = vset.pattern.permute.xlu0 2
    %434 = vperm.xlu0 %433, %v167
    %v435 = vpop.permute.xlu0 %434
    %436 = vset.pattern.permute.xlu0 2
    %437 = vperm.xlu0 %436, %v168
    %v438 = vpop.permute.xlu0 %437
    %439 = vset.pattern.permute.xlu0 2
    %440 = vperm.xlu0 %439, %v169
    %v441 = vpop.permute.xlu0 %440
    %vm442 = vcmp.eq.s32.totalorder %v396, %v37
    %vm443 = vcmp.eq.s32.totalorder %v399, %v37
    %vm444 = vcmp.eq.s32.totalorder %v402, %v37
    %vm445 = vcmp.eq.s32.totalorder %v405, %v37
    %vm446 = vcmp.eq.s32.totalorder %v408, %v37
    %vm447 = vcmp.eq.s32.totalorder %v411, %v37
    %vm448 = vcmp.eq.s32.totalorder %v414, %v37
    %vm449 = vcmp.eq.s32.totalorder %v417, %v37
    %vm450 = vcmp.eq.s32.totalorder %v420, %v37
    %vm451 = vcmp.eq.s32.totalorder %v423, %v37
    %vm452 = vcmp.eq.s32.totalorder %v426, %v37
    %vm453 = vcmp.eq.s32.totalorder %v429, %v37
    %vm454 = vcmp.eq.s32.totalorder %v432, %v37
    %vm455 = vcmp.eq.s32.totalorder %v435, %v37
    %vm456 = vcmp.eq.s32.totalorder %v438, %v37
    %vm457 = vcmp.eq.s32.totalorder %v441, %v37
    %v458 = vsel %vm442, 1, 0
    %v459 = vsel %vm443, 1, 0
    %v460 = vsel %vm444, 1, 0
    %v461 = vsel %vm445, 1, 0
    %v462 = vsel %vm446, 1, 0
    %v463 = vsel %vm447, 1, 0
    %v464 = vsel %vm448, 1, 0
    %v465 = vsel %vm449, 1, 0
    %v466 = vsel %vm450, 1, 0
    %v467 = vsel %vm451, 1, 0
    %v468 = vsel %vm452, 1, 0
    %v469 = vsel %vm453, 1, 0
    %v470 = vsel %vm454, 1, 0
    %v471 = vsel %vm455, 1, 0
    %v472 = vsel %vm456, 1, 0
    %v473 = vsel %vm457, 1, 0
    %v474 = vcvt.s32.f32 %v458
    %v475 = vcvt.s32.f32 %v459
    %v476 = vcvt.s32.f32 %v460
    %v477 = vcvt.s32.f32 %v461
    %v478 = vcvt.s32.f32 %v462
    %v479 = vcvt.s32.f32 %v463
    %v480 = vcvt.s32.f32 %v464
    %v481 = vcvt.s32.f32 %v465
    %v482 = vcvt.s32.f32 %v466
    %v483 = vcvt.s32.f32 %v467
    %v484 = vcvt.s32.f32 %v468
    %v485 = vcvt.s32.f32 %v469
    %v486 = vcvt.s32.f32 %v470
    %v487 = vcvt.s32.f32 %v471
    %v488 = vcvt.s32.f32 %v472
    %v489 = vcvt.s32.f32 %v473
    %v490 = vadd.f32 %v378, %v474
    %v491 = vadd.f32 %v379, %v475
    %v492 = vadd.f32 %v380, %v476
    %v493 = vadd.f32 %v381, %v477
    %v494 = vadd.f32 %v382, %v478
    %v495 = vadd.f32 %v383, %v479
    %v496 = vadd.f32 %v384, %v480
    %v497 = vadd.f32 %v385, %v481
    %v498 = vadd.f32 %v386, %v482
    %v499 = vadd.f32 %v387, %v483
    %v500 = vadd.f32 %v388, %v484
    %v501 = vadd.f32 %v389, %v485
    %v502 = vadd.f32 %v390, %v486
    %v503 = vadd.f32 %v391, %v487
    %v504 = vadd.f32 %v392, %v488
    %v505 = vadd.f32 %v393, %v489
    %506 = vset.pattern.permute.xlu0 3
    %507 = vperm.xlu0 %506, %v154
    %v508 = vpop.permute.xlu0 %507
    %509 = vset.pattern.permute.xlu0 3
    %510 = vperm.xlu0 %509, %v155
    %v511 = vpop.permute.xlu0 %510
    %512 = vset.pattern.permute.xlu0 3
    %513 = vperm.xlu0 %512, %v156
    %v514 = vpop.permute.xlu0 %513
    %515 = vset.pattern.permute.xlu0 3
    %516 = vperm.xlu0 %515, %v157
    %v517 = vpop.permute.xlu0 %516
    %518 = vset.pattern.permute.xlu0 3
    %519 = vperm.xlu0 %518, %v158
    %v520 = vpop.permute.xlu0 %519
    %521 = vset.pattern.permute.xlu0 3
    %522 = vperm.xlu0 %521, %v159
    %v523 = vpop.permute.xlu0 %522
    %524 = vset.pattern.permute.xlu0 3
    %525 = vperm.xlu0 %524, %v160
    %v526 = vpop.permute.xlu0 %525
    %527 = vset.pattern.permute.xlu0 3
    %528 = vperm.xlu0 %527, %v161
    %v529 = vpop.permute.xlu0 %528
    %530 = vset.pattern.permute.xlu0 3
    %531 = vperm.xlu0 %530, %v162
    %v532 = vpop.permute.xlu0 %531
    %533 = vset.pattern.permute.xlu0 3
    %534 = vperm.xlu0 %533, %v163
    %v535 = vpop.permute.xlu0 %534
    %536 = vset.pattern.permute.xlu0 3
    %537 = vperm.xlu0 %536, %v164
    %v538 = vpop.permute.xlu0 %537
    %539 = vset.pattern.permute.xlu0 3
    %540 = vperm.xlu0 %539, %v165
    %v541 = vpop.permute.xlu0 %540
    %542 = vset.pattern.permute.xlu0 3
    %543 = vperm.xlu0 %542, %v166
    %v544 = vpop.permute.xlu0 %543
    %545 = vset.pattern.permute.xlu0 3
    %546 = vperm.xlu0 %545, %v167
    %v547 = vpop.permute.xlu0 %546
    %548 = vset.pattern.permute.xlu0 3
    %549 = vperm.xlu0 %548, %v168
    %v550 = vpop.permute.xlu0 %549
    %551 = vset.pattern.permute.xlu0 3
    %552 = vperm.xlu0 %551, %v169
    %v553 = vpop.permute.xlu0 %552
    %vm554 = vcmp.eq.s32.totalorder %v508, %v37
    %vm555 = vcmp.eq.s32.totalorder %v511, %v37
    %vm556 = vcmp.eq.s32.totalorder %v514, %v37
    %vm557 = vcmp.eq.s32.totalorder %v517, %v37
    %vm558 = vcmp.eq.s32.totalorder %v520, %v37
    %vm559 = vcmp.eq.s32.totalorder %v523, %v37
    %vm560 = vcmp.eq.s32.totalorder %v526, %v37
    %vm561 = vcmp.eq.s32.totalorder %v529, %v37
    %vm562 = vcmp.eq.s32.totalorder %v532, %v37
    %vm563 = vcmp.eq.s32.totalorder %v535, %v37
    %vm564 = vcmp.eq.s32.totalorder %v538, %v37
    %vm565 = vcmp.eq.s32.totalorder %v541, %v37
    %vm566 = vcmp.eq.s32.totalorder %v544, %v37
    %vm567 = vcmp.eq.s32.totalorder %v547, %v37
    %vm568 = vcmp.eq.s32.totalorder %v550, %v37
    %vm569 = vcmp.eq.s32.totalorder %v553, %v37
    %v570 = vsel %vm554, 1, 0
    %v571 = vsel %vm555, 1, 0
    %v572 = vsel %vm556, 1, 0
    %v573 = vsel %vm557, 1, 0
    %v574 = vsel %vm558, 1, 0
    %v575 = vsel %vm559, 1, 0
    %v576 = vsel %vm560, 1, 0
    %v577 = vsel %vm561, 1, 0
    %v578 = vsel %vm562, 1, 0
    %v579 = vsel %vm563, 1, 0
    %v580 = vsel %vm564, 1, 0
    %v581 = vsel %vm565, 1, 0
    %v582 = vsel %vm566, 1, 0
    %v583 = vsel %vm567, 1, 0
    %v584 = vsel %vm568, 1, 0
    %v585 = vsel %vm569, 1, 0
    %v586 = vcvt.s32.f32 %v570
    %v587 = vcvt.s32.f32 %v571
    %v588 = vcvt.s32.f32 %v572
    %v589 = vcvt.s32.f32 %v573
    %v590 = vcvt.s32.f32 %v574
    %v591 = vcvt.s32.f32 %v575
    %v592 = vcvt.s32.f32 %v576
    %v593 = vcvt.s32.f32 %v577
    %v594 = vcvt.s32.f32 %v578
    %v595 = vcvt.s32.f32 %v579
    %v596 = vcvt.s32.f32 %v580
    %v597 = vcvt.s32.f32 %v581
    %v598 = vcvt.s32.f32 %v582
    %v599 = vcvt.s32.f32 %v583
    %v600 = vcvt.s32.f32 %v584
    %v601 = vcvt.s32.f32 %v585
    %v602 = vadd.f32 %v490, %v586
    %v603 = vadd.f32 %v491, %v587
    %v604 = vadd.f32 %v492, %v588
    %v605 = vadd.f32 %v493, %v589
    %v606 = vadd.f32 %v494, %v590
    %v607 = vadd.f32 %v495, %v591
    %v608 = vadd.f32 %v496, %v592
    %v609 = vadd.f32 %v497, %v593
    %v610 = vadd.f32 %v498, %v594
    %v611 = vadd.f32 %v499, %v595
    %v612 = vadd.f32 %v500, %v596
    %v613 = vadd.f32 %v501, %v597
    %v614 = vadd.f32 %v502, %v598
    %v615 = vadd.f32 %v503, %v599
    %v616 = vadd.f32 %v504, %v600
    %v617 = vadd.f32 %v505, %v601
    %618 = vset.pattern.permute.xlu0 4
    %619 = vperm.xlu0 %618, %v154
    %v620 = vpop.permute.xlu0 %619
    %621 = vset.pattern.permute.xlu0 4
    %622 = vperm.xlu0 %621, %v155
    %v623 = vpop.permute.xlu0 %622
    %624 = vset.pattern.permute.xlu0 4
    %625 = vperm.xlu0 %624, %v156
    %v626 = vpop.permute.xlu0 %625
    %627 = vset.pattern.permute.xlu0 4
    %628 = vperm.xlu0 %627, %v157
    %v629 = vpop.permute.xlu0 %628
    %630 = vset.pattern.permute.xlu0 4
    %631 = vperm.xlu0 %630, %v158
    %v632 = vpop.permute.xlu0 %631
    %633 = vset.pattern.permute.xlu0 4
    %634 = vperm.xlu0 %633, %v159
    %v635 = vpop.permute.xlu0 %634
    %636 = vset.pattern.permute.xlu0 4
    %637 = vperm.xlu0 %636, %v160
    %v638 = vpop.permute.xlu0 %637
    %639 = vset.pattern.permute.xlu0 4
    %640 = vperm.xlu0 %639, %v161
    %v641 = vpop.permute.xlu0 %640
    %642 = vset.pattern.permute.xlu0 4
    %643 = vperm.xlu0 %642, %v162
    %v644 = vpop.permute.xlu0 %643
    %645 = vset.pattern.permute.xlu0 4
    %646 = vperm.xlu0 %645, %v163
    %v647 = vpop.permute.xlu0 %646
    %648 = vset.pattern.permute.xlu0 4
    %649 = vperm.xlu0 %648, %v164
    %v650 = vpop.permute.xlu0 %649
    %651 = vset.pattern.permute.xlu0 4
    %652 = vperm.xlu0 %651, %v165
    %v653 = vpop.permute.xlu0 %652
    %654 = vset.pattern.permute.xlu0 4
    %655 = vperm.xlu0 %654, %v166
    %v656 = vpop.permute.xlu0 %655
    %657 = vset.pattern.permute.xlu0 4
    %658 = vperm.xlu0 %657, %v167
    %v659 = vpop.permute.xlu0 %658
    %660 = vset.pattern.permute.xlu0 4
    %661 = vperm.xlu0 %660, %v168
    %v662 = vpop.permute.xlu0 %661
    %663 = vset.pattern.permute.xlu0 4
    %664 = vperm.xlu0 %663, %v169
    %v665 = vpop.permute.xlu0 %664
    %vm666 = vcmp.eq.s32.totalorder %v620, %v37
    %vm667 = vcmp.eq.s32.totalorder %v623, %v37
    %vm668 = vcmp.eq.s32.totalorder %v626, %v37
    %vm669 = vcmp.eq.s32.totalorder %v629, %v37
    %vm670 = vcmp.eq.s32.totalorder %v632, %v37
    %vm671 = vcmp.eq.s32.totalorder %v635, %v37
    %vm672 = vcmp.eq.s32.totalorder %v638, %v37
    %vm673 = vcmp.eq.s32.totalorder %v641, %v37
    %vm674 = vcmp.eq.s32.totalorder %v644, %v37
    %vm675 = vcmp.eq.s32.totalorder %v647, %v37
    %vm676 = vcmp.eq.s32.totalorder %v650, %v37
    %vm677 = vcmp.eq.s32.totalorder %v653, %v37
    %vm678 = vcmp.eq.s32.totalorder %v656, %v37
    %vm679 = vcmp.eq.s32.totalorder %v659, %v37
    %vm680 = vcmp.eq.s32.totalorder %v662, %v37
    %vm681 = vcmp.eq.s32.totalorder %v665, %v37
    %v682 = vsel %vm666, 1, 0
    %v683 = vsel %vm667, 1, 0
    %v684 = vsel %vm668, 1, 0
    %v685 = vsel %vm669, 1, 0
    %v686 = vsel %vm670, 1, 0
    %v687 = vsel %vm671, 1, 0
    %v688 = vsel %vm672, 1, 0
    %v689 = vsel %vm673, 1, 0
    %v690 = vsel %vm674, 1, 0
    %v691 = vsel %vm675, 1, 0
    %v692 = vsel %vm676, 1, 0
    %v693 = vsel %vm677, 1, 0
    %v694 = vsel %vm678, 1, 0
    %v695 = vsel %vm679, 1, 0
    %v696 = vsel %vm680, 1, 0
    %v697 = vsel %vm681, 1, 0
    %v698 = vcvt.s32.f32 %v682
    %v699 = vcvt.s32.f32 %v683
    %v700 = vcvt.s32.f32 %v684
    %v701 = vcvt.s32.f32 %v685
    %v702 = vcvt.s32.f32 %v686
    %v703 = vcvt.s32.f32 %v687
    %v704 = vcvt.s32.f32 %v688
    %v705 = vcvt.s32.f32 %v689
    %v706 = vcvt.s32.f32 %v690
    %v707 = vcvt.s32.f32 %v691
    %v708 = vcvt.s32.f32 %v692
    %v709 = vcvt.s32.f32 %v693
    %v710 = vcvt.s32.f32 %v694
    %v711 = vcvt.s32.f32 %v695
    %v712 = vcvt.s32.f32 %v696
    %v713 = vcvt.s32.f32 %v697
    %v714 = vadd.f32 %v602, %v698
    %v715 = vadd.f32 %v603, %v699
    %v716 = vadd.f32 %v604, %v700
    %v717 = vadd.f32 %v605, %v701
    %v718 = vadd.f32 %v606, %v702
    %v719 = vadd.f32 %v607, %v703
    %v720 = vadd.f32 %v608, %v704
    %v721 = vadd.f32 %v609, %v705
    %v722 = vadd.f32 %v610, %v706
    %v723 = vadd.f32 %v611, %v707
    %v724 = vadd.f32 %v612, %v708
    %v725 = vadd.f32 %v613, %v709
    %v726 = vadd.f32 %v614, %v710
    %v727 = vadd.f32 %v615, %v711
    %v728 = vadd.f32 %v616, %v712
    %v729 = vadd.f32 %v617, %v713
    %730 = vset.pattern.permute.xlu0 5
    %731 = vperm.xlu0 %730, %v154
    %v732 = vpop.permute.xlu0 %731
    %733 = vset.pattern.permute.xlu0 5
    %734 = vperm.xlu0 %733, %v155
    %v735 = vpop.permute.xlu0 %734
    %736 = vset.pattern.permute.xlu0 5
    %737 = vperm.xlu0 %736, %v156
    %v738 = vpop.permute.xlu0 %737
    %739 = vset.pattern.permute.xlu0 5
    %740 = vperm.xlu0 %739, %v157
    %v741 = vpop.permute.xlu0 %740
    %742 = vset.pattern.permute.xlu0 5
    %743 = vperm.xlu0 %742, %v158
    %v744 = vpop.permute.xlu0 %743
    %745 = vset.pattern.permute.xlu0 5
    %746 = vperm.xlu0 %745, %v159
    %v747 = vpop.permute.xlu0 %746
    %748 = vset.pattern.permute.xlu0 5
    %749 = vperm.xlu0 %748, %v160
    %v750 = vpop.permute.xlu0 %749
    %751 = vset.pattern.permute.xlu0 5
    %752 = vperm.xlu0 %751, %v161
    %v753 = vpop.permute.xlu0 %752
    %754 = vset.pattern.permute.xlu0 5
    %755 = vperm.xlu0 %754, %v162
    %v756 = vpop.permute.xlu0 %755
    %757 = vset.pattern.permute.xlu0 5
    %758 = vperm.xlu0 %757, %v163
    %v759 = vpop.permute.xlu0 %758
    %760 = vset.pattern.permute.xlu0 5
    %761 = vperm.xlu0 %760, %v164
    %v762 = vpop.permute.xlu0 %761
    %763 = vset.pattern.permute.xlu0 5
    %764 = vperm.xlu0 %763, %v165
    %v765 = vpop.permute.xlu0 %764
    %766 = vset.pattern.permute.xlu0 5
    %767 = vperm.xlu0 %766, %v166
    %v768 = vpop.permute.xlu0 %767
    %769 = vset.pattern.permute.xlu0 5
    %770 = vperm.xlu0 %769, %v167
    %v771 = vpop.permute.xlu0 %770
    %772 = vset.pattern.permute.xlu0 5
    %773 = vperm.xlu0 %772, %v168
    %v774 = vpop.permute.xlu0 %773
    %775 = vset.pattern.permute.xlu0 5
    %776 = vperm.xlu0 %775, %v169
    %v777 = vpop.permute.xlu0 %776
    %vm778 = vcmp.eq.s32.totalorder %v732, %v37
    %vm779 = vcmp.eq.s32.totalorder %v735, %v37
    %vm780 = vcmp.eq.s32.totalorder %v738, %v37
    %vm781 = vcmp.eq.s32.totalorder %v741, %v37
    %vm782 = vcmp.eq.s32.totalorder %v744, %v37
    %vm783 = vcmp.eq.s32.totalorder %v747, %v37
    %vm784 = vcmp.eq.s32.totalorder %v750, %v37
    %vm785 = vcmp.eq.s32.totalorder %v753, %v37
    %vm786 = vcmp.eq.s32.totalorder %v756, %v37
    %vm787 = vcmp.eq.s32.totalorder %v759, %v37
    %vm788 = vcmp.eq.s32.totalorder %v762, %v37
    %vm789 = vcmp.eq.s32.totalorder %v765, %v37
    %vm790 = vcmp.eq.s32.totalorder %v768, %v37
    %vm791 = vcmp.eq.s32.totalorder %v771, %v37
    %vm792 = vcmp.eq.s32.totalorder %v774, %v37
    %vm793 = vcmp.eq.s32.totalorder %v777, %v37
    %v794 = vsel %vm778, 1, 0
    %v795 = vsel %vm779, 1, 0
    %v796 = vsel %vm780, 1, 0
    %v797 = vsel %vm781, 1, 0
    %v798 = vsel %vm782, 1, 0
    %v799 = vsel %vm783, 1, 0
    %v800 = vsel %vm784, 1, 0
    %v801 = vsel %vm785, 1, 0
    %v802 = vsel %vm786, 1, 0
    %v803 = vsel %vm787, 1, 0
    %v804 = vsel %vm788, 1, 0
    %v805 = vsel %vm789, 1, 0
    %v806 = vsel %vm790, 1, 0
    %v807 = vsel %vm791, 1, 0
    %v808 = vsel %vm792, 1, 0
    %v809 = vsel %vm793, 1, 0
    %v810 = vcvt.s32.f32 %v794
    %v811 = vcvt.s32.f32 %v795
    %v812 = vcvt.s32.f32 %v796
    %v813 = vcvt.s32.f32 %v797
    %v814 = vcvt.s32.f32 %v798
    %v815 = vcvt.s32.f32 %v799
    %v816 = vcvt.s32.f32 %v800
    %v817 = vcvt.s32.f32 %v801
    %v818 = vcvt.s32.f32 %v802
    %v819 = vcvt.s32.f32 %v803
    %v820 = vcvt.s32.f32 %v804
    %v821 = vcvt.s32.f32 %v805
    %v822 = vcvt.s32.f32 %v806
    %v823 = vcvt.s32.f32 %v807
    %v824 = vcvt.s32.f32 %v808
    %v825 = vcvt.s32.f32 %v809
    %v826 = vadd.f32 %v714, %v810
    %v827 = vadd.f32 %v715, %v811
    %v828 = vadd.f32 %v716, %v812
    %v829 = vadd.f32 %v717, %v813
    %v830 = vadd.f32 %v718, %v814
    %v831 = vadd.f32 %v719, %v815
    %v832 = vadd.f32 %v720, %v816
    %v833 = vadd.f32 %v721, %v817
    %v834 = vadd.f32 %v722, %v818
    %v835 = vadd.f32 %v723, %v819
    %v836 = vadd.f32 %v724, %v820
    %v837 = vadd.f32 %v725, %v821
    %v838 = vadd.f32 %v726, %v822
    %v839 = vadd.f32 %v727, %v823
    %v840 = vadd.f32 %v728, %v824
    %v841 = vadd.f32 %v729, %v825
    %842 = vset.pattern.permute.xlu0 6
    %843 = vperm.xlu0 %842, %v154
    %v844 = vpop.permute.xlu0 %843
    %845 = vset.pattern.permute.xlu0 6
    %846 = vperm.xlu0 %845, %v155
    %v847 = vpop.permute.xlu0 %846
    %848 = vset.pattern.permute.xlu0 6
    %849 = vperm.xlu0 %848, %v156
    %v850 = vpop.permute.xlu0 %849
    %851 = vset.pattern.permute.xlu0 6
    %852 = vperm.xlu0 %851, %v157
    %v853 = vpop.permute.xlu0 %852
    %854 = vset.pattern.permute.xlu0 6
    %855 = vperm.xlu0 %854, %v158
    %v856 = vpop.permute.xlu0 %855
    %857 = vset.pattern.permute.xlu0 6
    %858 = vperm.xlu0 %857, %v159
    %v859 = vpop.permute.xlu0 %858
    %860 = vset.pattern.permute.xlu0 6
    %861 = vperm.xlu0 %860, %v160
    %v862 = vpop.permute.xlu0 %861
    %863 = vset.pattern.permute.xlu0 6
    %864 = vperm.xlu0 %863, %v161
    %v865 = vpop.permute.xlu0 %864
    %866 = vset.pattern.permute.xlu0 6
    %867 = vperm.xlu0 %866, %v162
    %v868 = vpop.permute.xlu0 %867
    %869 = vset.pattern.permute.xlu0 6
    %870 = vperm.xlu0 %869, %v163
    %v871 = vpop.permute.xlu0 %870
    %872 = vset.pattern.permute.xlu0 6
    %873 = vperm.xlu0 %872, %v164
    %v874 = vpop.permute.xlu0 %873
    %875 = vset.pattern.permute.xlu0 6
    %876 = vperm.xlu0 %875, %v165
    %v877 = vpop.permute.xlu0 %876
    %878 = vset.pattern.permute.xlu0 6
    %879 = vperm.xlu0 %878, %v166
    %v880 = vpop.permute.xlu0 %879
    %881 = vset.pattern.permute.xlu0 6
    %882 = vperm.xlu0 %881, %v167
    %v883 = vpop.permute.xlu0 %882
    %884 = vset.pattern.permute.xlu0 6
    %885 = vperm.xlu0 %884, %v168
    %v886 = vpop.permute.xlu0 %885
    %887 = vset.pattern.permute.xlu0 6
    %888 = vperm.xlu0 %887, %v169
    %v889 = vpop.permute.xlu0 %888
    %vm890 = vcmp.eq.s32.totalorder %v844, %v37
    %vm891 = vcmp.eq.s32.totalorder %v847, %v37
    %vm892 = vcmp.eq.s32.totalorder %v850, %v37
    %vm893 = vcmp.eq.s32.totalorder %v853, %v37
    %vm894 = vcmp.eq.s32.totalorder %v856, %v37
    %vm895 = vcmp.eq.s32.totalorder %v859, %v37
    %vm896 = vcmp.eq.s32.totalorder %v862, %v37
    %vm897 = vcmp.eq.s32.totalorder %v865, %v37
    %vm898 = vcmp.eq.s32.totalorder %v868, %v37
    %vm899 = vcmp.eq.s32.totalorder %v871, %v37
    %vm900 = vcmp.eq.s32.totalorder %v874, %v37
    %vm901 = vcmp.eq.s32.totalorder %v877, %v37
    %vm902 = vcmp.eq.s32.totalorder %v880, %v37
    %vm903 = vcmp.eq.s32.totalorder %v883, %v37
    %vm904 = vcmp.eq.s32.totalorder %v886, %v37
    %vm905 = vcmp.eq.s32.totalorder %v889, %v37
    %v906 = vsel %vm890, 1, 0
    %v907 = vsel %vm891, 1, 0
    %v908 = vsel %vm892, 1, 0
    %v909 = vsel %vm893, 1, 0
    %v910 = vsel %vm894, 1, 0
    %v911 = vsel %vm895, 1, 0
    %v912 = vsel %vm896, 1, 0
    %v913 = vsel %vm897, 1, 0
    %v914 = vsel %vm898, 1, 0
    %v915 = vsel %vm899, 1, 0
    %v916 = vsel %vm900, 1, 0
    %v917 = vsel %vm901, 1, 0
    %v918 = vsel %vm902, 1, 0
    %v919 = vsel %vm903, 1, 0
    %v920 = vsel %vm904, 1, 0
    %v921 = vsel %vm905, 1, 0
    %v922 = vcvt.s32.f32 %v906
    %v923 = vcvt.s32.f32 %v907
    %v924 = vcvt.s32.f32 %v908
    %v925 = vcvt.s32.f32 %v909
    %v926 = vcvt.s32.f32 %v910
    %v927 = vcvt.s32.f32 %v911
    %v928 = vcvt.s32.f32 %v912
    %v929 = vcvt.s32.f32 %v913
    %v930 = vcvt.s32.f32 %v914
    %v931 = vcvt.s32.f32 %v915
    %v932 = vcvt.s32.f32 %v916
    %v933 = vcvt.s32.f32 %v917
    %v934 = vcvt.s32.f32 %v918
    %v935 = vcvt.s32.f32 %v919
    %v936 = vcvt.s32.f32 %v920
    %v937 = vcvt.s32.f32 %v921
    %v938 = vadd.f32 %v826, %v922
    %v939 = vadd.f32 %v827, %v923
    %v940 = vadd.f32 %v828, %v924
    %v941 = vadd.f32 %v829, %v925
    %v942 = vadd.f32 %v830, %v926
    %v943 = vadd.f32 %v831, %v927
    %v944 = vadd.f32 %v832, %v928
    %v945 = vadd.f32 %v833, %v929
    %v946 = vadd.f32 %v834, %v930
    %v947 = vadd.f32 %v835, %v931
    %v948 = vadd.f32 %v836, %v932
    %v949 = vadd.f32 %v837, %v933
    %v950 = vadd.f32 %v838, %v934
    %v951 = vadd.f32 %v839, %v935
    %v952 = vadd.f32 %v840, %v936
    %v953 = vadd.f32 %v841, %v937
    %954 = vset.pattern.permute.xlu0 7
    %955 = vperm.xlu0 %954, %v154
    %v956 = vpop.permute.xlu0 %955
    %957 = vset.pattern.permute.xlu0 7
    %958 = vperm.xlu0 %957, %v155
    %v959 = vpop.permute.xlu0 %958
    %960 = vset.pattern.permute.xlu0 7
    %961 = vperm.xlu0 %960, %v156
    %v962 = vpop.permute.xlu0 %961
    %963 = vset.pattern.permute.xlu0 7
    %964 = vperm.xlu0 %963, %v157
    %v965 = vpop.permute.xlu0 %964
    %966 = vset.pattern.permute.xlu0 7
    %967 = vperm.xlu0 %966, %v158
    %v968 = vpop.permute.xlu0 %967
    %969 = vset.pattern.permute.xlu0 7
    %970 = vperm.xlu0 %969, %v159
    %v971 = vpop.permute.xlu0 %970
    %972 = vset.pattern.permute.xlu0 7
    %973 = vperm.xlu0 %972, %v160
    %v974 = vpop.permute.xlu0 %973
    %975 = vset.pattern.permute.xlu0 7
    %976 = vperm.xlu0 %975, %v161
    %v977 = vpop.permute.xlu0 %976
    %978 = vset.pattern.permute.xlu0 7
    %979 = vperm.xlu0 %978, %v162
    %v980 = vpop.permute.xlu0 %979
    %981 = vset.pattern.permute.xlu0 7
    %982 = vperm.xlu0 %981, %v163
    %v983 = vpop.permute.xlu0 %982
    %984 = vset.pattern.permute.xlu0 7
    %985 = vperm.xlu0 %984, %v164
    %v986 = vpop.permute.xlu0 %985
    %987 = vset.pattern.permute.xlu0 7
    %988 = vperm.xlu0 %987, %v165
    %v989 = vpop.permute.xlu0 %988
    %990 = vset.pattern.permute.xlu0 7
    %991 = vperm.xlu0 %990, %v166
    %v992 = vpop.permute.xlu0 %991
    %993 = vset.pattern.permute.xlu0 7
    %994 = vperm.xlu0 %993, %v167
    %v995 = vpop.permute.xlu0 %994
    %996 = vset.pattern.permute.xlu0 7
    %997 = vperm.xlu0 %996, %v168
    %v998 = vpop.permute.xlu0 %997
    %999 = vset.pattern.permute.xlu0 7
    %1000 = vperm.xlu0 %999, %v169
    %v1001 = vpop.permute.xlu0 %1000
    %vm1002 = vcmp.eq.s32.totalorder %v956, %v37
    %vm1003 = vcmp.eq.s32.totalorder %v959, %v37
    %vm1004 = vcmp.eq.s32.totalorder %v962, %v37
    %vm1005 = vcmp.eq.s32.totalorder %v965, %v37
    %vm1006 = vcmp.eq.s32.totalorder %v968, %v37
    %vm1007 = vcmp.eq.s32.totalorder %v971, %v37
    %vm1008 = vcmp.eq.s32.totalorder %v974, %v37
    %vm1009 = vcmp.eq.s32.totalorder %v977, %v37
    %vm1010 = vcmp.eq.s32.totalorder %v980, %v37
    %vm1011 = vcmp.eq.s32.totalorder %v983, %v37
    %vm1012 = vcmp.eq.s32.totalorder %v986, %v37
    %vm1013 = vcmp.eq.s32.totalorder %v989, %v37
    %vm1014 = vcmp.eq.s32.totalorder %v992, %v37
    %vm1015 = vcmp.eq.s32.totalorder %v995, %v37
    %vm1016 = vcmp.eq.s32.totalorder %v998, %v37
    %vm1017 = vcmp.eq.s32.totalorder %v1001, %v37
    %v1018 = vsel %vm1002, 1, 0
    %v1019 = vsel %vm1003, 1, 0
    %v1020 = vsel %vm1004, 1, 0
    %v1021 = vsel %vm1005, 1, 0
    %v1022 = vsel %vm1006, 1, 0
    %v1023 = vsel %vm1007, 1, 0
    %v1024 = vsel %vm1008, 1, 0
    %v1025 = vsel %vm1009, 1, 0
    %v1026 = vsel %vm1010, 1, 0
    %v1027 = vsel %vm1011, 1, 0
    %v1028 = vsel %vm1012, 1, 0
    %v1029 = vsel %vm1013, 1, 0
    %v1030 = vsel %vm1014, 1, 0
    %v1031 = vsel %vm1015, 1, 0
    %v1032 = vsel %vm1016, 1, 0
    %v1033 = vsel %vm1017, 1, 0
    %v1034 = vcvt.s32.f32 %v1018
    %v1035 = vcvt.s32.f32 %v1019
    %v1036 = vcvt.s32.f32 %v1020
    %v1037 = vcvt.s32.f32 %v1021
    %v1038 = vcvt.s32.f32 %v1022
    %v1039 = vcvt.s32.f32 %v1023
    %v1040 = vcvt.s32.f32 %v1024
    %v1041 = vcvt.s32.f32 %v1025
    %v1042 = vcvt.s32.f32 %v1026
    %v1043 = vcvt.s32.f32 %v1027
    %v1044 = vcvt.s32.f32 %v1028
    %v1045 = vcvt.s32.f32 %v1029
    %v1046 = vcvt.s32.f32 %v1030
    %v1047 = vcvt.s32.f32 %v1031
    %v1048 = vcvt.s32.f32 %v1032
    %v1049 = vcvt.s32.f32 %v1033
    %v1050 = vadd.f32 %v938, %v1034
    %v1051 = vadd.f32 %v939, %v1035
    %v1052 = vadd.f32 %v940, %v1036
    %v1053 = vadd.f32 %v941, %v1037
    %v1054 = vadd.f32 %v942, %v1038
    %v1055 = vadd.f32 %v943, %v1039
    %v1056 = vadd.f32 %v944, %v1040
    %v1057 = vadd.f32 %v945, %v1041
    %v1058 = vadd.f32 %v946, %v1042
    %v1059 = vadd.f32 %v947, %v1043
    %v1060 = vadd.f32 %v948, %v1044
    %v1061 = vadd.f32 %v949, %v1045
    %v1062 = vadd.f32 %v950, %v1046
    %v1063 = vadd.f32 %v951, %v1047
    %v1064 = vadd.f32 %v952, %v1048
    %v1065 = vadd.f32 %v953, %v1049
    %1066 = vset.pattern.permute.xlu0 8
    %1067 = vperm.xlu0 %1066, %v154
    %v1068 = vpop.permute.xlu0 %1067
    %1069 = vset.pattern.permute.xlu0 8
    %1070 = vperm.xlu0 %1069, %v155
    %v1071 = vpop.permute.xlu0 %1070
    %1072 = vset.pattern.permute.xlu0 8
    %1073 = vperm.xlu0 %1072, %v156
    %v1074 = vpop.permute.xlu0 %1073
    %1075 = vset.pattern.permute.xlu0 8
    %1076 = vperm.xlu0 %1075, %v157
    %v1077 = vpop.permute.xlu0 %1076
    %1078 = vset.pattern.permute.xlu0 8
    %1079 = vperm.xlu0 %1078, %v158
    %v1080 = vpop.permute.xlu0 %1079
    %1081 = vset.pattern.permute.xlu0 8
    %1082 = vperm.xlu0 %1081, %v159
    %v1083 = vpop.permute.xlu0 %1082
    %1084 = vset.pattern.permute.xlu0 8
    %1085 = vperm.xlu0 %1084, %v160
    %v1086 = vpop.permute.xlu0 %1085
    %1087 = vset.pattern.permute.xlu0 8
    %1088 = vperm.xlu0 %1087, %v161
    %v1089 = vpop.permute.xlu0 %1088
    %1090 = vset.pattern.permute.xlu0 8
    %1091 = vperm.xlu0 %1090, %v162
    %v1092 = vpop.permute.xlu0 %1091
    %1093 = vset.pattern.permute.xlu0 8
    %1094 = vperm.xlu0 %1093, %v163
    %v1095 = vpop.permute.xlu0 %1094
    %1096 = vset.pattern.permute.xlu0 8
    %1097 = vperm.xlu0 %1096, %v164
    %v1098 = vpop.permute.xlu0 %1097
    %1099 = vset.pattern.permute.xlu0 8
    %1100 = vperm.xlu0 %1099, %v165
    %v1101 = vpop.permute.xlu0 %1100
    %1102 = vset.pattern.permute.xlu0 8
    %1103 = vperm.xlu0 %1102, %v166
    %v1104 = vpop.permute.xlu0 %1103
    %1105 = vset.pattern.permute.xlu0 8
    %1106 = vperm.xlu0 %1105, %v167
    %v1107 = vpop.permute.xlu0 %1106
    %1108 = vset.pattern.permute.xlu0 8
    %1109 = vperm.xlu0 %1108, %v168
    %v1110 = vpop.permute.xlu0 %1109
    %1111 = vset.pattern.permute.xlu0 8
    %1112 = vperm.xlu0 %1111, %v169
    %v1113 = vpop.permute.xlu0 %1112
    %vm1114 = vcmp.eq.s32.totalorder %v1068, %v37
    %vm1115 = vcmp.eq.s32.totalorder %v1071, %v37
    %vm1116 = vcmp.eq.s32.totalorder %v1074, %v37
    %vm1117 = vcmp.eq.s32.totalorder %v1077, %v37
    %vm1118 = vcmp.eq.s32.totalorder %v1080, %v37
    %vm1119 = vcmp.eq.s32.totalorder %v1083, %v37
    %vm1120 = vcmp.eq.s32.totalorder %v1086, %v37
    %vm1121 = vcmp.eq.s32.totalorder %v1089, %v37
    %vm1122 = vcmp.eq.s32.totalorder %v1092, %v37
    %vm1123 = vcmp.eq.s32.totalorder %v1095, %v37
    %vm1124 = vcmp.eq.s32.totalorder %v1098, %v37
    %vm1125 = vcmp.eq.s32.totalorder %v1101, %v37
    %vm1126 = vcmp.eq.s32.totalorder %v1104, %v37
    %vm1127 = vcmp.eq.s32.totalorder %v1107, %v37
    %vm1128 = vcmp.eq.s32.totalorder %v1110, %v37
    %vm1129 = vcmp.eq.s32.totalorder %v1113, %v37
    %v1130 = vsel %vm1114, 1, 0
    %v1131 = vsel %vm1115, 1, 0
    %v1132 = vsel %vm1116, 1, 0
    %v1133 = vsel %vm1117, 1, 0
    %v1134 = vsel %vm1118, 1, 0
    %v1135 = vsel %vm1119, 1, 0
    %v1136 = vsel %vm1120, 1, 0
    %v1137 = vsel %vm1121, 1, 0
    %v1138 = vsel %vm1122, 1, 0
    %v1139 = vsel %vm1123, 1, 0
    %v1140 = vsel %vm1124, 1, 0
    %v1141 = vsel %vm1125, 1, 0
    %v1142 = vsel %vm1126, 1, 0
    %v1143 = vsel %vm1127, 1, 0
    %v1144 = vsel %vm1128, 1, 0
    %v1145 = vsel %vm1129, 1, 0
    %v1146 = vcvt.s32.f32 %v1130
    %v1147 = vcvt.s32.f32 %v1131
    %v1148 = vcvt.s32.f32 %v1132
    %v1149 = vcvt.s32.f32 %v1133
    %v1150 = vcvt.s32.f32 %v1134
    %v1151 = vcvt.s32.f32 %v1135
    %v1152 = vcvt.s32.f32 %v1136
    %v1153 = vcvt.s32.f32 %v1137
    %v1154 = vcvt.s32.f32 %v1138
    %v1155 = vcvt.s32.f32 %v1139
    %v1156 = vcvt.s32.f32 %v1140
    %v1157 = vcvt.s32.f32 %v1141
    %v1158 = vcvt.s32.f32 %v1142
    %v1159 = vcvt.s32.f32 %v1143
    %v1160 = vcvt.s32.f32 %v1144
    %v1161 = vcvt.s32.f32 %v1145
    %v1162 = vadd.f32 %v1050, %v1146
    %v1163 = vadd.f32 %v1051, %v1147
    %v1164 = vadd.f32 %v1052, %v1148
    %v1165 = vadd.f32 %v1053, %v1149
    %v1166 = vadd.f32 %v1054, %v1150
    %v1167 = vadd.f32 %v1055, %v1151
    %v1168 = vadd.f32 %v1056, %v1152
    %v1169 = vadd.f32 %v1057, %v1153
    %v1170 = vadd.f32 %v1058, %v1154
    %v1171 = vadd.f32 %v1059, %v1155
    %v1172 = vadd.f32 %v1060, %v1156
    %v1173 = vadd.f32 %v1061, %v1157
    %v1174 = vadd.f32 %v1062, %v1158
    %v1175 = vadd.f32 %v1063, %v1159
    %v1176 = vadd.f32 %v1064, %v1160
    %v1177 = vadd.f32 %v1065, %v1161
    %1178 = vset.pattern.permute.xlu0 9
    %1179 = vperm.xlu0 %1178, %v154
    %v1180 = vpop.permute.xlu0 %1179
    %1181 = vset.pattern.permute.xlu0 9
    %1182 = vperm.xlu0 %1181, %v155
    %v1183 = vpop.permute.xlu0 %1182
    %1184 = vset.pattern.permute.xlu0 9
    %1185 = vperm.xlu0 %1184, %v156
    %v1186 = vpop.permute.xlu0 %1185
    %1187 = vset.pattern.permute.xlu0 9
    %1188 = vperm.xlu0 %1187, %v157
    %v1189 = vpop.permute.xlu0 %1188
    %1190 = vset.pattern.permute.xlu0 9
    %1191 = vperm.xlu0 %1190, %v158
    %v1192 = vpop.permute.xlu0 %1191
    %1193 = vset.pattern.permute.xlu0 9
    %1194 = vperm.xlu0 %1193, %v159
    %v1195 = vpop.permute.xlu0 %1194
    %1196 = vset.pattern.permute.xlu0 9
    %1197 = vperm.xlu0 %1196, %v160
    %v1198 = vpop.permute.xlu0 %1197
    %1199 = vset.pattern.permute.xlu0 9
    %1200 = vperm.xlu0 %1199, %v161
    %v1201 = vpop.permute.xlu0 %1200
    %1202 = vset.pattern.permute.xlu0 9
    %1203 = vperm.xlu0 %1202, %v162
    %v1204 = vpop.permute.xlu0 %1203
    %1205 = vset.pattern.permute.xlu0 9
    %1206 = vperm.xlu0 %1205, %v163
    %v1207 = vpop.permute.xlu0 %1206
    %1208 = vset.pattern.permute.xlu0 9
    %1209 = vperm.xlu0 %1208, %v164
    %v1210 = vpop.permute.xlu0 %1209
    %1211 = vset.pattern.permute.xlu0 9
    %1212 = vperm.xlu0 %1211, %v165
    %v1213 = vpop.permute.xlu0 %1212
    %1214 = vset.pattern.permute.xlu0 9
    %1215 = vperm.xlu0 %1214, %v166
    %v1216 = vpop.permute.xlu0 %1215
    %1217 = vset.pattern.permute.xlu0 9
    %1218 = vperm.xlu0 %1217, %v167
    %v1219 = vpop.permute.xlu0 %1218
    %1220 = vset.pattern.permute.xlu0 9
    %1221 = vperm.xlu0 %1220, %v168
    %v1222 = vpop.permute.xlu0 %1221
    %1223 = vset.pattern.permute.xlu0 9
    %1224 = vperm.xlu0 %1223, %v169
    %v1225 = vpop.permute.xlu0 %1224
    %vm1226 = vcmp.eq.s32.totalorder %v1180, %v37
    %vm1227 = vcmp.eq.s32.totalorder %v1183, %v37
    %vm1228 = vcmp.eq.s32.totalorder %v1186, %v37
    %vm1229 = vcmp.eq.s32.totalorder %v1189, %v37
    %vm1230 = vcmp.eq.s32.totalorder %v1192, %v37
    %vm1231 = vcmp.eq.s32.totalorder %v1195, %v37
    %vm1232 = vcmp.eq.s32.totalorder %v1198, %v37
    %vm1233 = vcmp.eq.s32.totalorder %v1201, %v37
    %vm1234 = vcmp.eq.s32.totalorder %v1204, %v37
    %vm1235 = vcmp.eq.s32.totalorder %v1207, %v37
    %vm1236 = vcmp.eq.s32.totalorder %v1210, %v37
    %vm1237 = vcmp.eq.s32.totalorder %v1213, %v37
    %vm1238 = vcmp.eq.s32.totalorder %v1216, %v37
    %vm1239 = vcmp.eq.s32.totalorder %v1219, %v37
    %vm1240 = vcmp.eq.s32.totalorder %v1222, %v37
    %vm1241 = vcmp.eq.s32.totalorder %v1225, %v37
    %v1242 = vsel %vm1226, 1, 0
    %v1243 = vsel %vm1227, 1, 0
    %v1244 = vsel %vm1228, 1, 0
    %v1245 = vsel %vm1229, 1, 0
    %v1246 = vsel %vm1230, 1, 0
    %v1247 = vsel %vm1231, 1, 0
    %v1248 = vsel %vm1232, 1, 0
    %v1249 = vsel %vm1233, 1, 0
    %v1250 = vsel %vm1234, 1, 0
    %v1251 = vsel %vm1235, 1, 0
    %v1252 = vsel %vm1236, 1, 0
    %v1253 = vsel %vm1237, 1, 0
    %v1254 = vsel %vm1238, 1, 0
    %v1255 = vsel %vm1239, 1, 0
    %v1256 = vsel %vm1240, 1, 0
    %v1257 = vsel %vm1241, 1, 0
    %v1258 = vcvt.s32.f32 %v1242
    %v1259 = vcvt.s32.f32 %v1243
    %v1260 = vcvt.s32.f32 %v1244
    %v1261 = vcvt.s32.f32 %v1245
    %v1262 = vcvt.s32.f32 %v1246
    %v1263 = vcvt.s32.f32 %v1247
    %v1264 = vcvt.s32.f32 %v1248
    %v1265 = vcvt.s32.f32 %v1249
    %v1266 = vcvt.s32.f32 %v1250
    %v1267 = vcvt.s32.f32 %v1251
    %v1268 = vcvt.s32.f32 %v1252
    %v1269 = vcvt.s32.f32 %v1253
    %v1270 = vcvt.s32.f32 %v1254
    %v1271 = vcvt.s32.f32 %v1255
    %v1272 = vcvt.s32.f32 %v1256
    %v1273 = vcvt.s32.f32 %v1257
    %v1274 = vadd.f32 %v1162, %v1258
    %v1275 = vadd.f32 %v1163, %v1259
    %v1276 = vadd.f32 %v1164, %v1260
    %v1277 = vadd.f32 %v1165, %v1261
    %v1278 = vadd.f32 %v1166, %v1262
    %v1279 = vadd.f32 %v1167, %v1263
    %v1280 = vadd.f32 %v1168, %v1264
    %v1281 = vadd.f32 %v1169, %v1265
    %v1282 = vadd.f32 %v1170, %v1266
    %v1283 = vadd.f32 %v1171, %v1267
    %v1284 = vadd.f32 %v1172, %v1268
    %v1285 = vadd.f32 %v1173, %v1269
    %v1286 = vadd.f32 %v1174, %v1270
    %v1287 = vadd.f32 %v1175, %v1271
    %v1288 = vadd.f32 %v1176, %v1272
    %v1289 = vadd.f32 %v1177, %v1273
    %1290 = vset.pattern.permute.xlu0 10
    %1291 = vperm.xlu0 %1290, %v154
    %v1292 = vpop.permute.xlu0 %1291
    %1293 = vset.pattern.permute.xlu0 10
    %1294 = vperm.xlu0 %1293, %v155
    %v1295 = vpop.permute.xlu0 %1294
    %1296 = vset.pattern.permute.xlu0 10
    %1297 = vperm.xlu0 %1296, %v156
    %v1298 = vpop.permute.xlu0 %1297
    %1299 = vset.pattern.permute.xlu0 10
    %1300 = vperm.xlu0 %1299, %v157
    %v1301 = vpop.permute.xlu0 %1300
    %1302 = vset.pattern.permute.xlu0 10
    %1303 = vperm.xlu0 %1302, %v158
    %v1304 = vpop.permute.xlu0 %1303
    %1305 = vset.pattern.permute.xlu0 10
    %1306 = vperm.xlu0 %1305, %v159
    %v1307 = vpop.permute.xlu0 %1306
    %1308 = vset.pattern.permute.xlu0 10
    %1309 = vperm.xlu0 %1308, %v160
    %v1310 = vpop.permute.xlu0 %1309
    %1311 = vset.pattern.permute.xlu0 10
    %1312 = vperm.xlu0 %1311, %v161
    %v1313 = vpop.permute.xlu0 %1312
    %1314 = vset.pattern.permute.xlu0 10
    %1315 = vperm.xlu0 %1314, %v162
    %v1316 = vpop.permute.xlu0 %1315
    %1317 = vset.pattern.permute.xlu0 10
    %1318 = vperm.xlu0 %1317, %v163
    %v1319 = vpop.permute.xlu0 %1318
    %1320 = vset.pattern.permute.xlu0 10
    %1321 = vperm.xlu0 %1320, %v164
    %v1322 = vpop.permute.xlu0 %1321
    %1323 = vset.pattern.permute.xlu0 10
    %1324 = vperm.xlu0 %1323, %v165
    %v1325 = vpop.permute.xlu0 %1324
    %1326 = vset.pattern.permute.xlu0 10
    %1327 = vperm.xlu0 %1326, %v166
    %v1328 = vpop.permute.xlu0 %1327
    %1329 = vset.pattern.permute.xlu0 10
    %1330 = vperm.xlu0 %1329, %v167
    %v1331 = vpop.permute.xlu0 %1330
    %1332 = vset.pattern.permute.xlu0 10
    %1333 = vperm.xlu0 %1332, %v168
    %v1334 = vpop.permute.xlu0 %1333
    %1335 = vset.pattern.permute.xlu0 10
    %1336 = vperm.xlu0 %1335, %v169
    %v1337 = vpop.permute.xlu0 %1336
    %vm1338 = vcmp.eq.s32.totalorder %v1292, %v37
    %vm1339 = vcmp.eq.s32.totalorder %v1295, %v37
    %vm1340 = vcmp.eq.s32.totalorder %v1298, %v37
    %vm1341 = vcmp.eq.s32.totalorder %v1301, %v37
    %vm1342 = vcmp.eq.s32.totalorder %v1304, %v37
    %vm1343 = vcmp.eq.s32.totalorder %v1307, %v37
    %vm1344 = vcmp.eq.s32.totalorder %v1310, %v37
    %vm1345 = vcmp.eq.s32.totalorder %v1313, %v37
    %vm1346 = vcmp.eq.s32.totalorder %v1316, %v37
    %vm1347 = vcmp.eq.s32.totalorder %v1319, %v37
    %vm1348 = vcmp.eq.s32.totalorder %v1322, %v37
    %vm1349 = vcmp.eq.s32.totalorder %v1325, %v37
    %vm1350 = vcmp.eq.s32.totalorder %v1328, %v37
    %vm1351 = vcmp.eq.s32.totalorder %v1331, %v37
    %vm1352 = vcmp.eq.s32.totalorder %v1334, %v37
    %vm1353 = vcmp.eq.s32.totalorder %v1337, %v37
    %v1354 = vsel %vm1338, 1, 0
    %v1355 = vsel %vm1339, 1, 0
    %v1356 = vsel %vm1340, 1, 0
    %v1357 = vsel %vm1341, 1, 0
    %v1358 = vsel %vm1342, 1, 0
    %v1359 = vsel %vm1343, 1, 0
    %v1360 = vsel %vm1344, 1, 0
    %v1361 = vsel %vm1345, 1, 0
    %v1362 = vsel %vm1346, 1, 0
    %v1363 = vsel %vm1347, 1, 0
    %v1364 = vsel %vm1348, 1, 0
    %v1365 = vsel %vm1349, 1, 0
    %v1366 = vsel %vm1350, 1, 0
    %v1367 = vsel %vm1351, 1, 0
    %v1368 = vsel %vm1352, 1, 0
    %v1369 = vsel %vm1353, 1, 0
    %v1370 = vcvt.s32.f32 %v1354
    %v1371 = vcvt.s32.f32 %v1355
    %v1372 = vcvt.s32.f32 %v1356
    %v1373 = vcvt.s32.f32 %v1357
    %v1374 = vcvt.s32.f32 %v1358
    %v1375 = vcvt.s32.f32 %v1359
    %v1376 = vcvt.s32.f32 %v1360
    %v1377 = vcvt.s32.f32 %v1361
    %v1378 = vcvt.s32.f32 %v1362
    %v1379 = vcvt.s32.f32 %v1363
    %v1380 = vcvt.s32.f32 %v1364
    %v1381 = vcvt.s32.f32 %v1365
    %v1382 = vcvt.s32.f32 %v1366
    %v1383 = vcvt.s32.f32 %v1367
    %v1384 = vcvt.s32.f32 %v1368
    %v1385 = vcvt.s32.f32 %v1369
    %v1386 = vadd.f32 %v1274, %v1370
    %v1387 = vadd.f32 %v1275, %v1371
    %v1388 = vadd.f32 %v1276, %v1372
    %v1389 = vadd.f32 %v1277, %v1373
    %v1390 = vadd.f32 %v1278, %v1374
    %v1391 = vadd.f32 %v1279, %v1375
    %v1392 = vadd.f32 %v1280, %v1376
    %v1393 = vadd.f32 %v1281, %v1377
    %v1394 = vadd.f32 %v1282, %v1378
    %v1395 = vadd.f32 %v1283, %v1379
    %v1396 = vadd.f32 %v1284, %v1380
    %v1397 = vadd.f32 %v1285, %v1381
    %v1398 = vadd.f32 %v1286, %v1382
    %v1399 = vadd.f32 %v1287, %v1383
    %v1400 = vadd.f32 %v1288, %v1384
    %v1401 = vadd.f32 %v1289, %v1385
    %1402 = vset.pattern.permute.xlu0 11
    %1403 = vperm.xlu0 %1402, %v154
    %v1404 = vpop.permute.xlu0 %1403
    %1405 = vset.pattern.permute.xlu0 11
    %1406 = vperm.xlu0 %1405, %v155
    %v1407 = vpop.permute.xlu0 %1406
    %1408 = vset.pattern.permute.xlu0 11
    %1409 = vperm.xlu0 %1408, %v156
    %v1410 = vpop.permute.xlu0 %1409
    %1411 = vset.pattern.permute.xlu0 11
    %1412 = vperm.xlu0 %1411, %v157
    %v1413 = vpop.permute.xlu0 %1412
    %1414 = vset.pattern.permute.xlu0 11
    %1415 = vperm.xlu0 %1414, %v158
    %v1416 = vpop.permute.xlu0 %1415
    %1417 = vset.pattern.permute.xlu0 11
    %1418 = vperm.xlu0 %1417, %v159
    %v1419 = vpop.permute.xlu0 %1418
    %1420 = vset.pattern.permute.xlu0 11
    %1421 = vperm.xlu0 %1420, %v160
    %v1422 = vpop.permute.xlu0 %1421
    %1423 = vset.pattern.permute.xlu0 11
    %1424 = vperm.xlu0 %1423, %v161
    %v1425 = vpop.permute.xlu0 %1424
    %1426 = vset.pattern.permute.xlu0 11
    %1427 = vperm.xlu0 %1426, %v162
    %v1428 = vpop.permute.xlu0 %1427
    %1429 = vset.pattern.permute.xlu0 11
    %1430 = vperm.xlu0 %1429, %v163
    %v1431 = vpop.permute.xlu0 %1430
    %1432 = vset.pattern.permute.xlu0 11
    %1433 = vperm.xlu0 %1432, %v164
    %v1434 = vpop.permute.xlu0 %1433
    %1435 = vset.pattern.permute.xlu0 11
    %1436 = vperm.xlu0 %1435, %v165
    %v1437 = vpop.permute.xlu0 %1436
    %1438 = vset.pattern.permute.xlu0 11
    %1439 = vperm.xlu0 %1438, %v166
    %v1440 = vpop.permute.xlu0 %1439
    %1441 = vset.pattern.permute.xlu0 11
    %1442 = vperm.xlu0 %1441, %v167
    %v1443 = vpop.permute.xlu0 %1442
    %1444 = vset.pattern.permute.xlu0 11
    %1445 = vperm.xlu0 %1444, %v168
    %v1446 = vpop.permute.xlu0 %1445
    %1447 = vset.pattern.permute.xlu0 11
    %1448 = vperm.xlu0 %1447, %v169
    %v1449 = vpop.permute.xlu0 %1448
    %vm1450 = vcmp.eq.s32.totalorder %v1404, %v37
    %vm1451 = vcmp.eq.s32.totalorder %v1407, %v37
    %vm1452 = vcmp.eq.s32.totalorder %v1410, %v37
    %vm1453 = vcmp.eq.s32.totalorder %v1413, %v37
    %vm1454 = vcmp.eq.s32.totalorder %v1416, %v37
    %vm1455 = vcmp.eq.s32.totalorder %v1419, %v37
    %vm1456 = vcmp.eq.s32.totalorder %v1422, %v37
    %vm1457 = vcmp.eq.s32.totalorder %v1425, %v37
    %vm1458 = vcmp.eq.s32.totalorder %v1428, %v37
    %vm1459 = vcmp.eq.s32.totalorder %v1431, %v37
    %vm1460 = vcmp.eq.s32.totalorder %v1434, %v37
    %vm1461 = vcmp.eq.s32.totalorder %v1437, %v37
    %vm1462 = vcmp.eq.s32.totalorder %v1440, %v37
    %vm1463 = vcmp.eq.s32.totalorder %v1443, %v37
    %vm1464 = vcmp.eq.s32.totalorder %v1446, %v37
    %vm1465 = vcmp.eq.s32.totalorder %v1449, %v37
    %v1466 = vsel %vm1450, 1, 0
    %v1467 = vsel %vm1451, 1, 0
    %v1468 = vsel %vm1452, 1, 0
    %v1469 = vsel %vm1453, 1, 0
    %v1470 = vsel %vm1454, 1, 0
    %v1471 = vsel %vm1455, 1, 0
    %v1472 = vsel %vm1456, 1, 0
    %v1473 = vsel %vm1457, 1, 0
    %v1474 = vsel %vm1458, 1, 0
    %v1475 = vsel %vm1459, 1, 0
    %v1476 = vsel %vm1460, 1, 0
    %v1477 = vsel %vm1461, 1, 0
    %v1478 = vsel %vm1462, 1, 0
    %v1479 = vsel %vm1463, 1, 0
    %v1480 = vsel %vm1464, 1, 0
    %v1481 = vsel %vm1465, 1, 0
    %v1482 = vcvt.s32.f32 %v1466
    %v1483 = vcvt.s32.f32 %v1467
    %v1484 = vcvt.s32.f32 %v1468
    %v1485 = vcvt.s32.f32 %v1469
    %v1486 = vcvt.s32.f32 %v1470
    %v1487 = vcvt.s32.f32 %v1471
    %v1488 = vcvt.s32.f32 %v1472
    %v1489 = vcvt.s32.f32 %v1473
    %v1490 = vcvt.s32.f32 %v1474
    %v1491 = vcvt.s32.f32 %v1475
    %v1492 = vcvt.s32.f32 %v1476
    %v1493 = vcvt.s32.f32 %v1477
    %v1494 = vcvt.s32.f32 %v1478
    %v1495 = vcvt.s32.f32 %v1479
    %v1496 = vcvt.s32.f32 %v1480
    %v1497 = vcvt.s32.f32 %v1481
    %v1498 = vadd.f32 %v1386, %v1482
    %v1499 = vadd.f32 %v1387, %v1483
    %v1500 = vadd.f32 %v1388, %v1484
    %v1501 = vadd.f32 %v1389, %v1485
    %v1502 = vadd.f32 %v1390, %v1486
    %v1503 = vadd.f32 %v1391, %v1487
    %v1504 = vadd.f32 %v1392, %v1488
    %v1505 = vadd.f32 %v1393, %v1489
    %v1506 = vadd.f32 %v1394, %v1490
    %v1507 = vadd.f32 %v1395, %v1491
    %v1508 = vadd.f32 %v1396, %v1492
    %v1509 = vadd.f32 %v1397, %v1493
    %v1510 = vadd.f32 %v1398, %v1494
    %v1511 = vadd.f32 %v1399, %v1495
    %v1512 = vadd.f32 %v1400, %v1496
    %v1513 = vadd.f32 %v1401, %v1497
    %1514 = vset.pattern.permute.xlu0 12
    %1515 = vperm.xlu0 %1514, %v154
    %v1516 = vpop.permute.xlu0 %1515
    %1517 = vset.pattern.permute.xlu0 12
    %1518 = vperm.xlu0 %1517, %v155
    %v1519 = vpop.permute.xlu0 %1518
    %1520 = vset.pattern.permute.xlu0 12
    %1521 = vperm.xlu0 %1520, %v156
    %v1522 = vpop.permute.xlu0 %1521
    %1523 = vset.pattern.permute.xlu0 12
    %1524 = vperm.xlu0 %1523, %v157
    %v1525 = vpop.permute.xlu0 %1524
    %1526 = vset.pattern.permute.xlu0 12
    %1527 = vperm.xlu0 %1526, %v158
    %v1528 = vpop.permute.xlu0 %1527
    %1529 = vset.pattern.permute.xlu0 12
    %1530 = vperm.xlu0 %1529, %v159
    %v1531 = vpop.permute.xlu0 %1530
    %1532 = vset.pattern.permute.xlu0 12
    %1533 = vperm.xlu0 %1532, %v160
    %v1534 = vpop.permute.xlu0 %1533
    %1535 = vset.pattern.permute.xlu0 12
    %1536 = vperm.xlu0 %1535, %v161
    %v1537 = vpop.permute.xlu0 %1536
    %1538 = vset.pattern.permute.xlu0 12
    %1539 = vperm.xlu0 %1538, %v162
    %v1540 = vpop.permute.xlu0 %1539
    %1541 = vset.pattern.permute.xlu0 12
    %1542 = vperm.xlu0 %1541, %v163
    %v1543 = vpop.permute.xlu0 %1542
    %1544 = vset.pattern.permute.xlu0 12
    %1545 = vperm.xlu0 %1544, %v164
    %v1546 = vpop.permute.xlu0 %1545
    %1547 = vset.pattern.permute.xlu0 12
    %1548 = vperm.xlu0 %1547, %v165
    %v1549 = vpop.permute.xlu0 %1548
    %1550 = vset.pattern.permute.xlu0 12
    %1551 = vperm.xlu0 %1550, %v166
    %v1552 = vpop.permute.xlu0 %1551
    %1553 = vset.pattern.permute.xlu0 12
    %1554 = vperm.xlu0 %1553, %v167
    %v1555 = vpop.permute.xlu0 %1554
    %1556 = vset.pattern.permute.xlu0 12
    %1557 = vperm.xlu0 %1556, %v168
    %v1558 = vpop.permute.xlu0 %1557
    %1559 = vset.pattern.permute.xlu0 12
    %1560 = vperm.xlu0 %1559, %v169
    %v1561 = vpop.permute.xlu0 %1560
    %vm1562 = vcmp.eq.s32.totalorder %v1516, %v37
    %vm1563 = vcmp.eq.s32.totalorder %v1519, %v37
    %vm1564 = vcmp.eq.s32.totalorder %v1522, %v37
    %vm1565 = vcmp.eq.s32.totalorder %v1525, %v37
    %vm1566 = vcmp.eq.s32.totalorder %v1528, %v37
    %vm1567 = vcmp.eq.s32.totalorder %v1531, %v37
    %vm1568 = vcmp.eq.s32.totalorder %v1534, %v37
    %vm1569 = vcmp.eq.s32.totalorder %v1537, %v37
    %vm1570 = vcmp.eq.s32.totalorder %v1540, %v37
    %vm1571 = vcmp.eq.s32.totalorder %v1543, %v37
    %vm1572 = vcmp.eq.s32.totalorder %v1546, %v37
    %vm1573 = vcmp.eq.s32.totalorder %v1549, %v37
    %vm1574 = vcmp.eq.s32.totalorder %v1552, %v37
    %vm1575 = vcmp.eq.s32.totalorder %v1555, %v37
    %vm1576 = vcmp.eq.s32.totalorder %v1558, %v37
    %vm1577 = vcmp.eq.s32.totalorder %v1561, %v37
    %v1578 = vsel %vm1562, 1, 0
    %v1579 = vsel %vm1563, 1, 0
    %v1580 = vsel %vm1564, 1, 0
    %v1581 = vsel %vm1565, 1, 0
    %v1582 = vsel %vm1566, 1, 0
    %v1583 = vsel %vm1567, 1, 0
    %v1584 = vsel %vm1568, 1, 0
    %v1585 = vsel %vm1569, 1, 0
    %v1586 = vsel %vm1570, 1, 0
    %v1587 = vsel %vm1571, 1, 0
    %v1588 = vsel %vm1572, 1, 0
    %v1589 = vsel %vm1573, 1, 0
    %v1590 = vsel %vm1574, 1, 0
    %v1591 = vsel %vm1575, 1, 0
    %v1592 = vsel %vm1576, 1, 0
    %v1593 = vsel %vm1577, 1, 0
    %v1594 = vcvt.s32.f32 %v1578
    %v1595 = vcvt.s32.f32 %v1579
    %v1596 = vcvt.s32.f32 %v1580
    %v1597 = vcvt.s32.f32 %v1581
    %v1598 = vcvt.s32.f32 %v1582
    %v1599 = vcvt.s32.f32 %v1583
    %v1600 = vcvt.s32.f32 %v1584
    %v1601 = vcvt.s32.f32 %v1585
    %v1602 = vcvt.s32.f32 %v1586
    %v1603 = vcvt.s32.f32 %v1587
    %v1604 = vcvt.s32.f32 %v1588
    %v1605 = vcvt.s32.f32 %v1589
    %v1606 = vcvt.s32.f32 %v1590
    %v1607 = vcvt.s32.f32 %v1591
    %v1608 = vcvt.s32.f32 %v1592
    %v1609 = vcvt.s32.f32 %v1593
    %v1610 = vadd.f32 %v1498, %v1594
    %v1611 = vadd.f32 %v1499, %v1595
    %v1612 = vadd.f32 %v1500, %v1596
    %v1613 = vadd.f32 %v1501, %v1597
    %v1614 = vadd.f32 %v1502, %v1598
    %v1615 = vadd.f32 %v1503, %v1599
    %v1616 = vadd.f32 %v1504, %v1600
    %v1617 = vadd.f32 %v1505, %v1601
    %v1618 = vadd.f32 %v1506, %v1602
    %v1619 = vadd.f32 %v1507, %v1603
    %v1620 = vadd.f32 %v1508, %v1604
    %v1621 = vadd.f32 %v1509, %v1605
    %v1622 = vadd.f32 %v1510, %v1606
    %v1623 = vadd.f32 %v1511, %v1607
    %v1624 = vadd.f32 %v1512, %v1608
    %v1625 = vadd.f32 %v1513, %v1609
    %1626 = vset.pattern.permute.xlu0 13
    %1627 = vperm.xlu0 %1626, %v154
    %v1628 = vpop.permute.xlu0 %1627
    %1629 = vset.pattern.permute.xlu0 13
    %1630 = vperm.xlu0 %1629, %v155
    %v1631 = vpop.permute.xlu0 %1630
    %1632 = vset.pattern.permute.xlu0 13
    %1633 = vperm.xlu0 %1632, %v156
    %v1634 = vpop.permute.xlu0 %1633
    %1635 = vset.pattern.permute.xlu0 13
    %1636 = vperm.xlu0 %1635, %v157
    %v1637 = vpop.permute.xlu0 %1636
    %1638 = vset.pattern.permute.xlu0 13
    %1639 = vperm.xlu0 %1638, %v158
    %v1640 = vpop.permute.xlu0 %1639
    %1641 = vset.pattern.permute.xlu0 13
    %1642 = vperm.xlu0 %1641, %v159
    %v1643 = vpop.permute.xlu0 %1642
    %1644 = vset.pattern.permute.xlu0 13
    %1645 = vperm.xlu0 %1644, %v160
    %v1646 = vpop.permute.xlu0 %1645
    %1647 = vset.pattern.permute.xlu0 13
    %1648 = vperm.xlu0 %1647, %v161
    %v1649 = vpop.permute.xlu0 %1648
    %1650 = vset.pattern.permute.xlu0 13
    %1651 = vperm.xlu0 %1650, %v162
    %v1652 = vpop.permute.xlu0 %1651
    %1653 = vset.pattern.permute.xlu0 13
    %1654 = vperm.xlu0 %1653, %v163
    %v1655 = vpop.permute.xlu0 %1654
    %1656 = vset.pattern.permute.xlu0 13
    %1657 = vperm.xlu0 %1656, %v164
    %v1658 = vpop.permute.xlu0 %1657
    %1659 = vset.pattern.permute.xlu0 13
    %1660 = vperm.xlu0 %1659, %v165
    %v1661 = vpop.permute.xlu0 %1660
    %1662 = vset.pattern.permute.xlu0 13
    %1663 = vperm.xlu0 %1662, %v166
    %v1664 = vpop.permute.xlu0 %1663
    %1665 = vset.pattern.permute.xlu0 13
    %1666 = vperm.xlu0 %1665, %v167
    %v1667 = vpop.permute.xlu0 %1666
    %1668 = vset.pattern.permute.xlu0 13
    %1669 = vperm.xlu0 %1668, %v168
    %v1670 = vpop.permute.xlu0 %1669
    %1671 = vset.pattern.permute.xlu0 13
    %1672 = vperm.xlu0 %1671, %v169
    %v1673 = vpop.permute.xlu0 %1672
    %vm1674 = vcmp.eq.s32.totalorder %v1628, %v37
    %vm1675 = vcmp.eq.s32.totalorder %v1631, %v37
    %vm1676 = vcmp.eq.s32.totalorder %v1634, %v37
    %vm1677 = vcmp.eq.s32.totalorder %v1637, %v37
    %vm1678 = vcmp.eq.s32.totalorder %v1640, %v37
    %vm1679 = vcmp.eq.s32.totalorder %v1643, %v37
    %vm1680 = vcmp.eq.s32.totalorder %v1646, %v37
    %vm1681 = vcmp.eq.s32.totalorder %v1649, %v37
    %vm1682 = vcmp.eq.s32.totalorder %v1652, %v37
    %vm1683 = vcmp.eq.s32.totalorder %v1655, %v37
    %vm1684 = vcmp.eq.s32.totalorder %v1658, %v37
    %vm1685 = vcmp.eq.s32.totalorder %v1661, %v37
    %vm1686 = vcmp.eq.s32.totalorder %v1664, %v37
    %vm1687 = vcmp.eq.s32.totalorder %v1667, %v37
    %vm1688 = vcmp.eq.s32.totalorder %v1670, %v37
    %vm1689 = vcmp.eq.s32.totalorder %v1673, %v37
    %v1690 = vsel %vm1674, 1, 0
    %v1691 = vsel %vm1675, 1, 0
    %v1692 = vsel %vm1676, 1, 0
    %v1693 = vsel %vm1677, 1, 0
    %v1694 = vsel %vm1678, 1, 0
    %v1695 = vsel %vm1679, 1, 0
    %v1696 = vsel %vm1680, 1, 0
    %v1697 = vsel %vm1681, 1, 0
    %v1698 = vsel %vm1682, 1, 0
    %v1699 = vsel %vm1683, 1, 0
    %v1700 = vsel %vm1684, 1, 0
    %v1701 = vsel %vm1685, 1, 0
    %v1702 = vsel %vm1686, 1, 0
    %v1703 = vsel %vm1687, 1, 0
    %v1704 = vsel %vm1688, 1, 0
    %v1705 = vsel %vm1689, 1, 0
    %v1706 = vcvt.s32.f32 %v1690
    %v1707 = vcvt.s32.f32 %v1691
    %v1708 = vcvt.s32.f32 %v1692
    %v1709 = vcvt.s32.f32 %v1693
    %v1710 = vcvt.s32.f32 %v1694
    %v1711 = vcvt.s32.f32 %v1695
    %v1712 = vcvt.s32.f32 %v1696
    %v1713 = vcvt.s32.f32 %v1697
    %v1714 = vcvt.s32.f32 %v1698
    %v1715 = vcvt.s32.f32 %v1699
    %v1716 = vcvt.s32.f32 %v1700
    %v1717 = vcvt.s32.f32 %v1701
    %v1718 = vcvt.s32.f32 %v1702
    %v1719 = vcvt.s32.f32 %v1703
    %v1720 = vcvt.s32.f32 %v1704
    %v1721 = vcvt.s32.f32 %v1705
    %v1722 = vadd.f32 %v1610, %v1706
    %v1723 = vadd.f32 %v1611, %v1707
    %v1724 = vadd.f32 %v1612, %v1708
    %v1725 = vadd.f32 %v1613, %v1709
    %v1726 = vadd.f32 %v1614, %v1710
    %v1727 = vadd.f32 %v1615, %v1711
    %v1728 = vadd.f32 %v1616, %v1712
    %v1729 = vadd.f32 %v1617, %v1713
    %v1730 = vadd.f32 %v1618, %v1714
    %v1731 = vadd.f32 %v1619, %v1715
    %v1732 = vadd.f32 %v1620, %v1716
    %v1733 = vadd.f32 %v1621, %v1717
    %v1734 = vadd.f32 %v1622, %v1718
    %v1735 = vadd.f32 %v1623, %v1719
    %v1736 = vadd.f32 %v1624, %v1720
    %v1737 = vadd.f32 %v1625, %v1721
    %1738 = vset.pattern.permute.xlu0 14
    %1739 = vperm.xlu0 %1738, %v154
    %v1740 = vpop.permute.xlu0 %1739
    %1741 = vset.pattern.permute.xlu0 14
    %1742 = vperm.xlu0 %1741, %v155
    %v1743 = vpop.permute.xlu0 %1742
    %1744 = vset.pattern.permute.xlu0 14
    %1745 = vperm.xlu0 %1744, %v156
    %v1746 = vpop.permute.xlu0 %1745
    %1747 = vset.pattern.permute.xlu0 14
    %1748 = vperm.xlu0 %1747, %v157
    %v1749 = vpop.permute.xlu0 %1748
    %1750 = vset.pattern.permute.xlu0 14
    %1751 = vperm.xlu0 %1750, %v158
    %v1752 = vpop.permute.xlu0 %1751
    %1753 = vset.pattern.permute.xlu0 14
    %1754 = vperm.xlu0 %1753, %v159
    %v1755 = vpop.permute.xlu0 %1754
    %1756 = vset.pattern.permute.xlu0 14
    %1757 = vperm.xlu0 %1756, %v160
    %v1758 = vpop.permute.xlu0 %1757
    %1759 = vset.pattern.permute.xlu0 14
    %1760 = vperm.xlu0 %1759, %v161
    %v1761 = vpop.permute.xlu0 %1760
    %1762 = vset.pattern.permute.xlu0 14
    %1763 = vperm.xlu0 %1762, %v162
    %v1764 = vpop.permute.xlu0 %1763
    %1765 = vset.pattern.permute.xlu0 14
    %1766 = vperm.xlu0 %1765, %v163
    %v1767 = vpop.permute.xlu0 %1766
    %1768 = vset.pattern.permute.xlu0 14
    %1769 = vperm.xlu0 %1768, %v164
    %v1770 = vpop.permute.xlu0 %1769
    %1771 = vset.pattern.permute.xlu0 14
    %1772 = vperm.xlu0 %1771, %v165
    %v1773 = vpop.permute.xlu0 %1772
    %1774 = vset.pattern.permute.xlu0 14
    %1775 = vperm.xlu0 %1774, %v166
    %v1776 = vpop.permute.xlu0 %1775
    %1777 = vset.pattern.permute.xlu0 14
    %1778 = vperm.xlu0 %1777, %v167
    %v1779 = vpop.permute.xlu0 %1778
    %1780 = vset.pattern.permute.xlu0 14
    %1781 = vperm.xlu0 %1780, %v168
    %v1782 = vpop.permute.xlu0 %1781
    %1783 = vset.pattern.permute.xlu0 14
    %1784 = vperm.xlu0 %1783, %v169
    %v1785 = vpop.permute.xlu0 %1784
    %vm1786 = vcmp.eq.s32.totalorder %v1740, %v37
    %vm1787 = vcmp.eq.s32.totalorder %v1743, %v37
    %vm1788 = vcmp.eq.s32.totalorder %v1746, %v37
    %vm1789 = vcmp.eq.s32.totalorder %v1749, %v37
    %vm1790 = vcmp.eq.s32.totalorder %v1752, %v37
    %vm1791 = vcmp.eq.s32.totalorder %v1755, %v37
    %vm1792 = vcmp.eq.s32.totalorder %v1758, %v37
    %vm1793 = vcmp.eq.s32.totalorder %v1761, %v37
    %vm1794 = vcmp.eq.s32.totalorder %v1764, %v37
    %vm1795 = vcmp.eq.s32.totalorder %v1767, %v37
    %vm1796 = vcmp.eq.s32.totalorder %v1770, %v37
    %vm1797 = vcmp.eq.s32.totalorder %v1773, %v37
    %vm1798 = vcmp.eq.s32.totalorder %v1776, %v37
    %vm1799 = vcmp.eq.s32.totalorder %v1779, %v37
    %vm1800 = vcmp.eq.s32.totalorder %v1782, %v37
    %vm1801 = vcmp.eq.s32.totalorder %v1785, %v37
    %v1802 = vsel %vm1786, 1, 0
    %v1803 = vsel %vm1787, 1, 0
    %v1804 = vsel %vm1788, 1, 0
    %v1805 = vsel %vm1789, 1, 0
    %v1806 = vsel %vm1790, 1, 0
    %v1807 = vsel %vm1791, 1, 0
    %v1808 = vsel %vm1792, 1, 0
    %v1809 = vsel %vm1793, 1, 0
    %v1810 = vsel %vm1794, 1, 0
    %v1811 = vsel %vm1795, 1, 0
    %v1812 = vsel %vm1796, 1, 0
    %v1813 = vsel %vm1797, 1, 0
    %v1814 = vsel %vm1798, 1, 0
    %v1815 = vsel %vm1799, 1, 0
    %v1816 = vsel %vm1800, 1, 0
    %v1817 = vsel %vm1801, 1, 0
    %v1818 = vcvt.s32.f32 %v1802
    %v1819 = vcvt.s32.f32 %v1803
    %v1820 = vcvt.s32.f32 %v1804
    %v1821 = vcvt.s32.f32 %v1805
    %v1822 = vcvt.s32.f32 %v1806
    %v1823 = vcvt.s32.f32 %v1807
    %v1824 = vcvt.s32.f32 %v1808
    %v1825 = vcvt.s32.f32 %v1809
    %v1826 = vcvt.s32.f32 %v1810
    %v1827 = vcvt.s32.f32 %v1811
    %v1828 = vcvt.s32.f32 %v1812
    %v1829 = vcvt.s32.f32 %v1813
    %v1830 = vcvt.s32.f32 %v1814
    %v1831 = vcvt.s32.f32 %v1815
    %v1832 = vcvt.s32.f32 %v1816
    %v1833 = vcvt.s32.f32 %v1817
    %v1834 = vadd.f32 %v1722, %v1818
    %v1835 = vadd.f32 %v1723, %v1819
    %v1836 = vadd.f32 %v1724, %v1820
    %v1837 = vadd.f32 %v1725, %v1821
    %v1838 = vadd.f32 %v1726, %v1822
    %v1839 = vadd.f32 %v1727, %v1823
    %v1840 = vadd.f32 %v1728, %v1824
    %v1841 = vadd.f32 %v1729, %v1825
    %v1842 = vadd.f32 %v1730, %v1826
    %v1843 = vadd.f32 %v1731, %v1827
    %v1844 = vadd.f32 %v1732, %v1828
    %v1845 = vadd.f32 %v1733, %v1829
    %v1846 = vadd.f32 %v1734, %v1830
    %v1847 = vadd.f32 %v1735, %v1831
    %v1848 = vadd.f32 %v1736, %v1832
    %v1849 = vadd.f32 %v1737, %v1833
    %1850 = vset.pattern.permute.xlu0 15
    %1851 = vperm.xlu0 %1850, %v154
    %v1852 = vpop.permute.xlu0 %1851
    %1853 = vset.pattern.permute.xlu0 15
    %1854 = vperm.xlu0 %1853, %v155
    %v1855 = vpop.permute.xlu0 %1854
    %1856 = vset.pattern.permute.xlu0 15
    %1857 = vperm.xlu0 %1856, %v156
    %v1858 = vpop.permute.xlu0 %1857
    %1859 = vset.pattern.permute.xlu0 15
    %1860 = vperm.xlu0 %1859, %v157
    %v1861 = vpop.permute.xlu0 %1860
    %1862 = vset.pattern.permute.xlu0 15
    %1863 = vperm.xlu0 %1862, %v158
    %v1864 = vpop.permute.xlu0 %1863
    %1865 = vset.pattern.permute.xlu0 15
    %1866 = vperm.xlu0 %1865, %v159
    %v1867 = vpop.permute.xlu0 %1866
    %1868 = vset.pattern.permute.xlu0 15
    %1869 = vperm.xlu0 %1868, %v160
    %v1870 = vpop.permute.xlu0 %1869
    %1871 = vset.pattern.permute.xlu0 15
    %1872 = vperm.xlu0 %1871, %v161
    %v1873 = vpop.permute.xlu0 %1872
    %1874 = vset.pattern.permute.xlu0 15
    %1875 = vperm.xlu0 %1874, %v162
    %v1876 = vpop.permute.xlu0 %1875
    %1877 = vset.pattern.permute.xlu0 15
    %1878 = vperm.xlu0 %1877, %v163
    %v1879 = vpop.permute.xlu0 %1878
    %1880 = vset.pattern.permute.xlu0 15
    %1881 = vperm.xlu0 %1880, %v164
    %v1882 = vpop.permute.xlu0 %1881
    %1883 = vset.pattern.permute.xlu0 15
    %1884 = vperm.xlu0 %1883, %v165
    %v1885 = vpop.permute.xlu0 %1884
    %1886 = vset.pattern.permute.xlu0 15
    %1887 = vperm.xlu0 %1886, %v166
    %v1888 = vpop.permute.xlu0 %1887
    %1889 = vset.pattern.permute.xlu0 15
    %1890 = vperm.xlu0 %1889, %v167
    %v1891 = vpop.permute.xlu0 %1890
    %1892 = vset.pattern.permute.xlu0 15
    %1893 = vperm.xlu0 %1892, %v168
    %v1894 = vpop.permute.xlu0 %1893
    %1895 = vset.pattern.permute.xlu0 15
    %1896 = vperm.xlu0 %1895, %v169
    %v1897 = vpop.permute.xlu0 %1896
    %vm1898 = vcmp.eq.s32.totalorder %v1852, %v37
    %vm1899 = vcmp.eq.s32.totalorder %v1855, %v37
    %vm1900 = vcmp.eq.s32.totalorder %v1858, %v37
    %vm1901 = vcmp.eq.s32.totalorder %v1861, %v37
    %vm1902 = vcmp.eq.s32.totalorder %v1864, %v37
    %vm1903 = vcmp.eq.s32.totalorder %v1867, %v37
    %vm1904 = vcmp.eq.s32.totalorder %v1870, %v37
    %vm1905 = vcmp.eq.s32.totalorder %v1873, %v37
    %vm1906 = vcmp.eq.s32.totalorder %v1876, %v37
    %vm1907 = vcmp.eq.s32.totalorder %v1879, %v37
    %vm1908 = vcmp.eq.s32.totalorder %v1882, %v37
    %vm1909 = vcmp.eq.s32.totalorder %v1885, %v37
    %vm1910 = vcmp.eq.s32.totalorder %v1888, %v37
    %vm1911 = vcmp.eq.s32.totalorder %v1891, %v37
    %vm1912 = vcmp.eq.s32.totalorder %v1894, %v37
    %vm1913 = vcmp.eq.s32.totalorder %v1897, %v37
    %v1914 = vsel %vm1898, 1, 0
    %v1915 = vsel %vm1899, 1, 0
    %v1916 = vsel %vm1900, 1, 0
    %v1917 = vsel %vm1901, 1, 0
    %v1918 = vsel %vm1902, 1, 0
    %v1919 = vsel %vm1903, 1, 0
    %v1920 = vsel %vm1904, 1, 0
    %v1921 = vsel %vm1905, 1, 0
    %v1922 = vsel %vm1906, 1, 0
    %v1923 = vsel %vm1907, 1, 0
    %v1924 = vsel %vm1908, 1, 0
    %v1925 = vsel %vm1909, 1, 0
    %v1926 = vsel %vm1910, 1, 0
    %v1927 = vsel %vm1911, 1, 0
    %v1928 = vsel %vm1912, 1, 0
    %v1929 = vsel %vm1913, 1, 0
    %v1930 = vcvt.s32.f32 %v1914
    %v1931 = vcvt.s32.f32 %v1915
    %v1932 = vcvt.s32.f32 %v1916
    %v1933 = vcvt.s32.f32 %v1917
    %v1934 = vcvt.s32.f32 %v1918
    %v1935 = vcvt.s32.f32 %v1919
    %v1936 = vcvt.s32.f32 %v1920
    %v1937 = vcvt.s32.f32 %v1921
    %v1938 = vcvt.s32.f32 %v1922
    %v1939 = vcvt.s32.f32 %v1923
    %v1940 = vcvt.s32.f32 %v1924
    %v1941 = vcvt.s32.f32 %v1925
    %v1942 = vcvt.s32.f32 %v1926
    %v1943 = vcvt.s32.f32 %v1927
    %v1944 = vcvt.s32.f32 %v1928
    %v1945 = vcvt.s32.f32 %v1929
    %v1946 = vadd.f32 %v1834, %v1930
    %v1947 = vadd.f32 %v1835, %v1931
    %v1948 = vadd.f32 %v1836, %v1932
    %v1949 = vadd.f32 %v1837, %v1933
    %v1950 = vadd.f32 %v1838, %v1934
    %v1951 = vadd.f32 %v1839, %v1935
    %v1952 = vadd.f32 %v1840, %v1936
    %v1953 = vadd.f32 %v1841, %v1937
    %v1954 = vadd.f32 %v1842, %v1938
    %v1955 = vadd.f32 %v1843, %v1939
    %v1956 = vadd.f32 %v1844, %v1940
    %v1957 = vadd.f32 %v1845, %v1941
    %v1958 = vadd.f32 %v1846, %v1942
    %v1959 = vadd.f32 %v1847, %v1943
    %v1960 = vadd.f32 %v1848, %v1944
    %v1961 = vadd.f32 %v1849, %v1945
    %1962 = vset.pattern.permute.xlu0 16
    %1963 = vperm.xlu0 %1962, %v154
    %v1964 = vpop.permute.xlu0 %1963
    %1965 = vset.pattern.permute.xlu0 16
    %1966 = vperm.xlu0 %1965, %v155
    %v1967 = vpop.permute.xlu0 %1966
    %1968 = vset.pattern.permute.xlu0 16
    %1969 = vperm.xlu0 %1968, %v156
    %v1970 = vpop.permute.xlu0 %1969
    %1971 = vset.pattern.permute.xlu0 16
    %1972 = vperm.xlu0 %1971, %v157
    %v1973 = vpop.permute.xlu0 %1972
    %1974 = vset.pattern.permute.xlu0 16
    %1975 = vperm.xlu0 %1974, %v158
    %v1976 = vpop.permute.xlu0 %1975
    %1977 = vset.pattern.permute.xlu0 16
    %1978 = vperm.xlu0 %1977, %v159
    %v1979 = vpop.permute.xlu0 %1978
    %1980 = vset.pattern.permute.xlu0 16
    %1981 = vperm.xlu0 %1980, %v160
    %v1982 = vpop.permute.xlu0 %1981
    %1983 = vset.pattern.permute.xlu0 16
    %1984 = vperm.xlu0 %1983, %v161
    %v1985 = vpop.permute.xlu0 %1984
    %1986 = vset.pattern.permute.xlu0 16
    %1987 = vperm.xlu0 %1986, %v162
    %v1988 = vpop.permute.xlu0 %1987
    %1989 = vset.pattern.permute.xlu0 16
    %1990 = vperm.xlu0 %1989, %v163
    %v1991 = vpop.permute.xlu0 %1990
    %1992 = vset.pattern.permute.xlu0 16
    %1993 = vperm.xlu0 %1992, %v164
    %v1994 = vpop.permute.xlu0 %1993
    %1995 = vset.pattern.permute.xlu0 16
    %1996 = vperm.xlu0 %1995, %v165
    %v1997 = vpop.permute.xlu0 %1996
    %1998 = vset.pattern.permute.xlu0 16
    %1999 = vperm.xlu0 %1998, %v166
    %v2000 = vpop.permute.xlu0 %1999
    %2001 = vset.pattern.permute.xlu0 16
    %2002 = vperm.xlu0 %2001, %v167
    %v2003 = vpop.permute.xlu0 %2002
    %2004 = vset.pattern.permute.xlu0 16
    %2005 = vperm.xlu0 %2004, %v168
    %v2006 = vpop.permute.xlu0 %2005
    %2007 = vset.pattern.permute.xlu0 16
    %2008 = vperm.xlu0 %2007, %v169
    %v2009 = vpop.permute.xlu0 %2008
    %vm2010 = vcmp.eq.s32.totalorder %v1964, %v37
    %vm2011 = vcmp.eq.s32.totalorder %v1967, %v37
    %vm2012 = vcmp.eq.s32.totalorder %v1970, %v37
    %vm2013 = vcmp.eq.s32.totalorder %v1973, %v37
    %vm2014 = vcmp.eq.s32.totalorder %v1976, %v37
    %vm2015 = vcmp.eq.s32.totalorder %v1979, %v37
    %vm2016 = vcmp.eq.s32.totalorder %v1982, %v37
    %vm2017 = vcmp.eq.s32.totalorder %v1985, %v37
    %vm2018 = vcmp.eq.s32.totalorder %v1988, %v37
    %vm2019 = vcmp.eq.s32.totalorder %v1991, %v37
    %vm2020 = vcmp.eq.s32.totalorder %v1994, %v37
    %vm2021 = vcmp.eq.s32.totalorder %v1997, %v37
    %vm2022 = vcmp.eq.s32.totalorder %v2000, %v37
    %vm2023 = vcmp.eq.s32.totalorder %v2003, %v37
    %vm2024 = vcmp.eq.s32.totalorder %v2006, %v37
    %vm2025 = vcmp.eq.s32.totalorder %v2009, %v37
    %v2026 = vsel %vm2010, 1, 0
    %v2027 = vsel %vm2011, 1, 0
    %v2028 = vsel %vm2012, 1, 0
    %v2029 = vsel %vm2013, 1, 0
    %v2030 = vsel %vm2014, 1, 0
    %v2031 = vsel %vm2015, 1, 0
    %v2032 = vsel %vm2016, 1, 0
    %v2033 = vsel %vm2017, 1, 0
    %v2034 = vsel %vm2018, 1, 0
    %v2035 = vsel %vm2019, 1, 0
    %v2036 = vsel %vm2020, 1, 0
    %v2037 = vsel %vm2021, 1, 0
    %v2038 = vsel %vm2022, 1, 0
    %v2039 = vsel %vm2023, 1, 0
    %v2040 = vsel %vm2024, 1, 0
    %v2041 = vsel %vm2025, 1, 0
    %v2042 = vcvt.s32.f32 %v2026
    %v2043 = vcvt.s32.f32 %v2027
    %v2044 = vcvt.s32.f32 %v2028
    %v2045 = vcvt.s32.f32 %v2029
    %v2046 = vcvt.s32.f32 %v2030
    %v2047 = vcvt.s32.f32 %v2031
    %v2048 = vcvt.s32.f32 %v2032
    %v2049 = vcvt.s32.f32 %v2033
    %v2050 = vcvt.s32.f32 %v2034
    %v2051 = vcvt.s32.f32 %v2035
    %v2052 = vcvt.s32.f32 %v2036
    %v2053 = vcvt.s32.f32 %v2037
    %v2054 = vcvt.s32.f32 %v2038
    %v2055 = vcvt.s32.f32 %v2039
    %v2056 = vcvt.s32.f32 %v2040
    %v2057 = vcvt.s32.f32 %v2041
    %v2058 = vadd.f32 %v1946, %v2042
    %v2059 = vadd.f32 %v1947, %v2043
    %v2060 = vadd.f32 %v1948, %v2044
    %v2061 = vadd.f32 %v1949, %v2045
    %v2062 = vadd.f32 %v1950, %v2046
    %v2063 = vadd.f32 %v1951, %v2047
    %v2064 = vadd.f32 %v1952, %v2048
    %v2065 = vadd.f32 %v1953, %v2049
    %v2066 = vadd.f32 %v1954, %v2050
    %v2067 = vadd.f32 %v1955, %v2051
    %v2068 = vadd.f32 %v1956, %v2052
    %v2069 = vadd.f32 %v1957, %v2053
    %v2070 = vadd.f32 %v1958, %v2054
    %v2071 = vadd.f32 %v1959, %v2055
    %v2072 = vadd.f32 %v1960, %v2056
    %v2073 = vadd.f32 %v1961, %v2057
    %2074 = vset.pattern.permute.xlu0 17
    %2075 = vperm.xlu0 %2074, %v154
    %v2076 = vpop.permute.xlu0 %2075
    %2077 = vset.pattern.permute.xlu0 17
    %2078 = vperm.xlu0 %2077, %v155
    %v2079 = vpop.permute.xlu0 %2078
    %2080 = vset.pattern.permute.xlu0 17
    %2081 = vperm.xlu0 %2080, %v156
    %v2082 = vpop.permute.xlu0 %2081
    %2083 = vset.pattern.permute.xlu0 17
    %2084 = vperm.xlu0 %2083, %v157
    %v2085 = vpop.permute.xlu0 %2084
    %2086 = vset.pattern.permute.xlu0 17
    %2087 = vperm.xlu0 %2086, %v158
    %v2088 = vpop.permute.xlu0 %2087
    %2089 = vset.pattern.permute.xlu0 17
    %2090 = vperm.xlu0 %2089, %v159
    %v2091 = vpop.permute.xlu0 %2090
    %2092 = vset.pattern.permute.xlu0 17
    %2093 = vperm.xlu0 %2092, %v160
    %v2094 = vpop.permute.xlu0 %2093
    %2095 = vset.pattern.permute.xlu0 17
    %2096 = vperm.xlu0 %2095, %v161
    %v2097 = vpop.permute.xlu0 %2096
    %2098 = vset.pattern.permute.xlu0 17
    %2099 = vperm.xlu0 %2098, %v162
    %v2100 = vpop.permute.xlu0 %2099
    %2101 = vset.pattern.permute.xlu0 17
    %2102 = vperm.xlu0 %2101, %v163
    %v2103 = vpop.permute.xlu0 %2102
    %2104 = vset.pattern.permute.xlu0 17
    %2105 = vperm.xlu0 %2104, %v164
    %v2106 = vpop.permute.xlu0 %2105
    %2107 = vset.pattern.permute.xlu0 17
    %2108 = vperm.xlu0 %2107, %v165
    %v2109 = vpop.permute.xlu0 %2108
    %2110 = vset.pattern.permute.xlu0 17
    %2111 = vperm.xlu0 %2110, %v166
    %v2112 = vpop.permute.xlu0 %2111
    %2113 = vset.pattern.permute.xlu0 17
    %2114 = vperm.xlu0 %2113, %v167
    %v2115 = vpop.permute.xlu0 %2114
    %2116 = vset.pattern.permute.xlu0 17
    %2117 = vperm.xlu0 %2116, %v168
    %v2118 = vpop.permute.xlu0 %2117
    %2119 = vset.pattern.permute.xlu0 17
    %2120 = vperm.xlu0 %2119, %v169
    %v2121 = vpop.permute.xlu0 %2120
    %vm2122 = vcmp.eq.s32.totalorder %v2076, %v37
    %vm2123 = vcmp.eq.s32.totalorder %v2079, %v37
    %vm2124 = vcmp.eq.s32.totalorder %v2082, %v37
    %vm2125 = vcmp.eq.s32.totalorder %v2085, %v37
    %vm2126 = vcmp.eq.s32.totalorder %v2088, %v37
    %vm2127 = vcmp.eq.s32.totalorder %v2091, %v37
    %vm2128 = vcmp.eq.s32.totalorder %v2094, %v37
    %vm2129 = vcmp.eq.s32.totalorder %v2097, %v37
    %vm2130 = vcmp.eq.s32.totalorder %v2100, %v37
    %vm2131 = vcmp.eq.s32.totalorder %v2103, %v37
    %vm2132 = vcmp.eq.s32.totalorder %v2106, %v37
    %vm2133 = vcmp.eq.s32.totalorder %v2109, %v37
    %vm2134 = vcmp.eq.s32.totalorder %v2112, %v37
    %vm2135 = vcmp.eq.s32.totalorder %v2115, %v37
    %vm2136 = vcmp.eq.s32.totalorder %v2118, %v37
    %vm2137 = vcmp.eq.s32.totalorder %v2121, %v37
    %v2138 = vsel %vm2122, 1, 0
    %v2139 = vsel %vm2123, 1, 0
    %v2140 = vsel %vm2124, 1, 0
    %v2141 = vsel %vm2125, 1, 0
    %v2142 = vsel %vm2126, 1, 0
    %v2143 = vsel %vm2127, 1, 0
    %v2144 = vsel %vm2128, 1, 0
    %v2145 = vsel %vm2129, 1, 0
    %v2146 = vsel %vm2130, 1, 0
    %v2147 = vsel %vm2131, 1, 0
    %v2148 = vsel %vm2132, 1, 0
    %v2149 = vsel %vm2133, 1, 0
    %v2150 = vsel %vm2134, 1, 0
    %v2151 = vsel %vm2135, 1, 0
    %v2152 = vsel %vm2136, 1, 0
    %v2153 = vsel %vm2137, 1, 0
    %v2154 = vcvt.s32.f32 %v2138
    %v2155 = vcvt.s32.f32 %v2139
    %v2156 = vcvt.s32.f32 %v2140
    %v2157 = vcvt.s32.f32 %v2141
    %v2158 = vcvt.s32.f32 %v2142
    %v2159 = vcvt.s32.f32 %v2143
    %v2160 = vcvt.s32.f32 %v2144
    %v2161 = vcvt.s32.f32 %v2145
    %v2162 = vcvt.s32.f32 %v2146
    %v2163 = vcvt.s32.f32 %v2147
    %v2164 = vcvt.s32.f32 %v2148
    %v2165 = vcvt.s32.f32 %v2149
    %v2166 = vcvt.s32.f32 %v2150
    %v2167 = vcvt.s32.f32 %v2151
    %v2168 = vcvt.s32.f32 %v2152
    %v2169 = vcvt.s32.f32 %v2153
    %v2170 = vadd.f32 %v2058, %v2154
    %v2171 = vadd.f32 %v2059, %v2155
    %v2172 = vadd.f32 %v2060, %v2156
    %v2173 = vadd.f32 %v2061, %v2157
    %v2174 = vadd.f32 %v2062, %v2158
    %v2175 = vadd.f32 %v2063, %v2159
    %v2176 = vadd.f32 %v2064, %v2160
    %v2177 = vadd.f32 %v2065, %v2161
    %v2178 = vadd.f32 %v2066, %v2162
    %v2179 = vadd.f32 %v2067, %v2163
    %v2180 = vadd.f32 %v2068, %v2164
    %v2181 = vadd.f32 %v2069, %v2165
    %v2182 = vadd.f32 %v2070, %v2166
    %v2183 = vadd.f32 %v2071, %v2167
    %v2184 = vadd.f32 %v2072, %v2168
    %v2185 = vadd.f32 %v2073, %v2169
    %2186 = vset.pattern.permute.xlu0 18
    %2187 = vperm.xlu0 %2186, %v154
    %v2188 = vpop.permute.xlu0 %2187
    %2189 = vset.pattern.permute.xlu0 18
    %2190 = vperm.xlu0 %2189, %v155
    %v2191 = vpop.permute.xlu0 %2190
    %2192 = vset.pattern.permute.xlu0 18
    %2193 = vperm.xlu0 %2192, %v156
    %v2194 = vpop.permute.xlu0 %2193
    %2195 = vset.pattern.permute.xlu0 18
    %2196 = vperm.xlu0 %2195, %v157
    %v2197 = vpop.permute.xlu0 %2196
    %2198 = vset.pattern.permute.xlu0 18
    %2199 = vperm.xlu0 %2198, %v158
    %v2200 = vpop.permute.xlu0 %2199
    %2201 = vset.pattern.permute.xlu0 18
    %2202 = vperm.xlu0 %2201, %v159
    %v2203 = vpop.permute.xlu0 %2202
    %2204 = vset.pattern.permute.xlu0 18
    %2205 = vperm.xlu0 %2204, %v160
    %v2206 = vpop.permute.xlu0 %2205
    %2207 = vset.pattern.permute.xlu0 18
    %2208 = vperm.xlu0 %2207, %v161
    %v2209 = vpop.permute.xlu0 %2208
    %2210 = vset.pattern.permute.xlu0 18
    %2211 = vperm.xlu0 %2210, %v162
    %v2212 = vpop.permute.xlu0 %2211
    %2213 = vset.pattern.permute.xlu0 18
    %2214 = vperm.xlu0 %2213, %v163
    %v2215 = vpop.permute.xlu0 %2214
    %2216 = vset.pattern.permute.xlu0 18
    %2217 = vperm.xlu0 %2216, %v164
    %v2218 = vpop.permute.xlu0 %2217
    %2219 = vset.pattern.permute.xlu0 18
    %2220 = vperm.xlu0 %2219, %v165
    %v2221 = vpop.permute.xlu0 %2220
    %2222 = vset.pattern.permute.xlu0 18
    %2223 = vperm.xlu0 %2222, %v166
    %v2224 = vpop.permute.xlu0 %2223
    %2225 = vset.pattern.permute.xlu0 18
    %2226 = vperm.xlu0 %2225, %v167
    %v2227 = vpop.permute.xlu0 %2226
    %2228 = vset.pattern.permute.xlu0 18
    %2229 = vperm.xlu0 %2228, %v168
    %v2230 = vpop.permute.xlu0 %2229
    %2231 = vset.pattern.permute.xlu0 18
    %2232 = vperm.xlu0 %2231, %v169
    %v2233 = vpop.permute.xlu0 %2232
    %vm2234 = vcmp.eq.s32.totalorder %v2188, %v37
    %vm2235 = vcmp.eq.s32.totalorder %v2191, %v37
    %vm2236 = vcmp.eq.s32.totalorder %v2194, %v37
    %vm2237 = vcmp.eq.s32.totalorder %v2197, %v37
    %vm2238 = vcmp.eq.s32.totalorder %v2200, %v37
    %vm2239 = vcmp.eq.s32.totalorder %v2203, %v37
    %vm2240 = vcmp.eq.s32.totalorder %v2206, %v37
    %vm2241 = vcmp.eq.s32.totalorder %v2209, %v37
    %vm2242 = vcmp.eq.s32.totalorder %v2212, %v37
    %vm2243 = vcmp.eq.s32.totalorder %v2215, %v37
    %vm2244 = vcmp.eq.s32.totalorder %v2218, %v37
    %vm2245 = vcmp.eq.s32.totalorder %v2221, %v37
    %vm2246 = vcmp.eq.s32.totalorder %v2224, %v37
    %vm2247 = vcmp.eq.s32.totalorder %v2227, %v37
    %vm2248 = vcmp.eq.s32.totalorder %v2230, %v37
    %vm2249 = vcmp.eq.s32.totalorder %v2233, %v37
    %v2250 = vsel %vm2234, 1, 0
    %v2251 = vsel %vm2235, 1, 0
    %v2252 = vsel %vm2236, 1, 0
    %v2253 = vsel %vm2237, 1, 0
    %v2254 = vsel %vm2238, 1, 0
    %v2255 = vsel %vm2239, 1, 0
    %v2256 = vsel %vm2240, 1, 0
    %v2257 = vsel %vm2241, 1, 0
    %v2258 = vsel %vm2242, 1, 0
    %v2259 = vsel %vm2243, 1, 0
    %v2260 = vsel %vm2244, 1, 0
    %v2261 = vsel %vm2245, 1, 0
    %v2262 = vsel %vm2246, 1, 0
    %v2263 = vsel %vm2247, 1, 0
    %v2264 = vsel %vm2248, 1, 0
    %v2265 = vsel %vm2249, 1, 0
    %v2266 = vcvt.s32.f32 %v2250
    %v2267 = vcvt.s32.f32 %v2251
    %v2268 = vcvt.s32.f32 %v2252
    %v2269 = vcvt.s32.f32 %v2253
    %v2270 = vcvt.s32.f32 %v2254
    %v2271 = vcvt.s32.f32 %v2255
    %v2272 = vcvt.s32.f32 %v2256
    %v2273 = vcvt.s32.f32 %v2257
    %v2274 = vcvt.s32.f32 %v2258
    %v2275 = vcvt.s32.f32 %v2259
    %v2276 = vcvt.s32.f32 %v2260
    %v2277 = vcvt.s32.f32 %v2261
    %v2278 = vcvt.s32.f32 %v2262
    %v2279 = vcvt.s32.f32 %v2263
    %v2280 = vcvt.s32.f32 %v2264
    %v2281 = vcvt.s32.f32 %v2265
    %v2282 = vadd.f32 %v2170, %v2266
    %v2283 = vadd.f32 %v2171, %v2267
    %v2284 = vadd.f32 %v2172, %v2268
    %v2285 = vadd.f32 %v2173, %v2269
    %v2286 = vadd.f32 %v2174, %v2270
    %v2287 = vadd.f32 %v2175, %v2271
    %v2288 = vadd.f32 %v2176, %v2272
    %v2289 = vadd.f32 %v2177, %v2273
    %v2290 = vadd.f32 %v2178, %v2274
    %v2291 = vadd.f32 %v2179, %v2275
    %v2292 = vadd.f32 %v2180, %v2276
    %v2293 = vadd.f32 %v2181, %v2277
    %v2294 = vadd.f32 %v2182, %v2278
    %v2295 = vadd.f32 %v2183, %v2279
    %v2296 = vadd.f32 %v2184, %v2280
    %v2297 = vadd.f32 %v2185, %v2281
    %2298 = vset.pattern.permute.xlu0 19
    %2299 = vperm.xlu0 %2298, %v154
    %v2300 = vpop.permute.xlu0 %2299
    %2301 = vset.pattern.permute.xlu0 19
    %2302 = vperm.xlu0 %2301, %v155
    %v2303 = vpop.permute.xlu0 %2302
    %2304 = vset.pattern.permute.xlu0 19
    %2305 = vperm.xlu0 %2304, %v156
    %v2306 = vpop.permute.xlu0 %2305
    %2307 = vset.pattern.permute.xlu0 19
    %2308 = vperm.xlu0 %2307, %v157
    %v2309 = vpop.permute.xlu0 %2308
    %2310 = vset.pattern.permute.xlu0 19
    %2311 = vperm.xlu0 %2310, %v158
    %v2312 = vpop.permute.xlu0 %2311
    %2313 = vset.pattern.permute.xlu0 19
    %2314 = vperm.xlu0 %2313, %v159
    %v2315 = vpop.permute.xlu0 %2314
    %2316 = vset.pattern.permute.xlu0 19
    %2317 = vperm.xlu0 %2316, %v160
    %v2318 = vpop.permute.xlu0 %2317
    %2319 = vset.pattern.permute.xlu0 19
    %2320 = vperm.xlu0 %2319, %v161
    %v2321 = vpop.permute.xlu0 %2320
    %2322 = vset.pattern.permute.xlu0 19
    %2323 = vperm.xlu0 %2322, %v162
    %v2324 = vpop.permute.xlu0 %2323
    %2325 = vset.pattern.permute.xlu0 19
    %2326 = vperm.xlu0 %2325, %v163
    %v2327 = vpop.permute.xlu0 %2326
    %2328 = vset.pattern.permute.xlu0 19
    %2329 = vperm.xlu0 %2328, %v164
    %v2330 = vpop.permute.xlu0 %2329
    %2331 = vset.pattern.permute.xlu0 19
    %2332 = vperm.xlu0 %2331, %v165
    %v2333 = vpop.permute.xlu0 %2332
    %2334 = vset.pattern.permute.xlu0 19
    %2335 = vperm.xlu0 %2334, %v166
    %v2336 = vpop.permute.xlu0 %2335
    %2337 = vset.pattern.permute.xlu0 19
    %2338 = vperm.xlu0 %2337, %v167
    %v2339 = vpop.permute.xlu0 %2338
    %2340 = vset.pattern.permute.xlu0 19
    %2341 = vperm.xlu0 %2340, %v168
    %v2342 = vpop.permute.xlu0 %2341
    %2343 = vset.pattern.permute.xlu0 19
    %2344 = vperm.xlu0 %2343, %v169
    %v2345 = vpop.permute.xlu0 %2344
    %vm2346 = vcmp.eq.s32.totalorder %v2300, %v37
    %vm2347 = vcmp.eq.s32.totalorder %v2303, %v37
    %vm2348 = vcmp.eq.s32.totalorder %v2306, %v37
    %vm2349 = vcmp.eq.s32.totalorder %v2309, %v37
    %vm2350 = vcmp.eq.s32.totalorder %v2312, %v37
    %vm2351 = vcmp.eq.s32.totalorder %v2315, %v37
    %vm2352 = vcmp.eq.s32.totalorder %v2318, %v37
    %vm2353 = vcmp.eq.s32.totalorder %v2321, %v37
    %vm2354 = vcmp.eq.s32.totalorder %v2324, %v37
    %vm2355 = vcmp.eq.s32.totalorder %v2327, %v37
    %vm2356 = vcmp.eq.s32.totalorder %v2330, %v37
    %vm2357 = vcmp.eq.s32.totalorder %v2333, %v37
    %vm2358 = vcmp.eq.s32.totalorder %v2336, %v37
    %vm2359 = vcmp.eq.s32.totalorder %v2339, %v37
    %vm2360 = vcmp.eq.s32.totalorder %v2342, %v37
    %vm2361 = vcmp.eq.s32.totalorder %v2345, %v37
    %v2362 = vsel %vm2346, 1, 0
    %v2363 = vsel %vm2347, 1, 0
    %v2364 = vsel %vm2348, 1, 0
    %v2365 = vsel %vm2349, 1, 0
    %v2366 = vsel %vm2350, 1, 0
    %v2367 = vsel %vm2351, 1, 0
    %v2368 = vsel %vm2352, 1, 0
    %v2369 = vsel %vm2353, 1, 0
    %v2370 = vsel %vm2354, 1, 0
    %v2371 = vsel %vm2355, 1, 0
    %v2372 = vsel %vm2356, 1, 0
    %v2373 = vsel %vm2357, 1, 0
    %v2374 = vsel %vm2358, 1, 0
    %v2375 = vsel %vm2359, 1, 0
    %v2376 = vsel %vm2360, 1, 0
    %v2377 = vsel %vm2361, 1, 0
    %v2378 = vcvt.s32.f32 %v2362
    %v2379 = vcvt.s32.f32 %v2363
    %v2380 = vcvt.s32.f32 %v2364
    %v2381 = vcvt.s32.f32 %v2365
    %v2382 = vcvt.s32.f32 %v2366
    %v2383 = vcvt.s32.f32 %v2367
    %v2384 = vcvt.s32.f32 %v2368
    %v2385 = vcvt.s32.f32 %v2369
    %v2386 = vcvt.s32.f32 %v2370
    %v2387 = vcvt.s32.f32 %v2371
    %v2388 = vcvt.s32.f32 %v2372
    %v2389 = vcvt.s32.f32 %v2373
    %v2390 = vcvt.s32.f32 %v2374
    %v2391 = vcvt.s32.f32 %v2375
    %v2392 = vcvt.s32.f32 %v2376
    %v2393 = vcvt.s32.f32 %v2377
    %v2394 = vadd.f32 %v2282, %v2378
    %v2395 = vadd.f32 %v2283, %v2379
    %v2396 = vadd.f32 %v2284, %v2380
    %v2397 = vadd.f32 %v2285, %v2381
    %v2398 = vadd.f32 %v2286, %v2382
    %v2399 = vadd.f32 %v2287, %v2383
    %v2400 = vadd.f32 %v2288, %v2384
    %v2401 = vadd.f32 %v2289, %v2385
    %v2402 = vadd.f32 %v2290, %v2386
    %v2403 = vadd.f32 %v2291, %v2387
    %v2404 = vadd.f32 %v2292, %v2388
    %v2405 = vadd.f32 %v2293, %v2389
    %v2406 = vadd.f32 %v2294, %v2390
    %v2407 = vadd.f32 %v2295, %v2391
    %v2408 = vadd.f32 %v2296, %v2392
    %v2409 = vadd.f32 %v2297, %v2393
    %2410 = vset.pattern.permute.xlu0 20
    %2411 = vperm.xlu0 %2410, %v154
    %v2412 = vpop.permute.xlu0 %2411
    %2413 = vset.pattern.permute.xlu0 20
    %2414 = vperm.xlu0 %2413, %v155
    %v2415 = vpop.permute.xlu0 %2414
    %2416 = vset.pattern.permute.xlu0 20
    %2417 = vperm.xlu0 %2416, %v156
    %v2418 = vpop.permute.xlu0 %2417
    %2419 = vset.pattern.permute.xlu0 20
    %2420 = vperm.xlu0 %2419, %v157
    %v2421 = vpop.permute.xlu0 %2420
    %2422 = vset.pattern.permute.xlu0 20
    %2423 = vperm.xlu0 %2422, %v158
    %v2424 = vpop.permute.xlu0 %2423
    %2425 = vset.pattern.permute.xlu0 20
    %2426 = vperm.xlu0 %2425, %v159
    %v2427 = vpop.permute.xlu0 %2426
    %2428 = vset.pattern.permute.xlu0 20
    %2429 = vperm.xlu0 %2428, %v160
    %v2430 = vpop.permute.xlu0 %2429
    %2431 = vset.pattern.permute.xlu0 20
    %2432 = vperm.xlu0 %2431, %v161
    %v2433 = vpop.permute.xlu0 %2432
    %2434 = vset.pattern.permute.xlu0 20
    %2435 = vperm.xlu0 %2434, %v162
    %v2436 = vpop.permute.xlu0 %2435
    %2437 = vset.pattern.permute.xlu0 20
    %2438 = vperm.xlu0 %2437, %v163
    %v2439 = vpop.permute.xlu0 %2438
    %2440 = vset.pattern.permute.xlu0 20
    %2441 = vperm.xlu0 %2440, %v164
    %v2442 = vpop.permute.xlu0 %2441
    %2443 = vset.pattern.permute.xlu0 20
    %2444 = vperm.xlu0 %2443, %v165
    %v2445 = vpop.permute.xlu0 %2444
    %2446 = vset.pattern.permute.xlu0 20
    %2447 = vperm.xlu0 %2446, %v166
    %v2448 = vpop.permute.xlu0 %2447
    %2449 = vset.pattern.permute.xlu0 20
    %2450 = vperm.xlu0 %2449, %v167
    %v2451 = vpop.permute.xlu0 %2450
    %2452 = vset.pattern.permute.xlu0 20
    %2453 = vperm.xlu0 %2452, %v168
    %v2454 = vpop.permute.xlu0 %2453
    %2455 = vset.pattern.permute.xlu0 20
    %2456 = vperm.xlu0 %2455, %v169
    %v2457 = vpop.permute.xlu0 %2456
    %vm2458 = vcmp.eq.s32.totalorder %v2412, %v37
    %vm2459 = vcmp.eq.s32.totalorder %v2415, %v37
    %vm2460 = vcmp.eq.s32.totalorder %v2418, %v37
    %vm2461 = vcmp.eq.s32.totalorder %v2421, %v37
    %vm2462 = vcmp.eq.s32.totalorder %v2424, %v37
    %vm2463 = vcmp.eq.s32.totalorder %v2427, %v37
    %vm2464 = vcmp.eq.s32.totalorder %v2430, %v37
    %vm2465 = vcmp.eq.s32.totalorder %v2433, %v37
    %vm2466 = vcmp.eq.s32.totalorder %v2436, %v37
    %vm2467 = vcmp.eq.s32.totalorder %v2439, %v37
    %vm2468 = vcmp.eq.s32.totalorder %v2442, %v37
    %vm2469 = vcmp.eq.s32.totalorder %v2445, %v37
    %vm2470 = vcmp.eq.s32.totalorder %v2448, %v37
    %vm2471 = vcmp.eq.s32.totalorder %v2451, %v37
    %vm2472 = vcmp.eq.s32.totalorder %v2454, %v37
    %vm2473 = vcmp.eq.s32.totalorder %v2457, %v37
    %v2474 = vsel %vm2458, 1, 0
    %v2475 = vsel %vm2459, 1, 0
    %v2476 = vsel %vm2460, 1, 0
    %v2477 = vsel %vm2461, 1, 0
    %v2478 = vsel %vm2462, 1, 0
    %v2479 = vsel %vm2463, 1, 0
    %v2480 = vsel %vm2464, 1, 0
    %v2481 = vsel %vm2465, 1, 0
    %v2482 = vsel %vm2466, 1, 0
    %v2483 = vsel %vm2467, 1, 0
    %v2484 = vsel %vm2468, 1, 0
    %v2485 = vsel %vm2469, 1, 0
    %v2486 = vsel %vm2470, 1, 0
    %v2487 = vsel %vm2471, 1, 0
    %v2488 = vsel %vm2472, 1, 0
    %v2489 = vsel %vm2473, 1, 0
    %v2490 = vcvt.s32.f32 %v2474
    %v2491 = vcvt.s32.f32 %v2475
    %v2492 = vcvt.s32.f32 %v2476
    %v2493 = vcvt.s32.f32 %v2477
    %v2494 = vcvt.s32.f32 %v2478
    %v2495 = vcvt.s32.f32 %v2479
    %v2496 = vcvt.s32.f32 %v2480
    %v2497 = vcvt.s32.f32 %v2481
    %v2498 = vcvt.s32.f32 %v2482
    %v2499 = vcvt.s32.f32 %v2483
    %v2500 = vcvt.s32.f32 %v2484
    %v2501 = vcvt.s32.f32 %v2485
    %v2502 = vcvt.s32.f32 %v2486
    %v2503 = vcvt.s32.f32 %v2487
    %v2504 = vcvt.s32.f32 %v2488
    %v2505 = vcvt.s32.f32 %v2489
    %v2506 = vadd.f32 %v2394, %v2490
    %v2507 = vadd.f32 %v2395, %v2491
    %v2508 = vadd.f32 %v2396, %v2492
    %v2509 = vadd.f32 %v2397, %v2493
    %v2510 = vadd.f32 %v2398, %v2494
    %v2511 = vadd.f32 %v2399, %v2495
    %v2512 = vadd.f32 %v2400, %v2496
    %v2513 = vadd.f32 %v2401, %v2497
    %v2514 = vadd.f32 %v2402, %v2498
    %v2515 = vadd.f32 %v2403, %v2499
    %v2516 = vadd.f32 %v2404, %v2500
    %v2517 = vadd.f32 %v2405, %v2501
    %v2518 = vadd.f32 %v2406, %v2502
    %v2519 = vadd.f32 %v2407, %v2503
    %v2520 = vadd.f32 %v2408, %v2504
    %v2521 = vadd.f32 %v2409, %v2505
    %2522 = vset.pattern.permute.xlu0 21
    %2523 = vperm.xlu0 %2522, %v154
    %v2524 = vpop.permute.xlu0 %2523
    %2525 = vset.pattern.permute.xlu0 21
    %2526 = vperm.xlu0 %2525, %v155
    %v2527 = vpop.permute.xlu0 %2526
    %2528 = vset.pattern.permute.xlu0 21
    %2529 = vperm.xlu0 %2528, %v156
    %v2530 = vpop.permute.xlu0 %2529
    %2531 = vset.pattern.permute.xlu0 21
    %2532 = vperm.xlu0 %2531, %v157
    %v2533 = vpop.permute.xlu0 %2532
    %2534 = vset.pattern.permute.xlu0 21
    %2535 = vperm.xlu0 %2534, %v158
    %v2536 = vpop.permute.xlu0 %2535
    %2537 = vset.pattern.permute.xlu0 21
    %2538 = vperm.xlu0 %2537, %v159
    %v2539 = vpop.permute.xlu0 %2538
    %2540 = vset.pattern.permute.xlu0 21
    %2541 = vperm.xlu0 %2540, %v160
    %v2542 = vpop.permute.xlu0 %2541
    %2543 = vset.pattern.permute.xlu0 21
    %2544 = vperm.xlu0 %2543, %v161
    %v2545 = vpop.permute.xlu0 %2544
    %2546 = vset.pattern.permute.xlu0 21
    %2547 = vperm.xlu0 %2546, %v162
    %v2548 = vpop.permute.xlu0 %2547
    %2549 = vset.pattern.permute.xlu0 21
    %2550 = vperm.xlu0 %2549, %v163
    %v2551 = vpop.permute.xlu0 %2550
    %2552 = vset.pattern.permute.xlu0 21
    %2553 = vperm.xlu0 %2552, %v164
    %v2554 = vpop.permute.xlu0 %2553
    %2555 = vset.pattern.permute.xlu0 21
    %2556 = vperm.xlu0 %2555, %v165
    %v2557 = vpop.permute.xlu0 %2556
    %2558 = vset.pattern.permute.xlu0 21
    %2559 = vperm.xlu0 %2558, %v166
    %v2560 = vpop.permute.xlu0 %2559
    %2561 = vset.pattern.permute.xlu0 21
    %2562 = vperm.xlu0 %2561, %v167
    %v2563 = vpop.permute.xlu0 %2562
    %2564 = vset.pattern.permute.xlu0 21
    %2565 = vperm.xlu0 %2564, %v168
    %v2566 = vpop.permute.xlu0 %2565
    %2567 = vset.pattern.permute.xlu0 21
    %2568 = vperm.xlu0 %2567, %v169
    %v2569 = vpop.permute.xlu0 %2568
    %vm2570 = vcmp.eq.s32.totalorder %v2524, %v37
    %vm2571 = vcmp.eq.s32.totalorder %v2527, %v37
    %vm2572 = vcmp.eq.s32.totalorder %v2530, %v37
    %vm2573 = vcmp.eq.s32.totalorder %v2533, %v37
    %vm2574 = vcmp.eq.s32.totalorder %v2536, %v37
    %vm2575 = vcmp.eq.s32.totalorder %v2539, %v37
    %vm2576 = vcmp.eq.s32.totalorder %v2542, %v37
    %vm2577 = vcmp.eq.s32.totalorder %v2545, %v37
    %vm2578 = vcmp.eq.s32.totalorder %v2548, %v37
    %vm2579 = vcmp.eq.s32.totalorder %v2551, %v37
    %vm2580 = vcmp.eq.s32.totalorder %v2554, %v37
    %vm2581 = vcmp.eq.s32.totalorder %v2557, %v37
    %vm2582 = vcmp.eq.s32.totalorder %v2560, %v37
    %vm2583 = vcmp.eq.s32.totalorder %v2563, %v37
    %vm2584 = vcmp.eq.s32.totalorder %v2566, %v37
    %vm2585 = vcmp.eq.s32.totalorder %v2569, %v37
    %v2586 = vsel %vm2570, 1, 0
    %v2587 = vsel %vm2571, 1, 0
    %v2588 = vsel %vm2572, 1, 0
    %v2589 = vsel %vm2573, 1, 0
    %v2590 = vsel %vm2574, 1, 0
    %v2591 = vsel %vm2575, 1, 0
    %v2592 = vsel %vm2576, 1, 0
    %v2593 = vsel %vm2577, 1, 0
    %v2594 = vsel %vm2578, 1, 0
    %v2595 = vsel %vm2579, 1, 0
    %v2596 = vsel %vm2580, 1, 0
    %v2597 = vsel %vm2581, 1, 0
    %v2598 = vsel %vm2582, 1, 0
    %v2599 = vsel %vm2583, 1, 0
    %v2600 = vsel %vm2584, 1, 0
    %v2601 = vsel %vm2585, 1, 0
    %v2602 = vcvt.s32.f32 %v2586
    %v2603 = vcvt.s32.f32 %v2587
    %v2604 = vcvt.s32.f32 %v2588
    %v2605 = vcvt.s32.f32 %v2589
    %v2606 = vcvt.s32.f32 %v2590
    %v2607 = vcvt.s32.f32 %v2591
    %v2608 = vcvt.s32.f32 %v2592
    %v2609 = vcvt.s32.f32 %v2593
    %v2610 = vcvt.s32.f32 %v2594
    %v2611 = vcvt.s32.f32 %v2595
    %v2612 = vcvt.s32.f32 %v2596
    %v2613 = vcvt.s32.f32 %v2597
    %v2614 = vcvt.s32.f32 %v2598
    %v2615 = vcvt.s32.f32 %v2599
    %v2616 = vcvt.s32.f32 %v2600
    %v2617 = vcvt.s32.f32 %v2601
    %v2618 = vadd.f32 %v2506, %v2602
    %v2619 = vadd.f32 %v2507, %v2603
    %v2620 = vadd.f32 %v2508, %v2604
    %v2621 = vadd.f32 %v2509, %v2605
    %v2622 = vadd.f32 %v2510, %v2606
    %v2623 = vadd.f32 %v2511, %v2607
    %v2624 = vadd.f32 %v2512, %v2608
    %v2625 = vadd.f32 %v2513, %v2609
    %v2626 = vadd.f32 %v2514, %v2610
    %v2627 = vadd.f32 %v2515, %v2611
    %v2628 = vadd.f32 %v2516, %v2612
    %v2629 = vadd.f32 %v2517, %v2613
    %v2630 = vadd.f32 %v2518, %v2614
    %v2631 = vadd.f32 %v2519, %v2615
    %v2632 = vadd.f32 %v2520, %v2616
    %v2633 = vadd.f32 %v2521, %v2617
    %2634 = vset.pattern.permute.xlu0 22
    %2635 = vperm.xlu0 %2634, %v154
    %v2636 = vpop.permute.xlu0 %2635
    %2637 = vset.pattern.permute.xlu0 22
    %2638 = vperm.xlu0 %2637, %v155
    %v2639 = vpop.permute.xlu0 %2638
    %2640 = vset.pattern.permute.xlu0 22
    %2641 = vperm.xlu0 %2640, %v156
    %v2642 = vpop.permute.xlu0 %2641
    %2643 = vset.pattern.permute.xlu0 22
    %2644 = vperm.xlu0 %2643, %v157
    %v2645 = vpop.permute.xlu0 %2644
    %2646 = vset.pattern.permute.xlu0 22
    %2647 = vperm.xlu0 %2646, %v158
    %v2648 = vpop.permute.xlu0 %2647
    %2649 = vset.pattern.permute.xlu0 22
    %2650 = vperm.xlu0 %2649, %v159
    %v2651 = vpop.permute.xlu0 %2650
    %2652 = vset.pattern.permute.xlu0 22
    %2653 = vperm.xlu0 %2652, %v160
    %v2654 = vpop.permute.xlu0 %2653
    %2655 = vset.pattern.permute.xlu0 22
    %2656 = vperm.xlu0 %2655, %v161
    %v2657 = vpop.permute.xlu0 %2656
    %2658 = vset.pattern.permute.xlu0 22
    %2659 = vperm.xlu0 %2658, %v162
    %v2660 = vpop.permute.xlu0 %2659
    %2661 = vset.pattern.permute.xlu0 22
    %2662 = vperm.xlu0 %2661, %v163
    %v2663 = vpop.permute.xlu0 %2662
    %2664 = vset.pattern.permute.xlu0 22
    %2665 = vperm.xlu0 %2664, %v164
    %v2666 = vpop.permute.xlu0 %2665
    %2667 = vset.pattern.permute.xlu0 22
    %2668 = vperm.xlu0 %2667, %v165
    %v2669 = vpop.permute.xlu0 %2668
    %2670 = vset.pattern.permute.xlu0 22
    %2671 = vperm.xlu0 %2670, %v166
    %v2672 = vpop.permute.xlu0 %2671
    %2673 = vset.pattern.permute.xlu0 22
    %2674 = vperm.xlu0 %2673, %v167
    %v2675 = vpop.permute.xlu0 %2674
    %2676 = vset.pattern.permute.xlu0 22
    %2677 = vperm.xlu0 %2676, %v168
    %v2678 = vpop.permute.xlu0 %2677
    %2679 = vset.pattern.permute.xlu0 22
    %2680 = vperm.xlu0 %2679, %v169
    %v2681 = vpop.permute.xlu0 %2680
    %vm2682 = vcmp.eq.s32.totalorder %v2636, %v37
    %vm2683 = vcmp.eq.s32.totalorder %v2639, %v37
    %vm2684 = vcmp.eq.s32.totalorder %v2642, %v37
    %vm2685 = vcmp.eq.s32.totalorder %v2645, %v37
    %vm2686 = vcmp.eq.s32.totalorder %v2648, %v37
    %vm2687 = vcmp.eq.s32.totalorder %v2651, %v37
    %vm2688 = vcmp.eq.s32.totalorder %v2654, %v37
    %vm2689 = vcmp.eq.s32.totalorder %v2657, %v37
    %vm2690 = vcmp.eq.s32.totalorder %v2660, %v37
    %vm2691 = vcmp.eq.s32.totalorder %v2663, %v37
    %vm2692 = vcmp.eq.s32.totalorder %v2666, %v37
    %vm2693 = vcmp.eq.s32.totalorder %v2669, %v37
    %vm2694 = vcmp.eq.s32.totalorder %v2672, %v37
    %vm2695 = vcmp.eq.s32.totalorder %v2675, %v37
    %vm2696 = vcmp.eq.s32.totalorder %v2678, %v37
    %vm2697 = vcmp.eq.s32.totalorder %v2681, %v37
    %v2698 = vsel %vm2682, 1, 0
    %v2699 = vsel %vm2683, 1, 0
    %v2700 = vsel %vm2684, 1, 0
    %v2701 = vsel %vm2685, 1, 0
    %v2702 = vsel %vm2686, 1, 0
    %v2703 = vsel %vm2687, 1, 0
    %v2704 = vsel %vm2688, 1, 0
    %v2705 = vsel %vm2689, 1, 0
    %v2706 = vsel %vm2690, 1, 0
    %v2707 = vsel %vm2691, 1, 0
    %v2708 = vsel %vm2692, 1, 0
    %v2709 = vsel %vm2693, 1, 0
    %v2710 = vsel %vm2694, 1, 0
    %v2711 = vsel %vm2695, 1, 0
    %v2712 = vsel %vm2696, 1, 0
    %v2713 = vsel %vm2697, 1, 0
    %v2714 = vcvt.s32.f32 %v2698
    %v2715 = vcvt.s32.f32 %v2699
    %v2716 = vcvt.s32.f32 %v2700
    %v2717 = vcvt.s32.f32 %v2701
    %v2718 = vcvt.s32.f32 %v2702
    %v2719 = vcvt.s32.f32 %v2703
    %v2720 = vcvt.s32.f32 %v2704
    %v2721 = vcvt.s32.f32 %v2705
    %v2722 = vcvt.s32.f32 %v2706
    %v2723 = vcvt.s32.f32 %v2707
    %v2724 = vcvt.s32.f32 %v2708
    %v2725 = vcvt.s32.f32 %v2709
    %v2726 = vcvt.s32.f32 %v2710
    %v2727 = vcvt.s32.f32 %v2711
    %v2728 = vcvt.s32.f32 %v2712
    %v2729 = vcvt.s32.f32 %v2713
    %v2730 = vadd.f32 %v2618, %v2714
    %v2731 = vadd.f32 %v2619, %v2715
    %v2732 = vadd.f32 %v2620, %v2716
    %v2733 = vadd.f32 %v2621, %v2717
    %v2734 = vadd.f32 %v2622, %v2718
    %v2735 = vadd.f32 %v2623, %v2719
    %v2736 = vadd.f32 %v2624, %v2720
    %v2737 = vadd.f32 %v2625, %v2721
    %v2738 = vadd.f32 %v2626, %v2722
    %v2739 = vadd.f32 %v2627, %v2723
    %v2740 = vadd.f32 %v2628, %v2724
    %v2741 = vadd.f32 %v2629, %v2725
    %v2742 = vadd.f32 %v2630, %v2726
    %v2743 = vadd.f32 %v2631, %v2727
    %v2744 = vadd.f32 %v2632, %v2728
    %v2745 = vadd.f32 %v2633, %v2729
    %2746 = vset.pattern.permute.xlu0 23
    %2747 = vperm.xlu0 %2746, %v154
    %v2748 = vpop.permute.xlu0 %2747
    %2749 = vset.pattern.permute.xlu0 23
    %2750 = vperm.xlu0 %2749, %v155
    %v2751 = vpop.permute.xlu0 %2750
    %2752 = vset.pattern.permute.xlu0 23
    %2753 = vperm.xlu0 %2752, %v156
    %v2754 = vpop.permute.xlu0 %2753
    %2755 = vset.pattern.permute.xlu0 23
    %2756 = vperm.xlu0 %2755, %v157
    %v2757 = vpop.permute.xlu0 %2756
    %2758 = vset.pattern.permute.xlu0 23
    %2759 = vperm.xlu0 %2758, %v158
    %v2760 = vpop.permute.xlu0 %2759
    %2761 = vset.pattern.permute.xlu0 23
    %2762 = vperm.xlu0 %2761, %v159
    %v2763 = vpop.permute.xlu0 %2762
    %2764 = vset.pattern.permute.xlu0 23
    %2765 = vperm.xlu0 %2764, %v160
    %v2766 = vpop.permute.xlu0 %2765
    %2767 = vset.pattern.permute.xlu0 23
    %2768 = vperm.xlu0 %2767, %v161
    %v2769 = vpop.permute.xlu0 %2768
    %2770 = vset.pattern.permute.xlu0 23
    %2771 = vperm.xlu0 %2770, %v162
    %v2772 = vpop.permute.xlu0 %2771
    %2773 = vset.pattern.permute.xlu0 23
    %2774 = vperm.xlu0 %2773, %v163
    %v2775 = vpop.permute.xlu0 %2774
    %2776 = vset.pattern.permute.xlu0 23
    %2777 = vperm.xlu0 %2776, %v164
    %v2778 = vpop.permute.xlu0 %2777
    %2779 = vset.pattern.permute.xlu0 23
    %2780 = vperm.xlu0 %2779, %v165
    %v2781 = vpop.permute.xlu0 %2780
    %2782 = vset.pattern.permute.xlu0 23
    %2783 = vperm.xlu0 %2782, %v166
    %v2784 = vpop.permute.xlu0 %2783
    %2785 = vset.pattern.permute.xlu0 23
    %2786 = vperm.xlu0 %2785, %v167
    %v2787 = vpop.permute.xlu0 %2786
    %2788 = vset.pattern.permute.xlu0 23
    %2789 = vperm.xlu0 %2788, %v168
    %v2790 = vpop.permute.xlu0 %2789
    %2791 = vset.pattern.permute.xlu0 23
    %2792 = vperm.xlu0 %2791, %v169
    %v2793 = vpop.permute.xlu0 %2792
    %vm2794 = vcmp.eq.s32.totalorder %v2748, %v37
    %vm2795 = vcmp.eq.s32.totalorder %v2751, %v37
    %vm2796 = vcmp.eq.s32.totalorder %v2754, %v37
    %vm2797 = vcmp.eq.s32.totalorder %v2757, %v37
    %vm2798 = vcmp.eq.s32.totalorder %v2760, %v37
    %vm2799 = vcmp.eq.s32.totalorder %v2763, %v37
    %vm2800 = vcmp.eq.s32.totalorder %v2766, %v37
    %vm2801 = vcmp.eq.s32.totalorder %v2769, %v37
    %vm2802 = vcmp.eq.s32.totalorder %v2772, %v37
    %vm2803 = vcmp.eq.s32.totalorder %v2775, %v37
    %vm2804 = vcmp.eq.s32.totalorder %v2778, %v37
    %vm2805 = vcmp.eq.s32.totalorder %v2781, %v37
    %vm2806 = vcmp.eq.s32.totalorder %v2784, %v37
    %vm2807 = vcmp.eq.s32.totalorder %v2787, %v37
    %vm2808 = vcmp.eq.s32.totalorder %v2790, %v37
    %vm2809 = vcmp.eq.s32.totalorder %v2793, %v37
    %v2810 = vsel %vm2794, 1, 0
    %v2811 = vsel %vm2795, 1, 0
    %v2812 = vsel %vm2796, 1, 0
    %v2813 = vsel %vm2797, 1, 0
    %v2814 = vsel %vm2798, 1, 0
    %v2815 = vsel %vm2799, 1, 0
    %v2816 = vsel %vm2800, 1, 0
    %v2817 = vsel %vm2801, 1, 0
    %v2818 = vsel %vm2802, 1, 0
    %v2819 = vsel %vm2803, 1, 0
    %v2820 = vsel %vm2804, 1, 0
    %v2821 = vsel %vm2805, 1, 0
    %v2822 = vsel %vm2806, 1, 0
    %v2823 = vsel %vm2807, 1, 0
    %v2824 = vsel %vm2808, 1, 0
    %v2825 = vsel %vm2809, 1, 0
    %v2826 = vcvt.s32.f32 %v2810
    %v2827 = vcvt.s32.f32 %v2811
    %v2828 = vcvt.s32.f32 %v2812
    %v2829 = vcvt.s32.f32 %v2813
    %v2830 = vcvt.s32.f32 %v2814
    %v2831 = vcvt.s32.f32 %v2815
    %v2832 = vcvt.s32.f32 %v2816
    %v2833 = vcvt.s32.f32 %v2817
    %v2834 = vcvt.s32.f32 %v2818
    %v2835 = vcvt.s32.f32 %v2819
    %v2836 = vcvt.s32.f32 %v2820
    %v2837 = vcvt.s32.f32 %v2821
    %v2838 = vcvt.s32.f32 %v2822
    %v2839 = vcvt.s32.f32 %v2823
    %v2840 = vcvt.s32.f32 %v2824
    %v2841 = vcvt.s32.f32 %v2825
    %v2842 = vadd.f32 %v2730, %v2826
    %v2843 = vadd.f32 %v2731, %v2827
    %v2844 = vadd.f32 %v2732, %v2828
    %v2845 = vadd.f32 %v2733, %v2829
    %v2846 = vadd.f32 %v2734, %v2830
    %v2847 = vadd.f32 %v2735, %v2831
    %v2848 = vadd.f32 %v2736, %v2832
    %v2849 = vadd.f32 %v2737, %v2833
    %v2850 = vadd.f32 %v2738, %v2834
    %v2851 = vadd.f32 %v2739, %v2835
    %v2852 = vadd.f32 %v2740, %v2836
    %v2853 = vadd.f32 %v2741, %v2837
    %v2854 = vadd.f32 %v2742, %v2838
    %v2855 = vadd.f32 %v2743, %v2839
    %v2856 = vadd.f32 %v2744, %v2840
    %v2857 = vadd.f32 %v2745, %v2841
    %2858 = vset.pattern.permute.xlu0 24
    %2859 = vperm.xlu0 %2858, %v154
    %v2860 = vpop.permute.xlu0 %2859
    %2861 = vset.pattern.permute.xlu0 24
    %2862 = vperm.xlu0 %2861, %v155
    %v2863 = vpop.permute.xlu0 %2862
    %2864 = vset.pattern.permute.xlu0 24
    %2865 = vperm.xlu0 %2864, %v156
    %v2866 = vpop.permute.xlu0 %2865
    %2867 = vset.pattern.permute.xlu0 24
    %2868 = vperm.xlu0 %2867, %v157
    %v2869 = vpop.permute.xlu0 %2868
    %2870 = vset.pattern.permute.xlu0 24
    %2871 = vperm.xlu0 %2870, %v158
    %v2872 = vpop.permute.xlu0 %2871
    %2873 = vset.pattern.permute.xlu0 24
    %2874 = vperm.xlu0 %2873, %v159
    %v2875 = vpop.permute.xlu0 %2874
    %2876 = vset.pattern.permute.xlu0 24
    %2877 = vperm.xlu0 %2876, %v160
    %v2878 = vpop.permute.xlu0 %2877
    %2879 = vset.pattern.permute.xlu0 24
    %2880 = vperm.xlu0 %2879, %v161
    %v2881 = vpop.permute.xlu0 %2880
    %2882 = vset.pattern.permute.xlu0 24
    %2883 = vperm.xlu0 %2882, %v162
    %v2884 = vpop.permute.xlu0 %2883
    %2885 = vset.pattern.permute.xlu0 24
    %2886 = vperm.xlu0 %2885, %v163
    %v2887 = vpop.permute.xlu0 %2886
    %2888 = vset.pattern.permute.xlu0 24
    %2889 = vperm.xlu0 %2888, %v164
    %v2890 = vpop.permute.xlu0 %2889
    %2891 = vset.pattern.permute.xlu0 24
    %2892 = vperm.xlu0 %2891, %v165
    %v2893 = vpop.permute.xlu0 %2892
    %2894 = vset.pattern.permute.xlu0 24
    %2895 = vperm.xlu0 %2894, %v166
    %v2896 = vpop.permute.xlu0 %2895
    %2897 = vset.pattern.permute.xlu0 24
    %2898 = vperm.xlu0 %2897, %v167
    %v2899 = vpop.permute.xlu0 %2898
    %2900 = vset.pattern.permute.xlu0 24
    %2901 = vperm.xlu0 %2900, %v168
    %v2902 = vpop.permute.xlu0 %2901
    %2903 = vset.pattern.permute.xlu0 24
    %2904 = vperm.xlu0 %2903, %v169
    %v2905 = vpop.permute.xlu0 %2904
    %vm2906 = vcmp.eq.s32.totalorder %v2860, %v37
    %vm2907 = vcmp.eq.s32.totalorder %v2863, %v37
    %vm2908 = vcmp.eq.s32.totalorder %v2866, %v37
    %vm2909 = vcmp.eq.s32.totalorder %v2869, %v37
    %vm2910 = vcmp.eq.s32.totalorder %v2872, %v37
    %vm2911 = vcmp.eq.s32.totalorder %v2875, %v37
    %vm2912 = vcmp.eq.s32.totalorder %v2878, %v37
    %vm2913 = vcmp.eq.s32.totalorder %v2881, %v37
    %vm2914 = vcmp.eq.s32.totalorder %v2884, %v37
    %vm2915 = vcmp.eq.s32.totalorder %v2887, %v37
    %vm2916 = vcmp.eq.s32.totalorder %v2890, %v37
    %vm2917 = vcmp.eq.s32.totalorder %v2893, %v37
    %vm2918 = vcmp.eq.s32.totalorder %v2896, %v37
    %vm2919 = vcmp.eq.s32.totalorder %v2899, %v37
    %vm2920 = vcmp.eq.s32.totalorder %v2902, %v37
    %vm2921 = vcmp.eq.s32.totalorder %v2905, %v37
    %v2922 = vsel %vm2906, 1, 0
    %v2923 = vsel %vm2907, 1, 0
    %v2924 = vsel %vm2908, 1, 0
    %v2925 = vsel %vm2909, 1, 0
    %v2926 = vsel %vm2910, 1, 0
    %v2927 = vsel %vm2911, 1, 0
    %v2928 = vsel %vm2912, 1, 0
    %v2929 = vsel %vm2913, 1, 0
    %v2930 = vsel %vm2914, 1, 0
    %v2931 = vsel %vm2915, 1, 0
    %v2932 = vsel %vm2916, 1, 0
    %v2933 = vsel %vm2917, 1, 0
    %v2934 = vsel %vm2918, 1, 0
    %v2935 = vsel %vm2919, 1, 0
    %v2936 = vsel %vm2920, 1, 0
    %v2937 = vsel %vm2921, 1, 0
    %v2938 = vcvt.s32.f32 %v2922
    %v2939 = vcvt.s32.f32 %v2923
    %v2940 = vcvt.s32.f32 %v2924
    %v2941 = vcvt.s32.f32 %v2925
    %v2942 = vcvt.s32.f32 %v2926
    %v2943 = vcvt.s32.f32 %v2927
    %v2944 = vcvt.s32.f32 %v2928
    %v2945 = vcvt.s32.f32 %v2929
    %v2946 = vcvt.s32.f32 %v2930
    %v2947 = vcvt.s32.f32 %v2931
    %v2948 = vcvt.s32.f32 %v2932
    %v2949 = vcvt.s32.f32 %v2933
    %v2950 = vcvt.s32.f32 %v2934
    %v2951 = vcvt.s32.f32 %v2935
    %v2952 = vcvt.s32.f32 %v2936
    %v2953 = vcvt.s32.f32 %v2937
    %v2954 = vadd.f32 %v2842, %v2938
    %v2955 = vadd.f32 %v2843, %v2939
    %v2956 = vadd.f32 %v2844, %v2940
    %v2957 = vadd.f32 %v2845, %v2941
    %v2958 = vadd.f32 %v2846, %v2942
    %v2959 = vadd.f32 %v2847, %v2943
    %v2960 = vadd.f32 %v2848, %v2944
    %v2961 = vadd.f32 %v2849, %v2945
    %v2962 = vadd.f32 %v2850, %v2946
    %v2963 = vadd.f32 %v2851, %v2947
    %v2964 = vadd.f32 %v2852, %v2948
    %v2965 = vadd.f32 %v2853, %v2949
    %v2966 = vadd.f32 %v2854, %v2950
    %v2967 = vadd.f32 %v2855, %v2951
    %v2968 = vadd.f32 %v2856, %v2952
    %v2969 = vadd.f32 %v2857, %v2953
    %2970 = vset.pattern.permute.xlu0 25
    %2971 = vperm.xlu0 %2970, %v154
    %v2972 = vpop.permute.xlu0 %2971
    %2973 = vset.pattern.permute.xlu0 25
    %2974 = vperm.xlu0 %2973, %v155
    %v2975 = vpop.permute.xlu0 %2974
    %2976 = vset.pattern.permute.xlu0 25
    %2977 = vperm.xlu0 %2976, %v156
    %v2978 = vpop.permute.xlu0 %2977
    %2979 = vset.pattern.permute.xlu0 25
    %2980 = vperm.xlu0 %2979, %v157
    %v2981 = vpop.permute.xlu0 %2980
    %2982 = vset.pattern.permute.xlu0 25
    %2983 = vperm.xlu0 %2982, %v158
    %v2984 = vpop.permute.xlu0 %2983
    %2985 = vset.pattern.permute.xlu0 25
    %2986 = vperm.xlu0 %2985, %v159
    %v2987 = vpop.permute.xlu0 %2986
    %2988 = vset.pattern.permute.xlu0 25
    %2989 = vperm.xlu0 %2988, %v160
    %v2990 = vpop.permute.xlu0 %2989
    %2991 = vset.pattern.permute.xlu0 25
    %2992 = vperm.xlu0 %2991, %v161
    %v2993 = vpop.permute.xlu0 %2992
    %2994 = vset.pattern.permute.xlu0 25
    %2995 = vperm.xlu0 %2994, %v162
    %v2996 = vpop.permute.xlu0 %2995
    %2997 = vset.pattern.permute.xlu0 25
    %2998 = vperm.xlu0 %2997, %v163
    %v2999 = vpop.permute.xlu0 %2998
    %3000 = vset.pattern.permute.xlu0 25
    %3001 = vperm.xlu0 %3000, %v164
    %v3002 = vpop.permute.xlu0 %3001
    %3003 = vset.pattern.permute.xlu0 25
    %3004 = vperm.xlu0 %3003, %v165
    %v3005 = vpop.permute.xlu0 %3004
    %3006 = vset.pattern.permute.xlu0 25
    %3007 = vperm.xlu0 %3006, %v166
    %v3008 = vpop.permute.xlu0 %3007
    %3009 = vset.pattern.permute.xlu0 25
    %3010 = vperm.xlu0 %3009, %v167
    %v3011 = vpop.permute.xlu0 %3010
    %3012 = vset.pattern.permute.xlu0 25
    %3013 = vperm.xlu0 %3012, %v168
    %v3014 = vpop.permute.xlu0 %3013
    %3015 = vset.pattern.permute.xlu0 25
    %3016 = vperm.xlu0 %3015, %v169
    %v3017 = vpop.permute.xlu0 %3016
    %vm3018 = vcmp.eq.s32.totalorder %v2972, %v37
    %vm3019 = vcmp.eq.s32.totalorder %v2975, %v37
    %vm3020 = vcmp.eq.s32.totalorder %v2978, %v37
    %vm3021 = vcmp.eq.s32.totalorder %v2981, %v37
    %vm3022 = vcmp.eq.s32.totalorder %v2984, %v37
    %vm3023 = vcmp.eq.s32.totalorder %v2987, %v37
    %vm3024 = vcmp.eq.s32.totalorder %v2990, %v37
    %vm3025 = vcmp.eq.s32.totalorder %v2993, %v37
    %vm3026 = vcmp.eq.s32.totalorder %v2996, %v37
    %vm3027 = vcmp.eq.s32.totalorder %v2999, %v37
    %vm3028 = vcmp.eq.s32.totalorder %v3002, %v37
    %vm3029 = vcmp.eq.s32.totalorder %v3005, %v37
    %vm3030 = vcmp.eq.s32.totalorder %v3008, %v37
    %vm3031 = vcmp.eq.s32.totalorder %v3011, %v37
    %vm3032 = vcmp.eq.s32.totalorder %v3014, %v37
    %vm3033 = vcmp.eq.s32.totalorder %v3017, %v37
    %v3034 = vsel %vm3018, 1, 0
    %v3035 = vsel %vm3019, 1, 0
    %v3036 = vsel %vm3020, 1, 0
    %v3037 = vsel %vm3021, 1, 0
    %v3038 = vsel %vm3022, 1, 0
    %v3039 = vsel %vm3023, 1, 0
    %v3040 = vsel %vm3024, 1, 0
    %v3041 = vsel %vm3025, 1, 0
    %v3042 = vsel %vm3026, 1, 0
    %v3043 = vsel %vm3027, 1, 0
    %v3044 = vsel %vm3028, 1, 0
    %v3045 = vsel %vm3029, 1, 0
    %v3046 = vsel %vm3030, 1, 0
    %v3047 = vsel %vm3031, 1, 0
    %v3048 = vsel %vm3032, 1, 0
    %v3049 = vsel %vm3033, 1, 0
    %v3050 = vcvt.s32.f32 %v3034
    %v3051 = vcvt.s32.f32 %v3035
    %v3052 = vcvt.s32.f32 %v3036
    %v3053 = vcvt.s32.f32 %v3037
    %v3054 = vcvt.s32.f32 %v3038
    %v3055 = vcvt.s32.f32 %v3039
    %v3056 = vcvt.s32.f32 %v3040
    %v3057 = vcvt.s32.f32 %v3041
    %v3058 = vcvt.s32.f32 %v3042
    %v3059 = vcvt.s32.f32 %v3043
    %v3060 = vcvt.s32.f32 %v3044
    %v3061 = vcvt.s32.f32 %v3045
    %v3062 = vcvt.s32.f32 %v3046
    %v3063 = vcvt.s32.f32 %v3047
    %v3064 = vcvt.s32.f32 %v3048
    %v3065 = vcvt.s32.f32 %v3049
    %v3066 = vadd.f32 %v2954, %v3050
    %v3067 = vadd.f32 %v2955, %v3051
    %v3068 = vadd.f32 %v2956, %v3052
    %v3069 = vadd.f32 %v2957, %v3053
    %v3070 = vadd.f32 %v2958, %v3054
    %v3071 = vadd.f32 %v2959, %v3055
    %v3072 = vadd.f32 %v2960, %v3056
    %v3073 = vadd.f32 %v2961, %v3057
    %v3074 = vadd.f32 %v2962, %v3058
    %v3075 = vadd.f32 %v2963, %v3059
    %v3076 = vadd.f32 %v2964, %v3060
    %v3077 = vadd.f32 %v2965, %v3061
    %v3078 = vadd.f32 %v2966, %v3062
    %v3079 = vadd.f32 %v2967, %v3063
    %v3080 = vadd.f32 %v2968, %v3064
    %v3081 = vadd.f32 %v2969, %v3065
    %3082 = vset.pattern.permute.xlu0 26
    %3083 = vperm.xlu0 %3082, %v154
    %v3084 = vpop.permute.xlu0 %3083
    %3085 = vset.pattern.permute.xlu0 26
    %3086 = vperm.xlu0 %3085, %v155
    %v3087 = vpop.permute.xlu0 %3086
    %3088 = vset.pattern.permute.xlu0 26
    %3089 = vperm.xlu0 %3088, %v156
    %v3090 = vpop.permute.xlu0 %3089
    %3091 = vset.pattern.permute.xlu0 26
    %3092 = vperm.xlu0 %3091, %v157
    %v3093 = vpop.permute.xlu0 %3092
    %3094 = vset.pattern.permute.xlu0 26
    %3095 = vperm.xlu0 %3094, %v158
    %v3096 = vpop.permute.xlu0 %3095
    %3097 = vset.pattern.permute.xlu0 26
    %3098 = vperm.xlu0 %3097, %v159
    %v3099 = vpop.permute.xlu0 %3098
    %3100 = vset.pattern.permute.xlu0 26
    %3101 = vperm.xlu0 %3100, %v160
    %v3102 = vpop.permute.xlu0 %3101
    %3103 = vset.pattern.permute.xlu0 26
    %3104 = vperm.xlu0 %3103, %v161
    %v3105 = vpop.permute.xlu0 %3104
    %3106 = vset.pattern.permute.xlu0 26
    %3107 = vperm.xlu0 %3106, %v162
    %v3108 = vpop.permute.xlu0 %3107
    %3109 = vset.pattern.permute.xlu0 26
    %3110 = vperm.xlu0 %3109, %v163
    %v3111 = vpop.permute.xlu0 %3110
    %3112 = vset.pattern.permute.xlu0 26
    %3113 = vperm.xlu0 %3112, %v164
    %v3114 = vpop.permute.xlu0 %3113
    %3115 = vset.pattern.permute.xlu0 26
    %3116 = vperm.xlu0 %3115, %v165
    %v3117 = vpop.permute.xlu0 %3116
    %3118 = vset.pattern.permute.xlu0 26
    %3119 = vperm.xlu0 %3118, %v166
    %v3120 = vpop.permute.xlu0 %3119
    %3121 = vset.pattern.permute.xlu0 26
    %3122 = vperm.xlu0 %3121, %v167
    %v3123 = vpop.permute.xlu0 %3122
    %3124 = vset.pattern.permute.xlu0 26
    %3125 = vperm.xlu0 %3124, %v168
    %v3126 = vpop.permute.xlu0 %3125
    %3127 = vset.pattern.permute.xlu0 26
    %3128 = vperm.xlu0 %3127, %v169
    %v3129 = vpop.permute.xlu0 %3128
    %vm3130 = vcmp.eq.s32.totalorder %v3084, %v37
    %vm3131 = vcmp.eq.s32.totalorder %v3087, %v37
    %vm3132 = vcmp.eq.s32.totalorder %v3090, %v37
    %vm3133 = vcmp.eq.s32.totalorder %v3093, %v37
    %vm3134 = vcmp.eq.s32.totalorder %v3096, %v37
    %vm3135 = vcmp.eq.s32.totalorder %v3099, %v37
    %vm3136 = vcmp.eq.s32.totalorder %v3102, %v37
    %vm3137 = vcmp.eq.s32.totalorder %v3105, %v37
    %vm3138 = vcmp.eq.s32.totalorder %v3108, %v37
    %vm3139 = vcmp.eq.s32.totalorder %v3111, %v37
    %vm3140 = vcmp.eq.s32.totalorder %v3114, %v37
    %vm3141 = vcmp.eq.s32.totalorder %v3117, %v37
    %vm3142 = vcmp.eq.s32.totalorder %v3120, %v37
    %vm3143 = vcmp.eq.s32.totalorder %v3123, %v37
    %vm3144 = vcmp.eq.s32.totalorder %v3126, %v37
    %vm3145 = vcmp.eq.s32.totalorder %v3129, %v37
    %v3146 = vsel %vm3130, 1, 0
    %v3147 = vsel %vm3131, 1, 0
    %v3148 = vsel %vm3132, 1, 0
    %v3149 = vsel %vm3133, 1, 0
    %v3150 = vsel %vm3134, 1, 0
    %v3151 = vsel %vm3135, 1, 0
    %v3152 = vsel %vm3136, 1, 0
    %v3153 = vsel %vm3137, 1, 0
    %v3154 = vsel %vm3138, 1, 0
    %v3155 = vsel %vm3139, 1, 0
    %v3156 = vsel %vm3140, 1, 0
    %v3157 = vsel %vm3141, 1, 0
    %v3158 = vsel %vm3142, 1, 0
    %v3159 = vsel %vm3143, 1, 0
    %v3160 = vsel %vm3144, 1, 0
    %v3161 = vsel %vm3145, 1, 0
    %v3162 = vcvt.s32.f32 %v3146
    %v3163 = vcvt.s32.f32 %v3147
    %v3164 = vcvt.s32.f32 %v3148
    %v3165 = vcvt.s32.f32 %v3149
    %v3166 = vcvt.s32.f32 %v3150
    %v3167 = vcvt.s32.f32 %v3151
    %v3168 = vcvt.s32.f32 %v3152
    %v3169 = vcvt.s32.f32 %v3153
    %v3170 = vcvt.s32.f32 %v3154
    %v3171 = vcvt.s32.f32 %v3155
    %v3172 = vcvt.s32.f32 %v3156
    %v3173 = vcvt.s32.f32 %v3157
    %v3174 = vcvt.s32.f32 %v3158
    %v3175 = vcvt.s32.f32 %v3159
    %v3176 = vcvt.s32.f32 %v3160
    %v3177 = vcvt.s32.f32 %v3161
    %v3178 = vadd.f32 %v3066, %v3162
    %v3179 = vadd.f32 %v3067, %v3163
    %v3180 = vadd.f32 %v3068, %v3164
    %v3181 = vadd.f32 %v3069, %v3165
    %v3182 = vadd.f32 %v3070, %v3166
    %v3183 = vadd.f32 %v3071, %v3167
    %v3184 = vadd.f32 %v3072, %v3168
    %v3185 = vadd.f32 %v3073, %v3169
    %v3186 = vadd.f32 %v3074, %v3170
    %v3187 = vadd.f32 %v3075, %v3171
    %v3188 = vadd.f32 %v3076, %v3172
    %v3189 = vadd.f32 %v3077, %v3173
    %v3190 = vadd.f32 %v3078, %v3174
    %v3191 = vadd.f32 %v3079, %v3175
    %v3192 = vadd.f32 %v3080, %v3176
    %v3193 = vadd.f32 %v3081, %v3177
    %3194 = vset.pattern.permute.xlu0 27
    %3195 = vperm.xlu0 %3194, %v154
    %v3196 = vpop.permute.xlu0 %3195
    %3197 = vset.pattern.permute.xlu0 27
    %3198 = vperm.xlu0 %3197, %v155
    %v3199 = vpop.permute.xlu0 %3198
    %3200 = vset.pattern.permute.xlu0 27
    %3201 = vperm.xlu0 %3200, %v156
    %v3202 = vpop.permute.xlu0 %3201
    %3203 = vset.pattern.permute.xlu0 27
    %3204 = vperm.xlu0 %3203, %v157
    %v3205 = vpop.permute.xlu0 %3204
    %3206 = vset.pattern.permute.xlu0 27
    %3207 = vperm.xlu0 %3206, %v158
    %v3208 = vpop.permute.xlu0 %3207
    %3209 = vset.pattern.permute.xlu0 27
    %3210 = vperm.xlu0 %3209, %v159
    %v3211 = vpop.permute.xlu0 %3210
    %3212 = vset.pattern.permute.xlu0 27
    %3213 = vperm.xlu0 %3212, %v160
    %v3214 = vpop.permute.xlu0 %3213
    %3215 = vset.pattern.permute.xlu0 27
    %3216 = vperm.xlu0 %3215, %v161
    %v3217 = vpop.permute.xlu0 %3216
    %3218 = vset.pattern.permute.xlu0 27
    %3219 = vperm.xlu0 %3218, %v162
    %v3220 = vpop.permute.xlu0 %3219
    %3221 = vset.pattern.permute.xlu0 27
    %3222 = vperm.xlu0 %3221, %v163
    %v3223 = vpop.permute.xlu0 %3222
    %3224 = vset.pattern.permute.xlu0 27
    %3225 = vperm.xlu0 %3224, %v164
    %v3226 = vpop.permute.xlu0 %3225
    %3227 = vset.pattern.permute.xlu0 27
    %3228 = vperm.xlu0 %3227, %v165
    %v3229 = vpop.permute.xlu0 %3228
    %3230 = vset.pattern.permute.xlu0 27
    %3231 = vperm.xlu0 %3230, %v166
    %v3232 = vpop.permute.xlu0 %3231
    %3233 = vset.pattern.permute.xlu0 27
    %3234 = vperm.xlu0 %3233, %v167
    %v3235 = vpop.permute.xlu0 %3234
    %3236 = vset.pattern.permute.xlu0 27
    %3237 = vperm.xlu0 %3236, %v168
    %v3238 = vpop.permute.xlu0 %3237
    %3239 = vset.pattern.permute.xlu0 27
    %3240 = vperm.xlu0 %3239, %v169
    %v3241 = vpop.permute.xlu0 %3240
    %vm3242 = vcmp.eq.s32.totalorder %v3196, %v37
    %vm3243 = vcmp.eq.s32.totalorder %v3199, %v37
    %vm3244 = vcmp.eq.s32.totalorder %v3202, %v37
    %vm3245 = vcmp.eq.s32.totalorder %v3205, %v37
    %vm3246 = vcmp.eq.s32.totalorder %v3208, %v37
    %vm3247 = vcmp.eq.s32.totalorder %v3211, %v37
    %vm3248 = vcmp.eq.s32.totalorder %v3214, %v37
    %vm3249 = vcmp.eq.s32.totalorder %v3217, %v37
    %vm3250 = vcmp.eq.s32.totalorder %v3220, %v37
    %vm3251 = vcmp.eq.s32.totalorder %v3223, %v37
    %vm3252 = vcmp.eq.s32.totalorder %v3226, %v37
    %vm3253 = vcmp.eq.s32.totalorder %v3229, %v37
    %vm3254 = vcmp.eq.s32.totalorder %v3232, %v37
    %vm3255 = vcmp.eq.s32.totalorder %v3235, %v37
    %vm3256 = vcmp.eq.s32.totalorder %v3238, %v37
    %vm3257 = vcmp.eq.s32.totalorder %v3241, %v37
    %v3258 = vsel %vm3242, 1, 0
    %v3259 = vsel %vm3243, 1, 0
    %v3260 = vsel %vm3244, 1, 0
    %v3261 = vsel %vm3245, 1, 0
    %v3262 = vsel %vm3246, 1, 0
    %v3263 = vsel %vm3247, 1, 0
    %v3264 = vsel %vm3248, 1, 0
    %v3265 = vsel %vm3249, 1, 0
    %v3266 = vsel %vm3250, 1, 0
    %v3267 = vsel %vm3251, 1, 0
    %v3268 = vsel %vm3252, 1, 0
    %v3269 = vsel %vm3253, 1, 0
    %v3270 = vsel %vm3254, 1, 0
    %v3271 = vsel %vm3255, 1, 0
    %v3272 = vsel %vm3256, 1, 0
    %v3273 = vsel %vm3257, 1, 0
    %v3274 = vcvt.s32.f32 %v3258
    %v3275 = vcvt.s32.f32 %v3259
    %v3276 = vcvt.s32.f32 %v3260
    %v3277 = vcvt.s32.f32 %v3261
    %v3278 = vcvt.s32.f32 %v3262
    %v3279 = vcvt.s32.f32 %v3263
    %v3280 = vcvt.s32.f32 %v3264
    %v3281 = vcvt.s32.f32 %v3265
    %v3282 = vcvt.s32.f32 %v3266
    %v3283 = vcvt.s32.f32 %v3267
    %v3284 = vcvt.s32.f32 %v3268
    %v3285 = vcvt.s32.f32 %v3269
    %v3286 = vcvt.s32.f32 %v3270
    %v3287 = vcvt.s32.f32 %v3271
    %v3288 = vcvt.s32.f32 %v3272
    %v3289 = vcvt.s32.f32 %v3273
    %v3290 = vadd.f32 %v3178, %v3274
    %v3291 = vadd.f32 %v3179, %v3275
    %v3292 = vadd.f32 %v3180, %v3276
    %v3293 = vadd.f32 %v3181, %v3277
    %v3294 = vadd.f32 %v3182, %v3278
    %v3295 = vadd.f32 %v3183, %v3279
    %v3296 = vadd.f32 %v3184, %v3280
    %v3297 = vadd.f32 %v3185, %v3281
    %v3298 = vadd.f32 %v3186, %v3282
    %v3299 = vadd.f32 %v3187, %v3283
    %v3300 = vadd.f32 %v3188, %v3284
    %v3301 = vadd.f32 %v3189, %v3285
    %v3302 = vadd.f32 %v3190, %v3286
    %v3303 = vadd.f32 %v3191, %v3287
    %v3304 = vadd.f32 %v3192, %v3288
    %v3305 = vadd.f32 %v3193, %v3289
    %3306 = vset.pattern.permute.xlu0 28
    %3307 = vperm.xlu0 %3306, %v154
    %v3308 = vpop.permute.xlu0 %3307
    %3309 = vset.pattern.permute.xlu0 28
    %3310 = vperm.xlu0 %3309, %v155
    %v3311 = vpop.permute.xlu0 %3310
    %3312 = vset.pattern.permute.xlu0 28
    %3313 = vperm.xlu0 %3312, %v156
    %v3314 = vpop.permute.xlu0 %3313
    %3315 = vset.pattern.permute.xlu0 28
    %3316 = vperm.xlu0 %3315, %v157
    %v3317 = vpop.permute.xlu0 %3316
    %3318 = vset.pattern.permute.xlu0 28
    %3319 = vperm.xlu0 %3318, %v158
    %v3320 = vpop.permute.xlu0 %3319
    %3321 = vset.pattern.permute.xlu0 28
    %3322 = vperm.xlu0 %3321, %v159
    %v3323 = vpop.permute.xlu0 %3322
    %3324 = vset.pattern.permute.xlu0 28
    %3325 = vperm.xlu0 %3324, %v160
    %v3326 = vpop.permute.xlu0 %3325
    %3327 = vset.pattern.permute.xlu0 28
    %3328 = vperm.xlu0 %3327, %v161
    %v3329 = vpop.permute.xlu0 %3328
    %3330 = vset.pattern.permute.xlu0 28
    %3331 = vperm.xlu0 %3330, %v162
    %v3332 = vpop.permute.xlu0 %3331
    %3333 = vset.pattern.permute.xlu0 28
    %3334 = vperm.xlu0 %3333, %v163
    %v3335 = vpop.permute.xlu0 %3334
    %3336 = vset.pattern.permute.xlu0 28
    %3337 = vperm.xlu0 %3336, %v164
    %v3338 = vpop.permute.xlu0 %3337
    %3339 = vset.pattern.permute.xlu0 28
    %3340 = vperm.xlu0 %3339, %v165
    %v3341 = vpop.permute.xlu0 %3340
    %3342 = vset.pattern.permute.xlu0 28
    %3343 = vperm.xlu0 %3342, %v166
    %v3344 = vpop.permute.xlu0 %3343
    %3345 = vset.pattern.permute.xlu0 28
    %3346 = vperm.xlu0 %3345, %v167
    %v3347 = vpop.permute.xlu0 %3346
    %3348 = vset.pattern.permute.xlu0 28
    %3349 = vperm.xlu0 %3348, %v168
    %v3350 = vpop.permute.xlu0 %3349
    %3351 = vset.pattern.permute.xlu0 28
    %3352 = vperm.xlu0 %3351, %v169
    %v3353 = vpop.permute.xlu0 %3352
    %vm3354 = vcmp.eq.s32.totalorder %v3308, %v37
    %vm3355 = vcmp.eq.s32.totalorder %v3311, %v37
    %vm3356 = vcmp.eq.s32.totalorder %v3314, %v37
    %vm3357 = vcmp.eq.s32.totalorder %v3317, %v37
    %vm3358 = vcmp.eq.s32.totalorder %v3320, %v37
    %vm3359 = vcmp.eq.s32.totalorder %v3323, %v37
    %vm3360 = vcmp.eq.s32.totalorder %v3326, %v37
    %vm3361 = vcmp.eq.s32.totalorder %v3329, %v37
    %vm3362 = vcmp.eq.s32.totalorder %v3332, %v37
    %vm3363 = vcmp.eq.s32.totalorder %v3335, %v37
    %vm3364 = vcmp.eq.s32.totalorder %v3338, %v37
    %vm3365 = vcmp.eq.s32.totalorder %v3341, %v37
    %vm3366 = vcmp.eq.s32.totalorder %v3344, %v37
    %vm3367 = vcmp.eq.s32.totalorder %v3347, %v37
    %vm3368 = vcmp.eq.s32.totalorder %v3350, %v37
    %vm3369 = vcmp.eq.s32.totalorder %v3353, %v37
    %v3370 = vsel %vm3354, 1, 0
    %v3371 = vsel %vm3355, 1, 0
    %v3372 = vsel %vm3356, 1, 0
    %v3373 = vsel %vm3357, 1, 0
    %v3374 = vsel %vm3358, 1, 0
    %v3375 = vsel %vm3359, 1, 0
    %v3376 = vsel %vm3360, 1, 0
    %v3377 = vsel %vm3361, 1, 0
    %v3378 = vsel %vm3362, 1, 0
    %v3379 = vsel %vm3363, 1, 0
    %v3380 = vsel %vm3364, 1, 0
    %v3381 = vsel %vm3365, 1, 0
    %v3382 = vsel %vm3366, 1, 0
    %v3383 = vsel %vm3367, 1, 0
    %v3384 = vsel %vm3368, 1, 0
    %v3385 = vsel %vm3369, 1, 0
    %v3386 = vcvt.s32.f32 %v3370
    %v3387 = vcvt.s32.f32 %v3371
    %v3388 = vcvt.s32.f32 %v3372
    %v3389 = vcvt.s32.f32 %v3373
    %v3390 = vcvt.s32.f32 %v3374
    %v3391 = vcvt.s32.f32 %v3375
    %v3392 = vcvt.s32.f32 %v3376
    %v3393 = vcvt.s32.f32 %v3377
    %v3394 = vcvt.s32.f32 %v3378
    %v3395 = vcvt.s32.f32 %v3379
    %v3396 = vcvt.s32.f32 %v3380
    %v3397 = vcvt.s32.f32 %v3381
    %v3398 = vcvt.s32.f32 %v3382
    %v3399 = vcvt.s32.f32 %v3383
    %v3400 = vcvt.s32.f32 %v3384
    %v3401 = vcvt.s32.f32 %v3385
    %v3402 = vadd.f32 %v3290, %v3386
    %v3403 = vadd.f32 %v3291, %v3387
    %v3404 = vadd.f32 %v3292, %v3388
    %v3405 = vadd.f32 %v3293, %v3389
    %v3406 = vadd.f32 %v3294, %v3390
    %v3407 = vadd.f32 %v3295, %v3391
    %v3408 = vadd.f32 %v3296, %v3392
    %v3409 = vadd.f32 %v3297, %v3393
    %v3410 = vadd.f32 %v3298, %v3394
    %v3411 = vadd.f32 %v3299, %v3395
    %v3412 = vadd.f32 %v3300, %v3396
    %v3413 = vadd.f32 %v3301, %v3397
    %v3414 = vadd.f32 %v3302, %v3398
    %v3415 = vadd.f32 %v3303, %v3399
    %v3416 = vadd.f32 %v3304, %v3400
    %v3417 = vadd.f32 %v3305, %v3401
    %3418 = vset.pattern.permute.xlu0 29
    %3419 = vperm.xlu0 %3418, %v154
    %v3420 = vpop.permute.xlu0 %3419
    %3421 = vset.pattern.permute.xlu0 29
    %3422 = vperm.xlu0 %3421, %v155
    %v3423 = vpop.permute.xlu0 %3422
    %3424 = vset.pattern.permute.xlu0 29
    %3425 = vperm.xlu0 %3424, %v156
    %v3426 = vpop.permute.xlu0 %3425
    %3427 = vset.pattern.permute.xlu0 29
    %3428 = vperm.xlu0 %3427, %v157
    %v3429 = vpop.permute.xlu0 %3428
    %3430 = vset.pattern.permute.xlu0 29
    %3431 = vperm.xlu0 %3430, %v158
    %v3432 = vpop.permute.xlu0 %3431
    %3433 = vset.pattern.permute.xlu0 29
    %3434 = vperm.xlu0 %3433, %v159
    %v3435 = vpop.permute.xlu0 %3434
    %3436 = vset.pattern.permute.xlu0 29
    %3437 = vperm.xlu0 %3436, %v160
    %v3438 = vpop.permute.xlu0 %3437
    %3439 = vset.pattern.permute.xlu0 29
    %3440 = vperm.xlu0 %3439, %v161
    %v3441 = vpop.permute.xlu0 %3440
    %3442 = vset.pattern.permute.xlu0 29
    %3443 = vperm.xlu0 %3442, %v162
    %v3444 = vpop.permute.xlu0 %3443
    %3445 = vset.pattern.permute.xlu0 29
    %3446 = vperm.xlu0 %3445, %v163
    %v3447 = vpop.permute.xlu0 %3446
    %3448 = vset.pattern.permute.xlu0 29
    %3449 = vperm.xlu0 %3448, %v164
    %v3450 = vpop.permute.xlu0 %3449
    %3451 = vset.pattern.permute.xlu0 29
    %3452 = vperm.xlu0 %3451, %v165
    %v3453 = vpop.permute.xlu0 %3452
    %3454 = vset.pattern.permute.xlu0 29
    %3455 = vperm.xlu0 %3454, %v166
    %v3456 = vpop.permute.xlu0 %3455
    %3457 = vset.pattern.permute.xlu0 29
    %3458 = vperm.xlu0 %3457, %v167
    %v3459 = vpop.permute.xlu0 %3458
    %3460 = vset.pattern.permute.xlu0 29
    %3461 = vperm.xlu0 %3460, %v168
    %v3462 = vpop.permute.xlu0 %3461
    %3463 = vset.pattern.permute.xlu0 29
    %3464 = vperm.xlu0 %3463, %v169
    %v3465 = vpop.permute.xlu0 %3464
    %vm3466 = vcmp.eq.s32.totalorder %v3420, %v37
    %vm3467 = vcmp.eq.s32.totalorder %v3423, %v37
    %vm3468 = vcmp.eq.s32.totalorder %v3426, %v37
    %vm3469 = vcmp.eq.s32.totalorder %v3429, %v37
    %vm3470 = vcmp.eq.s32.totalorder %v3432, %v37
    %vm3471 = vcmp.eq.s32.totalorder %v3435, %v37
    %vm3472 = vcmp.eq.s32.totalorder %v3438, %v37
    %vm3473 = vcmp.eq.s32.totalorder %v3441, %v37
    %vm3474 = vcmp.eq.s32.totalorder %v3444, %v37
    %vm3475 = vcmp.eq.s32.totalorder %v3447, %v37
    %vm3476 = vcmp.eq.s32.totalorder %v3450, %v37
    %vm3477 = vcmp.eq.s32.totalorder %v3453, %v37
    %vm3478 = vcmp.eq.s32.totalorder %v3456, %v37
    %vm3479 = vcmp.eq.s32.totalorder %v3459, %v37
    %vm3480 = vcmp.eq.s32.totalorder %v3462, %v37
    %vm3481 = vcmp.eq.s32.totalorder %v3465, %v37
    %v3482 = vsel %vm3466, 1, 0
    %v3483 = vsel %vm3467, 1, 0
    %v3484 = vsel %vm3468, 1, 0
    %v3485 = vsel %vm3469, 1, 0
    %v3486 = vsel %vm3470, 1, 0
    %v3487 = vsel %vm3471, 1, 0
    %v3488 = vsel %vm3472, 1, 0
    %v3489 = vsel %vm3473, 1, 0
    %v3490 = vsel %vm3474, 1, 0
    %v3491 = vsel %vm3475, 1, 0
    %v3492 = vsel %vm3476, 1, 0
    %v3493 = vsel %vm3477, 1, 0
    %v3494 = vsel %vm3478, 1, 0
    %v3495 = vsel %vm3479, 1, 0
    %v3496 = vsel %vm3480, 1, 0
    %v3497 = vsel %vm3481, 1, 0
    %v3498 = vcvt.s32.f32 %v3482
    %v3499 = vcvt.s32.f32 %v3483
    %v3500 = vcvt.s32.f32 %v3484
    %v3501 = vcvt.s32.f32 %v3485
    %v3502 = vcvt.s32.f32 %v3486
    %v3503 = vcvt.s32.f32 %v3487
    %v3504 = vcvt.s32.f32 %v3488
    %v3505 = vcvt.s32.f32 %v3489
    %v3506 = vcvt.s32.f32 %v3490
    %v3507 = vcvt.s32.f32 %v3491
    %v3508 = vcvt.s32.f32 %v3492
    %v3509 = vcvt.s32.f32 %v3493
    %v3510 = vcvt.s32.f32 %v3494
    %v3511 = vcvt.s32.f32 %v3495
    %v3512 = vcvt.s32.f32 %v3496
    %v3513 = vcvt.s32.f32 %v3497
    %v3514 = vadd.f32 %v3402, %v3498
    %v3515 = vadd.f32 %v3403, %v3499
    %v3516 = vadd.f32 %v3404, %v3500
    %v3517 = vadd.f32 %v3405, %v3501
    %v3518 = vadd.f32 %v3406, %v3502
    %v3519 = vadd.f32 %v3407, %v3503
    %v3520 = vadd.f32 %v3408, %v3504
    %v3521 = vadd.f32 %v3409, %v3505
    %v3522 = vadd.f32 %v3410, %v3506
    %v3523 = vadd.f32 %v3411, %v3507
    %v3524 = vadd.f32 %v3412, %v3508
    %v3525 = vadd.f32 %v3413, %v3509
    %v3526 = vadd.f32 %v3414, %v3510
    %v3527 = vadd.f32 %v3415, %v3511
    %v3528 = vadd.f32 %v3416, %v3512
    %v3529 = vadd.f32 %v3417, %v3513
    %3530 = vset.pattern.permute.xlu0 30
    %3531 = vperm.xlu0 %3530, %v154
    %v3532 = vpop.permute.xlu0 %3531
    %3533 = vset.pattern.permute.xlu0 30
    %3534 = vperm.xlu0 %3533, %v155
    %v3535 = vpop.permute.xlu0 %3534
    %3536 = vset.pattern.permute.xlu0 30
    %3537 = vperm.xlu0 %3536, %v156
    %v3538 = vpop.permute.xlu0 %3537
    %3539 = vset.pattern.permute.xlu0 30
    %3540 = vperm.xlu0 %3539, %v157
    %v3541 = vpop.permute.xlu0 %3540
    %3542 = vset.pattern.permute.xlu0 30
    %3543 = vperm.xlu0 %3542, %v158
    %v3544 = vpop.permute.xlu0 %3543
    %3545 = vset.pattern.permute.xlu0 30
    %3546 = vperm.xlu0 %3545, %v159
    %v3547 = vpop.permute.xlu0 %3546
    %3548 = vset.pattern.permute.xlu0 30
    %3549 = vperm.xlu0 %3548, %v160
    %v3550 = vpop.permute.xlu0 %3549
    %3551 = vset.pattern.permute.xlu0 30
    %3552 = vperm.xlu0 %3551, %v161
    %v3553 = vpop.permute.xlu0 %3552
    %3554 = vset.pattern.permute.xlu0 30
    %3555 = vperm.xlu0 %3554, %v162
    %v3556 = vpop.permute.xlu0 %3555
    %3557 = vset.pattern.permute.xlu0 30
    %3558 = vperm.xlu0 %3557, %v163
    %v3559 = vpop.permute.xlu0 %3558
    %3560 = vset.pattern.permute.xlu0 30
    %3561 = vperm.xlu0 %3560, %v164
    %v3562 = vpop.permute.xlu0 %3561
    %3563 = vset.pattern.permute.xlu0 30
    %3564 = vperm.xlu0 %3563, %v165
    %v3565 = vpop.permute.xlu0 %3564
    %3566 = vset.pattern.permute.xlu0 30
    %3567 = vperm.xlu0 %3566, %v166
    %v3568 = vpop.permute.xlu0 %3567
    %3569 = vset.pattern.permute.xlu0 30
    %3570 = vperm.xlu0 %3569, %v167
    %v3571 = vpop.permute.xlu0 %3570
    %3572 = vset.pattern.permute.xlu0 30
    %3573 = vperm.xlu0 %3572, %v168
    %v3574 = vpop.permute.xlu0 %3573
    %3575 = vset.pattern.permute.xlu0 30
    %3576 = vperm.xlu0 %3575, %v169
    %v3577 = vpop.permute.xlu0 %3576
    %vm3578 = vcmp.eq.s32.totalorder %v3532, %v37
    %vm3579 = vcmp.eq.s32.totalorder %v3535, %v37
    %vm3580 = vcmp.eq.s32.totalorder %v3538, %v37
    %vm3581 = vcmp.eq.s32.totalorder %v3541, %v37
    %vm3582 = vcmp.eq.s32.totalorder %v3544, %v37
    %vm3583 = vcmp.eq.s32.totalorder %v3547, %v37
    %vm3584 = vcmp.eq.s32.totalorder %v3550, %v37
    %vm3585 = vcmp.eq.s32.totalorder %v3553, %v37
    %vm3586 = vcmp.eq.s32.totalorder %v3556, %v37
    %vm3587 = vcmp.eq.s32.totalorder %v3559, %v37
    %vm3588 = vcmp.eq.s32.totalorder %v3562, %v37
    %vm3589 = vcmp.eq.s32.totalorder %v3565, %v37
    %vm3590 = vcmp.eq.s32.totalorder %v3568, %v37
    %vm3591 = vcmp.eq.s32.totalorder %v3571, %v37
    %vm3592 = vcmp.eq.s32.totalorder %v3574, %v37
    %vm3593 = vcmp.eq.s32.totalorder %v3577, %v37
    %v3594 = vsel %vm3578, 1, 0
    %v3595 = vsel %vm3579, 1, 0
    %v3596 = vsel %vm3580, 1, 0
    %v3597 = vsel %vm3581, 1, 0
    %v3598 = vsel %vm3582, 1, 0
    %v3599 = vsel %vm3583, 1, 0
    %v3600 = vsel %vm3584, 1, 0
    %v3601 = vsel %vm3585, 1, 0
    %v3602 = vsel %vm3586, 1, 0
    %v3603 = vsel %vm3587, 1, 0
    %v3604 = vsel %vm3588, 1, 0
    %v3605 = vsel %vm3589, 1, 0
    %v3606 = vsel %vm3590, 1, 0
    %v3607 = vsel %vm3591, 1, 0
    %v3608 = vsel %vm3592, 1, 0
    %v3609 = vsel %vm3593, 1, 0
    %v3610 = vcvt.s32.f32 %v3594
    %v3611 = vcvt.s32.f32 %v3595
    %v3612 = vcvt.s32.f32 %v3596
    %v3613 = vcvt.s32.f32 %v3597
    %v3614 = vcvt.s32.f32 %v3598
    %v3615 = vcvt.s32.f32 %v3599
    %v3616 = vcvt.s32.f32 %v3600
    %v3617 = vcvt.s32.f32 %v3601
    %v3618 = vcvt.s32.f32 %v3602
    %v3619 = vcvt.s32.f32 %v3603
    %v3620 = vcvt.s32.f32 %v3604
    %v3621 = vcvt.s32.f32 %v3605
    %v3622 = vcvt.s32.f32 %v3606
    %v3623 = vcvt.s32.f32 %v3607
    %v3624 = vcvt.s32.f32 %v3608
    %v3625 = vcvt.s32.f32 %v3609
    %v3626 = vadd.f32 %v3514, %v3610
    %v3627 = vadd.f32 %v3515, %v3611
    %v3628 = vadd.f32 %v3516, %v3612
    %v3629 = vadd.f32 %v3517, %v3613
    %v3630 = vadd.f32 %v3518, %v3614
    %v3631 = vadd.f32 %v3519, %v3615
    %v3632 = vadd.f32 %v3520, %v3616
    %v3633 = vadd.f32 %v3521, %v3617
    %v3634 = vadd.f32 %v3522, %v3618
    %v3635 = vadd.f32 %v3523, %v3619
    %v3636 = vadd.f32 %v3524, %v3620
    %v3637 = vadd.f32 %v3525, %v3621
    %v3638 = vadd.f32 %v3526, %v3622
    %v3639 = vadd.f32 %v3527, %v3623
    %v3640 = vadd.f32 %v3528, %v3624
    %v3641 = vadd.f32 %v3529, %v3625
    %3642 = vset.pattern.permute.xlu0 31
    %3643 = vperm.xlu0 %3642, %v154
    %v3644 = vpop.permute.xlu0 %3643
    %3645 = vset.pattern.permute.xlu0 31
    %3646 = vperm.xlu0 %3645, %v155
    %v3647 = vpop.permute.xlu0 %3646
    %3648 = vset.pattern.permute.xlu0 31
    %3649 = vperm.xlu0 %3648, %v156
    %v3650 = vpop.permute.xlu0 %3649
    %3651 = vset.pattern.permute.xlu0 31
    %3652 = vperm.xlu0 %3651, %v157
    %v3653 = vpop.permute.xlu0 %3652
    %3654 = vset.pattern.permute.xlu0 31
    %3655 = vperm.xlu0 %3654, %v158
    %v3656 = vpop.permute.xlu0 %3655
    %3657 = vset.pattern.permute.xlu0 31
    %3658 = vperm.xlu0 %3657, %v159
    %v3659 = vpop.permute.xlu0 %3658
    %3660 = vset.pattern.permute.xlu0 31
    %3661 = vperm.xlu0 %3660, %v160
    %v3662 = vpop.permute.xlu0 %3661
    %3663 = vset.pattern.permute.xlu0 31
    %3664 = vperm.xlu0 %3663, %v161
    %v3665 = vpop.permute.xlu0 %3664
    %3666 = vset.pattern.permute.xlu0 31
    %3667 = vperm.xlu0 %3666, %v162
    %v3668 = vpop.permute.xlu0 %3667
    %3669 = vset.pattern.permute.xlu0 31
    %3670 = vperm.xlu0 %3669, %v163
    %v3671 = vpop.permute.xlu0 %3670
    %3672 = vset.pattern.permute.xlu0 31
    %3673 = vperm.xlu0 %3672, %v164
    %v3674 = vpop.permute.xlu0 %3673
    %3675 = vset.pattern.permute.xlu0 31
    %3676 = vperm.xlu0 %3675, %v165
    %v3677 = vpop.permute.xlu0 %3676
    %3678 = vset.pattern.permute.xlu0 31
    %3679 = vperm.xlu0 %3678, %v166
    %v3680 = vpop.permute.xlu0 %3679
    %3681 = vset.pattern.permute.xlu0 31
    %3682 = vperm.xlu0 %3681, %v167
    %v3683 = vpop.permute.xlu0 %3682
    %3684 = vset.pattern.permute.xlu0 31
    %3685 = vperm.xlu0 %3684, %v168
    %v3686 = vpop.permute.xlu0 %3685
    %3687 = vset.pattern.permute.xlu0 31
    %3688 = vperm.xlu0 %3687, %v169
    %v3689 = vpop.permute.xlu0 %3688
    %vm3690 = vcmp.eq.s32.totalorder %v3644, %v37
    %vm3691 = vcmp.eq.s32.totalorder %v3647, %v37
    %vm3692 = vcmp.eq.s32.totalorder %v3650, %v37
    %vm3693 = vcmp.eq.s32.totalorder %v3653, %v37
    %vm3694 = vcmp.eq.s32.totalorder %v3656, %v37
    %vm3695 = vcmp.eq.s32.totalorder %v3659, %v37
    %vm3696 = vcmp.eq.s32.totalorder %v3662, %v37
    %vm3697 = vcmp.eq.s32.totalorder %v3665, %v37
    %vm3698 = vcmp.eq.s32.totalorder %v3668, %v37
    %vm3699 = vcmp.eq.s32.totalorder %v3671, %v37
    %vm3700 = vcmp.eq.s32.totalorder %v3674, %v37
    %vm3701 = vcmp.eq.s32.totalorder %v3677, %v37
    %vm3702 = vcmp.eq.s32.totalorder %v3680, %v37
    %vm3703 = vcmp.eq.s32.totalorder %v3683, %v37
    %vm3704 = vcmp.eq.s32.totalorder %v3686, %v37
    %vm3705 = vcmp.eq.s32.totalorder %v3689, %v37
    %v3706 = vsel %vm3690, 1, 0
    %v3707 = vsel %vm3691, 1, 0
    %v3708 = vsel %vm3692, 1, 0
    %v3709 = vsel %vm3693, 1, 0
    %v3710 = vsel %vm3694, 1, 0
    %v3711 = vsel %vm3695, 1, 0
    %v3712 = vsel %vm3696, 1, 0
    %v3713 = vsel %vm3697, 1, 0
    %v3714 = vsel %vm3698, 1, 0
    %v3715 = vsel %vm3699, 1, 0
    %v3716 = vsel %vm3700, 1, 0
    %v3717 = vsel %vm3701, 1, 0
    %v3718 = vsel %vm3702, 1, 0
    %v3719 = vsel %vm3703, 1, 0
    %v3720 = vsel %vm3704, 1, 0
    %v3721 = vsel %vm3705, 1, 0
    %v3722 = vcvt.s32.f32 %v3706
    %v3723 = vcvt.s32.f32 %v3707
    %v3724 = vcvt.s32.f32 %v3708
    %v3725 = vcvt.s32.f32 %v3709
    %v3726 = vcvt.s32.f32 %v3710
    %v3727 = vcvt.s32.f32 %v3711
    %v3728 = vcvt.s32.f32 %v3712
    %v3729 = vcvt.s32.f32 %v3713
    %v3730 = vcvt.s32.f32 %v3714
    %v3731 = vcvt.s32.f32 %v3715
    %v3732 = vcvt.s32.f32 %v3716
    %v3733 = vcvt.s32.f32 %v3717
    %v3734 = vcvt.s32.f32 %v3718
    %v3735 = vcvt.s32.f32 %v3719
    %v3736 = vcvt.s32.f32 %v3720
    %v3737 = vcvt.s32.f32 %v3721
    %v3738 = vadd.f32 %v3626, %v3722
    %v3739 = vadd.f32 %v3627, %v3723
    %v3740 = vadd.f32 %v3628, %v3724
    %v3741 = vadd.f32 %v3629, %v3725
    %v3742 = vadd.f32 %v3630, %v3726
    %v3743 = vadd.f32 %v3631, %v3727
    %v3744 = vadd.f32 %v3632, %v3728
    %v3745 = vadd.f32 %v3633, %v3729
    %v3746 = vadd.f32 %v3634, %v3730
    %v3747 = vadd.f32 %v3635, %v3731
    %v3748 = vadd.f32 %v3636, %v3732
    %v3749 = vadd.f32 %v3637, %v3733
    %v3750 = vadd.f32 %v3638, %v3734
    %v3751 = vadd.f32 %v3639, %v3735
    %v3752 = vadd.f32 %v3640, %v3736
    %v3753 = vadd.f32 %v3641, %v3737
    %3754 = vmatprep.subr.mxu0 0.0
    %3755 = vmatpush1.msra.mxu0 %v35
    %3756 = vmatprep.subr.mxu0 0.0
    %3757 = vmatpush1.msra.mxu0 %v34
    %3758 = vmatprep.subr.mxu0 0.0
    %3759 = vmatpush1.msra.mxu0 %v33
    %3760 = vmatprep.subr.mxu0 0.0
    %3761 = vmatpush1.msra.mxu0 %v32
    %3762 = vmatprep.subr.mxu0 0.0
    %3763 = vmatpush1.msra.mxu0 %v31
    %3764 = vmatprep.subr.mxu0 0.0
    %3765 = vmatpush1.msra.mxu0 %v30
    %3766 = vmatprep.subr.mxu0 0.0
    %3767 = vmatpush1.msra.mxu0 %v29
    %3768 = vmatprep.subr.mxu0 0.0
    %3769 = vmatpush1.msra.mxu0 %v28
    %3770 = vmatprep.subr.mxu0 0.0
    %3771 = vmatpush1.msra.mxu0 %v27
    %3772 = vmatprep.subr.mxu0 0.0
    %3773 = vmatpush1.msra.mxu0 %v26
    %3774 = vmatprep.subr.mxu0 0.0
    %3775 = vmatpush1.msra.mxu0 %v25
    %3776 = vmatprep.subr.mxu0 0.0
    %3777 = vmatpush1.msra.mxu0 %v24
    %3778 = vmatprep.subr.mxu0 0.0
    %3779 = vmatpush1.msra.mxu0 %v23
    %3780 = vmatprep.subr.mxu0 0.0
    %3781 = vmatpush1.msra.mxu0 %v22
    %3782 = vmatprep.subr.mxu0 0.0
    %3783 = vmatpush1.msra.mxu0 %v21
    %3784 = vmatprep.subr.mxu0 0.0
    %3785 = vmatpush1.msra.mxu0 %v20
    %3786 = vmatprep.subr.mxu0 0.0
    %3787 = vmatpush2.msra.mxu0 0.0
    %3788 = vmatprep.subr.mxu0 0.0
    %3789 = vmatpush2.msra.mxu0 0.0
    %3790 = vmatprep.subr.mxu0 0.0
    %3791 = vmatpush2.msra.mxu0 0.0
    %3792 = vmatprep.subr.mxu0 0.0
    %3793 = vmatpush2.msra.mxu0 0.0
    %3794 = vmatprep.subr.mxu0 0.0
    %3795 = vmatpush2.msra.mxu0 0.0
    %3796 = vmatprep.subr.mxu0 0.0
    %3797 = vmatpush2.msra.mxu0 0.0
    %3798 = vmatprep.subr.mxu0 0.0
    %3799 = vmatpush2.msra.mxu0 0.0
    %3800 = vmatprep.subr.mxu0 0.0
    %3801 = vmatpush2.msra.mxu0 0.0
    %3802 = vmatprep.subr.mxu0 0.0
    %3803 = vmatpush2.msra.mxu0 0.0
    %3804 = vmatprep.subr.mxu0 0.0
    %3805 = vmatpush2.msra.mxu0 0.0
    %3806 = vmatprep.subr.mxu0 0.0
    %3807 = vmatpush2.msra.mxu0 0.0
    %3808 = vmatprep.subr.mxu0 0.0
    %3809 = vmatpush2.msra.mxu0 0.0
    %3810 = vmatprep.subr.mxu0 0.0
    %3811 = vmatpush2.msra.mxu0 0.0
    %3812 = vmatprep.subr.mxu0 0.0
    %3813 = vmatpush2.msra.mxu0 0.0
    %3814 = vmatprep.subr.mxu0 0.0
    %3815 = vmatpush2.msra.mxu0 0.0
    %3816 = vmatprep.subr.mxu0 0.0
    %3817 = vmatpush2.msra.mxu0 0.0
    %3818 = vmatprep.mubr.f32.mxu0 0.0
    %3819 = vmatmul.mubr.f32.gmra.mxu0 %v3738
    %v3820 = vpop.f32.mrf.mxu0
    %v3821 = vadd.f32 0.0, %v3820
    %v3822 = vpop.f32.mrf.mxu0
    %3823 = vmatprep.mubr.f32.mxu0 0.0
    %3824 = vmatmul.mubr.f32.gmra.mxu0 %v3739
    %v3825 = vpop.f32.mrf.mxu0
    %v3826 = vadd.f32 0.0, %v3825
    %v3827 = vpop.f32.mrf.mxu0
    %3828 = vmatprep.mubr.f32.mxu0 0.0
    %3829 = vmatmul.mubr.f32.gmra.mxu0 %v3740
    %v3830 = vpop.f32.mrf.mxu0
    %v3831 = vadd.f32 0.0, %v3830
    %v3832 = vpop.f32.mrf.mxu0
    %3833 = vmatprep.mubr.f32.mxu0 0.0
    %3834 = vmatmul.mubr.f32.gmra.mxu0 %v3741
    %v3835 = vpop.f32.mrf.mxu0
    %v3836 = vadd.f32 0.0, %v3835
    %v3837 = vpop.f32.mrf.mxu0
    %3838 = vmatprep.mubr.f32.mxu0 0.0
    %3839 = vmatmul.mubr.f32.gmra.mxu0 %v3742
    %v3840 = vpop.f32.mrf.mxu0
    %v3841 = vadd.f32 0.0, %v3840
    %v3842 = vpop.f32.mrf.mxu0
    %3843 = vmatprep.mubr.f32.mxu0 0.0
    %3844 = vmatmul.mubr.f32.gmra.mxu0 %v3743
    %v3845 = vpop.f32.mrf.mxu0
    %v3846 = vadd.f32 0.0, %v3845
    %v3847 = vpop.f32.mrf.mxu0
    %3848 = vmatprep.mubr.f32.mxu0 0.0
    %3849 = vmatmul.mubr.f32.gmra.mxu0 %v3744
    %v3850 = vpop.f32.mrf.mxu0
    %v3851 = vadd.f32 0.0, %v3850
    %v3852 = vpop.f32.mrf.mxu0
    %3853 = vmatprep.mubr.f32.mxu0 0.0
    %3854 = vmatmul.mubr.f32.gmra.mxu0 %v3745
    %v3855 = vpop.f32.mrf.mxu0
    %v3856 = vadd.f32 0.0, %v3855
    %v3857 = vpop.f32.mrf.mxu0
    %3858 = vmatprep.mubr.f32.mxu0 0.0
    %3859 = vmatmul.mubr.f32.gmra.mxu0 %v3746
    %v3860 = vpop.f32.mrf.mxu0
    %v3861 = vadd.f32 0.0, %v3860
    %v3862 = vpop.f32.mrf.mxu0
    %3863 = vmatprep.mubr.f32.mxu0 0.0
    %3864 = vmatmul.mubr.f32.gmra.mxu0 %v3747
    %v3865 = vpop.f32.mrf.mxu0
    %v3866 = vadd.f32 0.0, %v3865
    %v3867 = vpop.f32.mrf.mxu0
    %3868 = vmatprep.mubr.f32.mxu0 0.0
    %3869 = vmatmul.mubr.f32.gmra.mxu0 %v3748
    %v3870 = vpop.f32.mrf.mxu0
    %v3871 = vadd.f32 0.0, %v3870
    %v3872 = vpop.f32.mrf.mxu0
    %3873 = vmatprep.mubr.f32.mxu0 0.0
    %3874 = vmatmul.mubr.f32.gmra.mxu0 %v3749
    %v3875 = vpop.f32.mrf.mxu0
    %v3876 = vadd.f32 0.0, %v3875
    %v3877 = vpop.f32.mrf.mxu0
    %3878 = vmatprep.mubr.f32.mxu0 0.0
    %3879 = vmatmul.mubr.f32.gmra.mxu0 %v3750
    %v3880 = vpop.f32.mrf.mxu0
    %v3881 = vadd.f32 0.0, %v3880
    %v3882 = vpop.f32.mrf.mxu0
    %3883 = vmatprep.mubr.f32.mxu0 0.0
    %3884 = vmatmul.mubr.f32.gmra.mxu0 %v3751
    %v3885 = vpop.f32.mrf.mxu0
    %v3886 = vadd.f32 0.0, %v3885
    %v3887 = vpop.f32.mrf.mxu0
    %3888 = vmatprep.mubr.f32.mxu0 0.0
    %3889 = vmatmul.mubr.f32.gmra.mxu0 %v3752
    %v3890 = vpop.f32.mrf.mxu0
    %v3891 = vadd.f32 0.0, %v3890
    %v3892 = vpop.f32.mrf.mxu0
    %3893 = vmatprep.mubr.f32.mxu0 0.0
    %3894 = vmatmul.mubr.f32.gmra.mxu0 %v3753
    %v3895 = vpop.f32.mrf.mxu0
    %v3896 = vadd.f32 0.0, %v3895
    %v3897 = vpop.f32.mrf.mxu0
    %3898 = vdwg.mxu0
    %v3899 = vsel %vm54, 1, 0
    %v3900 = vsel %vm55, 1, 0
    %v3901 = vsel %vm56, 1, 0
    %v3902 = vsel %vm57, 1, 0
    %v3903 = vsel %vm58, 1, 0
    %v3904 = vsel %vm59, 1, 0
    %v3905 = vsel %vm60, 1, 0
    %v3906 = vsel %vm61, 1, 0
    %v3907 = vsel %vm62, 1, 0
    %v3908 = vsel %vm63, 1, 0
    %v3909 = vsel %vm64, 1, 0
    %v3910 = vsel %vm65, 1, 0
    %v3911 = vsel %vm66, 1, 0
    %v3912 = vsel %vm67, 1, 0
    %v3913 = vsel %vm68, 1, 0
    %v3914 = vsel %vm69, 1, 0
    %v3915 = vcvt.s32.f32 %v3899
    %v3916 = vcvt.s32.f32 %v3900
    %v3917 = vcvt.s32.f32 %v3901
    %v3918 = vcvt.s32.f32 %v3902
    %v3919 = vcvt.s32.f32 %v3903
    %v3920 = vcvt.s32.f32 %v3904
    %v3921 = vcvt.s32.f32 %v3905
    %v3922 = vcvt.s32.f32 %v3906
    %v3923 = vcvt.s32.f32 %v3907
    %v3924 = vcvt.s32.f32 %v3908
    %v3925 = vcvt.s32.f32 %v3909
    %v3926 = vcvt.s32.f32 %v3910
    %v3927 = vcvt.s32.f32 %v3911
    %v3928 = vcvt.s32.f32 %v3912
    %v3929 = vcvt.s32.f32 %v3913
    %v3930 = vcvt.s32.f32 %v3914
    %vm3931 = vcmask 130048
    %v3932 = vsel %vm3931, %v3915, 0.0
    %3933 = vadd.xlane.f32.xlu0 %v3932
    %v3934 = vpop.xlane.xlu0 %3933
    %v3935 = vsel %vm3931, %v3916, 0.0
    %3936 = vadd.xlane.f32.xlu0 %v3935
    %v3937 = vpop.xlane.xlu0 %3936
    %v3938 = vsel %vm3931, %v3917, 0.0
    %3939 = vadd.xlane.f32.xlu0 %v3938
    %v3940 = vpop.xlane.xlu0 %3939
    %v3941 = vsel %vm3931, %v3918, 0.0
    %3942 = vadd.xlane.f32.xlu0 %v3941
    %v3943 = vpop.xlane.xlu0 %3942
    %v3944 = vsel %vm3931, %v3919, 0.0
    %3945 = vadd.xlane.f32.xlu0 %v3944
    %v3946 = vpop.xlane.xlu0 %3945
    %v3947 = vsel %vm3931, %v3920, 0.0
    %3948 = vadd.xlane.f32.xlu0 %v3947
    %v3949 = vpop.xlane.xlu0 %3948
    %v3950 = vsel %vm3931, %v3921, 0.0
    %3951 = vadd.xlane.f32.xlu0 %v3950
    %v3952 = vpop.xlane.xlu0 %3951
    %v3953 = vsel %vm3931, %v3922, 0.0
    %3954 = vadd.xlane.f32.xlu0 %v3953
    %v3955 = vpop.xlane.xlu0 %3954
    %v3956 = vsel %vm3931, %v3923, 0.0
    %3957 = vadd.xlane.f32.xlu0 %v3956
    %v3958 = vpop.xlane.xlu0 %3957
    %v3959 = vsel %vm3931, %v3924, 0.0
    %3960 = vadd.xlane.f32.xlu0 %v3959
    %v3961 = vpop.xlane.xlu0 %3960
    %v3962 = vsel %vm3931, %v3925, 0.0
    %3963 = vadd.xlane.f32.xlu0 %v3962
    %v3964 = vpop.xlane.xlu0 %3963
    %v3965 = vsel %vm3931, %v3926, 0.0
    %3966 = vadd.xlane.f32.xlu0 %v3965
    %v3967 = vpop.xlane.xlu0 %3966
    %v3968 = vsel %vm3931, %v3927, 0.0
    %3969 = vadd.xlane.f32.xlu0 %v3968
    %v3970 = vpop.xlane.xlu0 %3969
    %v3971 = vsel %vm3931, %v3928, 0.0
    %3972 = vadd.xlane.f32.xlu0 %v3971
    %v3973 = vpop.xlane.xlu0 %3972
    %v3974 = vsel %vm3931, %v3929, 0.0
    %3975 = vadd.xlane.f32.xlu0 %v3974
    %v3976 = vpop.xlane.xlu0 %3975
    %v3977 = vsel %vm3931, %v3930, 0.0
    %3978 = vadd.xlane.f32.xlu0 %v3977
    %v3979 = vpop.xlane.xlu0 %3978
    %v3980 = vmax.f32 %v3934, 1.0
    %v3981 = vmax.f32 %v3937, 1.0
    %v3982 = vmax.f32 %v3940, 1.0
    %v3983 = vmax.f32 %v3943, 1.0
    %v3984 = vmax.f32 %v3946, 1.0
    %v3985 = vmax.f32 %v3949, 1.0
    %v3986 = vmax.f32 %v3952, 1.0
    %v3987 = vmax.f32 %v3955, 1.0
    %v3988 = vmax.f32 %v3958, 1.0
    %v3989 = vmax.f32 %v3961, 1.0
    %v3990 = vmax.f32 %v3964, 1.0
    %v3991 = vmax.f32 %v3967, 1.0
    %v3992 = vmax.f32 %v3970, 1.0
    %v3993 = vmax.f32 %v3973, 1.0
    %v3994 = vmax.f32 %v3976, 1.0
    %v3995 = vmax.f32 %v3979, 1.0
    %v3996 = vrcp.pop %v3980
    %v3997 = vrcp.pop %v3981
    %v3998 = vrcp.pop %v3982
    %v3999 = vrcp.pop %v3983
    %v4000 = vrcp.pop %v3984
    %v4001 = vrcp.pop %v3985
    %v4002 = vrcp.pop %v3986
    %v4003 = vrcp.pop %v3987
    %v4004 = vrcp.pop %v3988
    %v4005 = vrcp.pop %v3989
    %v4006 = vrcp.pop %v3990
    %v4007 = vrcp.pop %v3991
    %v4008 = vrcp.pop %v3992
    %v4009 = vrcp.pop %v3993
    %v4010 = vrcp.pop %v3994
    %v4011 = vrcp.pop %v3995
    %4028 = vrot.lane.b32.xlu0 %v3915, 112
    %v4029 = vpop.permute.xlu0 %4028
    %4030 = vrot.lane.b32.xlu0 %v3916, 112
    %v4031 = vpop.permute.xlu0 %4030
    %4032 = vrot.lane.b32.xlu0 %v3917, 112
    %v4033 = vpop.permute.xlu0 %4032
    %4034 = vrot.lane.b32.xlu0 %v3918, 112
    %v4035 = vpop.permute.xlu0 %4034
    %4036 = vrot.lane.b32.xlu0 %v3919, 112
    %v4037 = vpop.permute.xlu0 %4036
    %4038 = vrot.lane.b32.xlu0 %v3920, 112
    %v4039 = vpop.permute.xlu0 %4038
    %4040 = vrot.lane.b32.xlu0 %v3921, 112
    %v4041 = vpop.permute.xlu0 %4040
    %4042 = vrot.lane.b32.xlu0 %v3922, 112
    %v4043 = vpop.permute.xlu0 %4042
    %4044 = vrot.lane.b32.xlu0 %v3923, 112
    %v4045 = vpop.permute.xlu0 %4044
    %4046 = vrot.lane.b32.xlu0 %v3924, 112
    %v4047 = vpop.permute.xlu0 %4046
    %4048 = vrot.lane.b32.xlu0 %v3925, 112
    %v4049 = vpop.permute.xlu0 %4048
    %4050 = vrot.lane.b32.xlu0 %v3926, 112
    %v4051 = vpop.permute.xlu0 %4050
    %4052 = vrot.lane.b32.xlu0 %v3927, 112
    %v4053 = vpop.permute.xlu0 %4052
    %4054 = vrot.lane.b32.xlu0 %v3928, 112
    %v4055 = vpop.permute.xlu0 %4054
    %4056 = vrot.lane.b32.xlu0 %v3929, 112
    %v4057 = vpop.permute.xlu0 %4056
    %4058 = vrot.lane.b32.xlu0 %v3930, 112
    %v4059 = vpop.permute.xlu0 %4058
    %v4076 = vsel %vm3931, %v4029, 0.0
    %4077 = vadd.xlane.f32.xlu0 %v4076
    %v4078 = vpop.xlane.xlu0 %4077
    %v4079 = vsel %vm3931, %v4031, 0.0
    %4080 = vadd.xlane.f32.xlu0 %v4079
    %v4081 = vpop.xlane.xlu0 %4080
    %v4082 = vsel %vm3931, %v4033, 0.0
    %4083 = vadd.xlane.f32.xlu0 %v4082
    %v4084 = vpop.xlane.xlu0 %4083
    %v4085 = vsel %vm3931, %v4035, 0.0
    %4086 = vadd.xlane.f32.xlu0 %v4085
    %v4087 = vpop.xlane.xlu0 %4086
    %v4088 = vsel %vm3931, %v4037, 0.0
    %4089 = vadd.xlane.f32.xlu0 %v4088
    %v4090 = vpop.xlane.xlu0 %4089
    %v4091 = vsel %vm3931, %v4039, 0.0
    %4092 = vadd.xlane.f32.xlu0 %v4091
    %v4093 = vpop.xlane.xlu0 %4092
    %v4094 = vsel %vm3931, %v4041, 0.0
    %4095 = vadd.xlane.f32.xlu0 %v4094
    %v4096 = vpop.xlane.xlu0 %4095
    %v4097 = vsel %vm3931, %v4043, 0.0
    %4098 = vadd.xlane.f32.xlu0 %v4097
    %v4099 = vpop.xlane.xlu0 %4098
    %v4100 = vsel %vm3931, %v4045, 0.0
    %4101 = vadd.xlane.f32.xlu0 %v4100
    %v4102 = vpop.xlane.xlu0 %4101
    %v4103 = vsel %vm3931, %v4047, 0.0
    %4104 = vadd.xlane.f32.xlu0 %v4103
    %v4105 = vpop.xlane.xlu0 %4104
    %v4106 = vsel %vm3931, %v4049, 0.0
    %4107 = vadd.xlane.f32.xlu0 %v4106
    %v4108 = vpop.xlane.xlu0 %4107
    %v4109 = vsel %vm3931, %v4051, 0.0
    %4110 = vadd.xlane.f32.xlu0 %v4109
    %v4111 = vpop.xlane.xlu0 %4110
    %v4112 = vsel %vm3931, %v4053, 0.0
    %4113 = vadd.xlane.f32.xlu0 %v4112
    %v4114 = vpop.xlane.xlu0 %4113
    %v4115 = vsel %vm3931, %v4055, 0.0
    %4116 = vadd.xlane.f32.xlu0 %v4115
    %v4117 = vpop.xlane.xlu0 %4116
    %v4118 = vsel %vm3931, %v4057, 0.0
    %4119 = vadd.xlane.f32.xlu0 %v4118
    %v4120 = vpop.xlane.xlu0 %4119
    %v4121 = vsel %vm3931, %v4059, 0.0
    %4122 = vadd.xlane.f32.xlu0 %v4121
    %v4123 = vpop.xlane.xlu0 %4122
    %v4124 = vmax.f32 %v4078, 1.0
    %v4125 = vmax.f32 %v4081, 1.0
    %v4126 = vmax.f32 %v4084, 1.0
    %v4127 = vmax.f32 %v4087, 1.0
    %v4128 = vmax.f32 %v4090, 1.0
    %v4129 = vmax.f32 %v4093, 1.0
    %v4130 = vmax.f32 %v4096, 1.0
    %v4131 = vmax.f32 %v4099, 1.0
    %v4132 = vmax.f32 %v4102, 1.0
    %v4133 = vmax.f32 %v4105, 1.0
    %v4134 = vmax.f32 %v4108, 1.0
    %v4135 = vmax.f32 %v4111, 1.0
    %v4136 = vmax.f32 %v4114, 1.0
    %v4137 = vmax.f32 %v4117, 1.0
    %v4138 = vmax.f32 %v4120, 1.0
    %v4139 = vmax.f32 %v4123, 1.0
    %v4140 = vrcp.pop %v4124
    %v4141 = vrcp.pop %v4125
    %v4142 = vrcp.pop %v4126
    %v4143 = vrcp.pop %v4127
    %v4144 = vrcp.pop %v4128
    %v4145 = vrcp.pop %v4129
    %v4146 = vrcp.pop %v4130
    %v4147 = vrcp.pop %v4131
    %v4148 = vrcp.pop %v4132
    %v4149 = vrcp.pop %v4133
    %v4150 = vrcp.pop %v4134
    %v4151 = vrcp.pop %v4135
    %v4152 = vrcp.pop %v4136
    %v4153 = vrcp.pop %v4137
    %v4154 = vrcp.pop %v4138
    %v4155 = vrcp.pop %v4139
    %vm4156 = vcmp.ge.s32.totalorder %v37, 64
    %v4157 = vsel %vm4156, %v4140, %v3996
    %v4158 = vsel %vm4156, %v4141, %v3997
    %v4159 = vsel %vm4156, %v4142, %v3998
    %v4160 = vsel %vm4156, %v4143, %v3999
    %v4161 = vsel %vm4156, %v4144, %v4000
    %v4162 = vsel %vm4156, %v4145, %v4001
    %v4163 = vsel %vm4156, %v4146, %v4002
    %v4164 = vsel %vm4156, %v4147, %v4003
    %v4165 = vsel %vm4156, %v4148, %v4004
    %v4166 = vsel %vm4156, %v4149, %v4005
    %v4167 = vsel %vm4156, %v4150, %v4006
    %v4168 = vsel %vm4156, %v4151, %v4007
    %v4169 = vsel %vm4156, %v4152, %v4008
    %v4170 = vsel %vm4156, %v4153, %v4009
    %v4171 = vsel %vm4156, %v4154, %v4010
    %v4172 = vsel %vm4156, %v4155, %v4011
    %v4173 = vmul.f32 %v3821, %v4157
    %v4174 = vmul.f32 %v3826, %v4158
    %v4175 = vmul.f32 %v3831, %v4159
    %v4176 = vmul.f32 %v3836, %v4160
    %v4177 = vmul.f32 %v3841, %v4161
    %v4178 = vmul.f32 %v3846, %v4162
    %v4179 = vmul.f32 %v3851, %v4163
    %v4180 = vmul.f32 %v3856, %v4164
    %v4181 = vmul.f32 %v3861, %v4165
    %v4182 = vmul.f32 %v3866, %v4166
    %v4183 = vmul.f32 %v3871, %v4167
    %v4184 = vmul.f32 %v3876, %v4168
    %v4185 = vmul.f32 %v3881, %v4169
    %v4186 = vmul.f32 %v3886, %v4170
    %v4187 = vmul.f32 %v3891, %v4171
    %v4188 = vmul.f32 %v3896, %v4172
    %v4190 = vlaneseq
    %v4191 = vshrl.u32 %v4190, 7
    %v4192 = vsub.s32 0, %v4191
    %v4193 = vrot.slane %v19, %v4192
    %v4195 = vadd.f32 %v4173, %v4193
    %v4196 = vadd.f32 %v4174, %v4193
    %v4197 = vadd.f32 %v4175, %v4193
    %v4198 = vadd.f32 %v4176, %v4193
    %v4199 = vadd.f32 %v4177, %v4193
    %v4200 = vadd.f32 %v4178, %v4193
    %v4201 = vadd.f32 %v4179, %v4193
    %v4202 = vadd.f32 %v4180, %v4193
    %v4203 = vadd.f32 %v4181, %v4193
    %v4204 = vadd.f32 %v4182, %v4193
    %v4205 = vadd.f32 %v4183, %v4193
    %v4206 = vadd.f32 %v4184, %v4193
    %v4207 = vadd.f32 %v4185, %v4193
    %v4208 = vadd.f32 %v4186, %v4193
    %v4209 = vadd.f32 %v4187, %v4193
    %v4210 = vadd.f32 %v4188, %v4193
    %4211 = vst [vmem:[#allocation2] sm:$0xff] %v4195
    %4212 = vst [vmem:[#allocation2 + $0x8] sm:$0xff] %v4196
    %4213 = vst [vmem:[#allocation2 + $0x10] sm:$0xff] %v4197
    %4214 = vst [vmem:[#allocation2 + $0x18] sm:$0xff] %v4198
    %4215 = vst [vmem:[#allocation2 + $0x20] sm:$0xff] %v4199
    %4216 = vst [vmem:[#allocation2 + $0x28] sm:$0xff] %v4200
    %4217 = vst [vmem:[#allocation2 + $0x30] sm:$0xff] %v4201
    %4218 = vst [vmem:[#allocation2 + $0x38] sm:$0xff] %v4202
    %4219 = vst [vmem:[#allocation2 + $0x40] sm:$0xff] %v4203
    %4220 = vst [vmem:[#allocation2 + $0x48] sm:$0xff] %v4204
    %4221 = vst [vmem:[#allocation2 + $0x50] sm:$0xff] %v4205
    %4222 = vst [vmem:[#allocation2 + $0x58] sm:$0xff] %v4206
    %4223 = vst [vmem:[#allocation2 + $0x60] sm:$0xff] %v4207
    %4224 = vst [vmem:[#allocation2 + $0x68] sm:$0xff] %v4208
    %4225 = vst [vmem:[#allocation2 + $0x70] sm:$0xff] %v4209
    %4226 = vst [vmem:[#allocation2 + $0x78] sm:$0xff] %v4210
    // Predicated region
    $region18: #{tpu_custom_call.1} parent=1 // pred_check
      _
    $region19: #{tpu_custom_call.1} parent=1 // pred_check_branch
      %4228 = sbr.rel (0) target = $region21
    $region20: #{tpu_custom_call.1} parent=1 // pred_region
      %s4230 = ssub.s32 2048, 2048
      %4231 = vsyncadd [#allocation3], %s4230
      %s4232 = sshll.u32 [#allocation2], 4
      %s4233 = int_to_ptr.vmem [resolvable:$true] %s4232
      %4238 = dma.vmem_to_hbm [thread:$0]  %s4233, 2048, %s4, [#allocation3], 128, 128, 8
    $region21: #{tpu_custom_call.1} parent=1 // pred_fallthru
      _
    // Predicated region
    $region22: #{tpu_custom_call.1} parent=1 // pred_check
      _
    $region23: #{tpu_custom_call.1} parent=1 // pred_check_branch
      %4240 = sbr.rel (0) target = $region25
    $region24: #{tpu_custom_call.1} parent=1 // pred_region
      %4241 = dma.done [#allocation3], 2048
    $region25: #{tpu_custom_call.1} parent=1 // pred_fallthru
      _
    %4242 = vsyncpa [#allocation3], 1

</llo_original>
